<compile_context>
chip_gen: v7x
topology: tpu7x:2x2x1
jax: 0.10.0
libtpu: 0.0.40
codegen_flags: <defaults>
</compile_context>

<pallas_src>
import functools

import jax
import jax.numpy as jnp
from jax.experimental import pallas as pl
from jax.experimental.pallas import tpu as pltpu


def _sep_conv2d_kernel(*refs, KH, KW, stride, H_out, W_out, has_bias):
    # refs: x_ref (1, H_pad, W_pad, C_in), w_ref (KH, KW, C_in, C_out),
    #       [b_ref (1, C_out)], o_ref (1, H_out, W_out, C_out)
    if has_bias:
        x_ref, w_ref, b_ref, o_ref = refs
    else:
        x_ref, w_ref, o_ref = refs
        b_ref = None

    C_in = x_ref.shape[-1]
    C_out = o_ref.shape[-1]

    acc = jnp.zeros((H_out * W_out, C_out), dtype=jnp.float32)
    for kh in range(KH):            # static unroll over kernel taps
        for kw in range(KW):
            if stride == 1:
                win = x_ref[0, kh:kh + H_out, kw:kw + W_out, :]
            else:
                win = x_ref[0,
                            pl.ds(kh, H_out, stride=stride),
                            pl.ds(kw, W_out, stride=stride),
                            :]
            x2d = win.reshape(H_out * W_out, C_in)
            acc = acc + jnp.dot(x2d, w_ref[kh, kw],
                                preferred_element_type=jnp.float32)
    if b_ref is not None:
        acc = acc + b_ref[...].astype(jnp.float32)
    o_ref[0] = acc.reshape(H_out, W_out, C_out).astype(o_ref.dtype)


def sep_conv2d(x, weight, bias=None, cache_x=None, *, stride=1, padding=0):
    """Sep_Conv2d forward.  x: (B, C_in, T, H, W); weight: (C_out, C_in, KH, KW)."""
    del cache_x  # unused in the reference PyTorch forward as well
    B, C_in, T, H, W = x.shape
    C_out, C_in_w, KH, KW = weight.shape
    assert C_in_w == C_in, "weight in_channels must match x channels"

    H_out = (H + 2 * padding - KH) // stride + 1
    W_out = (W + 2 * padding - KW) // stride + 1
    H_pad = H + 2 * padding
    W_pad = W + 2 * padding

    # NCTHW -> channels-last frames: (B*T, H, W, C_in).
    x_l = jnp.transpose(x, (0, 2, 3, 4, 1)).reshape(B * T, H, W, C_in)
    if padding:
        x_l = jnp.pad(
            x_l, ((0, 0), (padding, padding), (padding, padding), (0, 0)))

    # OIHW -> (KH, KW, C_in, C_out): taps on leading dims, channels on lanes.
    w_l = jnp.transpose(weight, (2, 3, 1, 0))

    has_bias = bias is not None
    in_specs = [
        pl.BlockSpec((1, H_pad, W_pad, C_in), lambda i: (i, 0, 0, 0)),
        pl.BlockSpec((KH, KW, C_in, C_out), lambda i: (0, 0, 0, 0)),
    ]
    inputs = [x_l, w_l]
    if has_bias:
        in_specs.append(pl.BlockSpec((1, C_out), lambda i: (0, 0)))
        inputs.append(bias.reshape(1, C_out))

    kernel = functools.partial(
        _sep_conv2d_kernel, KH=KH, KW=KW, stride=stride,
        H_out=H_out, W_out=W_out, has_bias=has_bias)

    # TODO(synk): for very large frames (padded-frame f32 block approaching the
    # VMEM limit, esp. v7x's 64 MiB) add a row-tiled variant with halo overlap.
    out = pl.pallas_call(
        kernel,
        out_shape=jax.ShapeDtypeStruct((B * T, H_out, W_out, C_out), x.dtype),
        grid_spec=pltpu.PrefetchScalarGridSpec(
            num_scalar_prefetch=0,
            grid=(B * T,),
            in_specs=in_specs,
            out_specs=pl.BlockSpec((1, H_out, W_out, C_out),
                                   lambda i: (i, 0, 0, 0)),
        ),
        compiler_params=pltpu.CompilerParams(
            dimension_semantics=("parallel",)),
    )(*inputs)

    # (B*T, H_out, W_out, C_out) -> (B, C_out, T, H_out, W_out)
    return jnp.transpose(out.reshape(B, T, H_out, W_out, C_out),
                         (0, 4, 1, 2, 3))


def sep_conv2d_ref(x, weight, bias=None, *, stride=1, padding=0):
    """Pure-JAX reference mirroring the PyTorch module."""
    B, C, T, H, W = x.shape
    x2 = jnp.transpose(x, (0, 2, 1, 3, 4)).reshape(B * T, C, H, W)
    y = jax.lax.conv_general_dilated(
        x2, weight, window_strides=(stride, stride),
        padding=[(padding, padding), (padding, padding)],
        dimension_numbers=("NCHW", "OIHW", "NCHW"))
    if bias is not None:
        y = y + bias.reshape(1, -1, 1, 1)
    _, C_out, H_out, W_out = y.shape
    return jnp.transpose(y.reshape(B, T, C_out, H_out, W_out),
                         (0, 2, 1, 3, 4))


if __name__ == "__main__":
    # Module config: Sep_Conv2d(in_dim_2d=3, out_dim_2d=4, in_dim_3d=5,
    #                           out_dim_3d=4, kernel=3, stride=1, padding=1)
    in_dim_2d, in_dim_3d = 3, 5          # conv in_channels  = 8
    out_dim_2d, out_dim_3d = 4, 4        # conv out_channels = 8
    kernel_size, stride, padding = 3, 1, 1

    B, T, H, W = 2, 4, 16, 16
    C_in = in_dim_2d + in_dim_3d
    C_out = out_dim_2d + out_dim_3d

    kx, kw, kb = jax.random.split(jax.random.PRNGKey(0), 3)
    x = jax.random.normal(kx, (B, C_in, T, H, W), dtype=jnp.float32)
    fan_in = C_in * kernel_size * kernel_size
    bound = 1.0 / (fan_in ** 0.5)
    weight = jax.random.uniform(kw, (C_out, C_in, kernel_size, kernel_size),
                                jnp.float32, -bound, bound)
    bias = jax.random.uniform(kb, (C_out,), jnp.float32, -bound, bound)

    y = sep_conv2d(x, weight, bias, stride=stride, padding=padding)
    y = jax.block_until_ready(y)

    y_ref = sep_conv2d_ref(x, weight, bias, stride=stride, padding=padding)
    assert y.shape == (B, C_out, T, H, W), y.shape
    assert jnp.allclose(y, y_ref, atol=1e-4, rtol=1e-4), "mismatch vs reference"

    print("KERNEL_OK")
</pallas_src>

<mosaic_0001>
module attributes {stable_mosaic.version = 11 : i64} {
  func.func @_sep_conv2d_kernel(%arg0: i32, %arg1: memref<1x18x18x8xf32, #tpu.memory_space<vmem>>, %arg2: memref<3x3x8x8xf32, #tpu.memory_space<vmem>>, %arg3: memref<1x8xf32, #tpu.memory_space<vmem>>, %arg4: memref<1x16x16x8xf32, #tpu.memory_space<vmem>>) attributes {dimension_semantics = [#tpu.dimension_semantics<parallel>], iteration_bounds = array<i64: 8>, scalar_prefetch = 0 : i64, scratch_operands = 0 : i64, tpu.core_type = #tpu.core_type<tc>, window_params = [{transform_indices = @transform_0, window_bounds = array<i64: 1, 18, 18, 8>}, {pipeline_mode = #tpu.pipeline_mode<synchronous>, transform_indices = @transform_1, window_bounds = array<i64: 3, 3, 8, 8>}, {pipeline_mode = #tpu.pipeline_mode<synchronous>, transform_indices = @transform_2, window_bounds = array<i64: 1, 8>}, {transform_indices = @transform_3, window_bounds = array<i64: 1, 16, 16, 8>}]} {
    %cst = arith.constant 0.000000e+00 : f32
    %0 = vector.broadcast %cst : f32 to vector<256x8xf32>
    %c0 = arith.constant 0 : index
    %c0_0 = arith.constant 0 : index
    %c0_1 = arith.constant 0 : index
    %c0_2 = arith.constant 0 : index
    %1 = vector.load %arg1[%c0, %c0_0, %c0_1, %c0_2] : memref<1x18x18x8xf32, #tpu.memory_space<vmem>>, vector<1x16x16x8xf32>
    %2 = vector.shape_cast %1 : vector<1x16x16x8xf32> to vector<16x16x8xf32>
    %3 = vector.shape_cast %2 : vector<16x16x8xf32> to vector<256x8xf32>
    %c0_3 = arith.constant 0 : index
    %c0_4 = arith.constant 0 : index
    %c0_5 = arith.constant 0 : index
    %c0_6 = arith.constant 0 : index
    %4 = vector.load %arg2[%c0_3, %c0_4, %c0_5, %c0_6] : memref<3x3x8x8xf32, #tpu.memory_space<vmem>>, vector<1x1x8x8xf32>
    %5 = vector.shape_cast %4 : vector<1x1x8x8xf32> to vector<8x8xf32>
    %cst_7 = arith.constant dense<0.000000e+00> : vector<256x8xf32>
    %6 = tpu.matmul %3, %5, %cst_7 {dimension_numbers = #tpu.dot_dimension_numbers<[1], [0], [0], [1], [0, 0, 1, 1], [], []>} : vector<256x8xf32>, vector<8x8xf32>, vector<256x8xf32> -> vector<256x8xf32>
    %7 = arith.addf %0, %6 : vector<256x8xf32>
    %c0_8 = arith.constant 0 : index
    %c0_9 = arith.constant 0 : index
    %c1 = arith.constant 1 : index
    %c0_10 = arith.constant 0 : index
    %8 = vector.load %arg1[%c0_8, %c0_9, %c1, %c0_10] : memref<1x18x18x8xf32, #tpu.memory_space<vmem>>, vector<1x16x16x8xf32>
    %9 = vector.shape_cast %8 : vector<1x16x16x8xf32> to vector<16x16x8xf32>
    %10 = vector.shape_cast %9 : vector<16x16x8xf32> to vector<256x8xf32>
    %c0_11 = arith.constant 0 : index
    %c1_12 = arith.constant 1 : index
    %c0_13 = arith.constant 0 : index
    %c0_14 = arith.constant 0 : index
    %11 = vector.load %arg2[%c0_11, %c1_12, %c0_13, %c0_14] : memref<3x3x8x8xf32, #tpu.memory_space<vmem>>, vector<1x1x8x8xf32>
    %12 = vector.shape_cast %11 : vector<1x1x8x8xf32> to vector<8x8xf32>
    %cst_15 = arith.constant dense<0.000000e+00> : vector<256x8xf32>
    %13 = tpu.matmul %10, %12, %cst_15 {dimension_numbers = #tpu.dot_dimension_numbers<[1], [0], [0], [1], [0, 0, 1, 1], [], []>} : vector<256x8xf32>, vector<8x8xf32>, vector<256x8xf32> -> vector<256x8xf32>
    %14 = arith.addf %7, %13 : vector<256x8xf32>
    %c0_16 = arith.constant 0 : index
    %c0_17 = arith.constant 0 : index
    %c2 = arith.constant 2 : index
    %c0_18 = arith.constant 0 : index
    %15 = vector.load %arg1[%c0_16, %c0_17, %c2, %c0_18] : memref<1x18x18x8xf32, #tpu.memory_space<vmem>>, vector<1x16x16x8xf32>
    %16 = vector.shape_cast %15 : vector<1x16x16x8xf32> to vector<16x16x8xf32>
    %17 = vector.shape_cast %16 : vector<16x16x8xf32> to vector<256x8xf32>
    %c0_19 = arith.constant 0 : index
    %c2_20 = arith.constant 2 : index
    %c0_21 = arith.constant 0 : index
    %c0_22 = arith.constant 0 : index
    %18 = vector.load %arg2[%c0_19, %c2_20, %c0_21, %c0_22] : memref<3x3x8x8xf32, #tpu.memory_space<vmem>>, vector<1x1x8x8xf32>
    %19 = vector.shape_cast %18 : vector<1x1x8x8xf32> to vector<8x8xf32>
    %cst_23 = arith.constant dense<0.000000e+00> : vector<256x8xf32>
    %20 = tpu.matmul %17, %19, %cst_23 {dimension_numbers = #tpu.dot_dimension_numbers<[1], [0], [0], [1], [0, 0, 1, 1], [], []>} : vector<256x8xf32>, vector<8x8xf32>, vector<256x8xf32> -> vector<256x8xf32>
    %21 = arith.addf %14, %20 : vector<256x8xf32>
    %c0_24 = arith.constant 0 : index
    %c1_25 = arith.constant 1 : index
    %c0_26 = arith.constant 0 : index
    %c0_27 = arith.constant 0 : index
    %22 = vector.load %arg1[%c0_24, %c1_25, %c0_26, %c0_27] : memref<1x18x18x8xf32, #tpu.memory_space<vmem>>, vector<1x16x16x8xf32>
    %23 = vector.shape_cast %22 : vector<1x16x16x8xf32> to vector<16x16x8xf32>
    %24 = vector.shape_cast %23 : vector<16x16x8xf32> to vector<256x8xf32>
    %c1_28 = arith.constant 1 : index
    %c0_29 = arith.constant 0 : index
    %c0_30 = arith.constant 0 : index
    %c0_31 = arith.constant 0 : index
    %25 = vector.load %arg2[%c1_28, %c0_29, %c0_30, %c0_31] : memref<3x3x8x8xf32, #tpu.memory_space<vmem>>, vector<1x1x8x8xf32>
    %26 = vector.shape_cast %25 : vector<1x1x8x8xf32> to vector<8x8xf32>
    %cst_32 = arith.constant dense<0.000000e+00> : vector<256x8xf32>
    %27 = tpu.matmul %24, %26, %cst_32 {dimension_numbers = #tpu.dot_dimension_numbers<[1], [0], [0], [1], [0, 0, 1, 1], [], []>} : vector<256x8xf32>, vector<8x8xf32>, vector<256x8xf32> -> vector<256x8xf32>
    %28 = arith.addf %21, %27 : vector<256x8xf32>
    %c0_33 = arith.constant 0 : index
    %c1_34 = arith.constant 1 : index
    %c1_35 = arith.constant 1 : index
    %c0_36 = arith.constant 0 : index
    %29 = vector.load %arg1[%c0_33, %c1_34, %c1_35, %c0_36] : memref<1x18x18x8xf32, #tpu.memory_space<vmem>>, vector<1x16x16x8xf32>
    %30 = vector.shape_cast %29 : vector<1x16x16x8xf32> to vector<16x16x8xf32>
    %31 = vector.shape_cast %30 : vector<16x16x8xf32> to vector<256x8xf32>
    %c1_37 = arith.constant 1 : index
    %c1_38 = arith.constant 1 : index
    %c0_39 = arith.constant 0 : index
    %c0_40 = arith.constant 0 : index
    %32 = vector.load %arg2[%c1_37, %c1_38, %c0_39, %c0_40] : memref<3x3x8x8xf32, #tpu.memory_space<vmem>>, vector<1x1x8x8xf32>
    %33 = vector.shape_cast %32 : vector<1x1x8x8xf32> to vector<8x8xf32>
    %cst_41 = arith.constant dense<0.000000e+00> : vector<256x8xf32>
    %34 = tpu.matmul %31, %33, %cst_41 {dimension_numbers = #tpu.dot_dimension_numbers<[1], [0], [0], [1], [0, 0, 1, 1], [], []>} : vector<256x8xf32>, vector<8x8xf32>, vector<256x8xf32> -> vector<256x8xf32>
    %35 = arith.addf %28, %34 : vector<256x8xf32>
    %c0_42 = arith.constant 0 : index
    %c1_43 = arith.constant 1 : index
    %c2_44 = arith.constant 2 : index
    %c0_45 = arith.constant 0 : index
    %36 = vector.load %arg1[%c0_42, %c1_43, %c2_44, %c0_45] : memref<1x18x18x8xf32, #tpu.memory_space<vmem>>, vector<1x16x16x8xf32>
    %37 = vector.shape_cast %36 : vector<1x16x16x8xf32> to vector<16x16x8xf32>
    %38 = vector.shape_cast %37 : vector<16x16x8xf32> to vector<256x8xf32>
    %c1_46 = arith.constant 1 : index
    %c2_47 = arith.constant 2 : index
    %c0_48 = arith.constant 0 : index
    %c0_49 = arith.constant 0 : index
    %39 = vector.load %arg2[%c1_46, %c2_47, %c0_48, %c0_49] : memref<3x3x8x8xf32, #tpu.memory_space<vmem>>, vector<1x1x8x8xf32>
    %40 = vector.shape_cast %39 : vector<1x1x8x8xf32> to vector<8x8xf32>
    %cst_50 = arith.constant dense<0.000000e+00> : vector<256x8xf32>
    %41 = tpu.matmul %38, %40, %cst_50 {dimension_numbers = #tpu.dot_dimension_numbers<[1], [0], [0], [1], [0, 0, 1, 1], [], []>} : vector<256x8xf32>, vector<8x8xf32>, vector<256x8xf32> -> vector<256x8xf32>
    %42 = arith.addf %35, %41 : vector<256x8xf32>
    %c0_51 = arith.constant 0 : index
    %c2_52 = arith.constant 2 : index
    %c0_53 = arith.constant 0 : index
    %c0_54 = arith.constant 0 : index
    %43 = vector.load %arg1[%c0_51, %c2_52, %c0_53, %c0_54] : memref<1x18x18x8xf32, #tpu.memory_space<vmem>>, vector<1x16x16x8xf32>
    %44 = vector.shape_cast %43 : vector<1x16x16x8xf32> to vector<16x16x8xf32>
    %45 = vector.shape_cast %44 : vector<16x16x8xf32> to vector<256x8xf32>
    %c2_55 = arith.constant 2 : index
    %c0_56 = arith.constant 0 : index
    %c0_57 = arith.constant 0 : index
    %c0_58 = arith.constant 0 : index
    %46 = vector.load %arg2[%c2_55, %c0_56, %c0_57, %c0_58] : memref<3x3x8x8xf32, #tpu.memory_space<vmem>>, vector<1x1x8x8xf32>
    %47 = vector.shape_cast %46 : vector<1x1x8x8xf32> to vector<8x8xf32>
    %cst_59 = arith.constant dense<0.000000e+00> : vector<256x8xf32>
    %48 = tpu.matmul %45, %47, %cst_59 {dimension_numbers = #tpu.dot_dimension_numbers<[1], [0], [0], [1], [0, 0, 1, 1], [], []>} : vector<256x8xf32>, vector<8x8xf32>, vector<256x8xf32> -> vector<256x8xf32>
    %49 = arith.addf %42, %48 : vector<256x8xf32>
    %c0_60 = arith.constant 0 : index
    %c2_61 = arith.constant 2 : index
    %c1_62 = arith.constant 1 : index
    %c0_63 = arith.constant 0 : index
    %50 = vector.load %arg1[%c0_60, %c2_61, %c1_62, %c0_63] : memref<1x18x18x8xf32, #tpu.memory_space<vmem>>, vector<1x16x16x8xf32>
    %51 = vector.shape_cast %50 : vector<1x16x16x8xf32> to vector<16x16x8xf32>
    %52 = vector.shape_cast %51 : vector<16x16x8xf32> to vector<256x8xf32>
    %c2_64 = arith.constant 2 : index
    %c1_65 = arith.constant 1 : index
    %c0_66 = arith.constant 0 : index
    %c0_67 = arith.constant 0 : index
    %53 = vector.load %arg2[%c2_64, %c1_65, %c0_66, %c0_67] : memref<3x3x8x8xf32, #tpu.memory_space<vmem>>, vector<1x1x8x8xf32>
    %54 = vector.shape_cast %53 : vector<1x1x8x8xf32> to vector<8x8xf32>
    %cst_68 = arith.constant dense<0.000000e+00> : vector<256x8xf32>
    %55 = tpu.matmul %52, %54, %cst_68 {dimension_numbers = #tpu.dot_dimension_numbers<[1], [0], [0], [1], [0, 0, 1, 1], [], []>} : vector<256x8xf32>, vector<8x8xf32>, vector<256x8xf32> -> vector<256x8xf32>
    %56 = arith.addf %49, %55 : vector<256x8xf32>
    %c0_69 = arith.constant 0 : index
    %c2_70 = arith.constant 2 : index
    %c2_71 = arith.constant 2 : index
    %c0_72 = arith.constant 0 : index
    %57 = vector.load %arg1[%c0_69, %c2_70, %c2_71, %c0_72] : memref<1x18x18x8xf32, #tpu.memory_space<vmem>>, vector<1x16x16x8xf32>
    %58 = vector.shape_cast %57 : vector<1x16x16x8xf32> to vector<16x16x8xf32>
    %59 = vector.shape_cast %58 : vector<16x16x8xf32> to vector<256x8xf32>
    %c2_73 = arith.constant 2 : index
    %c2_74 = arith.constant 2 : index
    %c0_75 = arith.constant 0 : index
    %c0_76 = arith.constant 0 : index
    %60 = vector.load %arg2[%c2_73, %c2_74, %c0_75, %c0_76] : memref<3x3x8x8xf32, #tpu.memory_space<vmem>>, vector<1x1x8x8xf32>
    %61 = vector.shape_cast %60 : vector<1x1x8x8xf32> to vector<8x8xf32>
    %cst_77 = arith.constant dense<0.000000e+00> : vector<256x8xf32>
    %62 = tpu.matmul %59, %61, %cst_77 {dimension_numbers = #tpu.dot_dimension_numbers<[1], [0], [0], [1], [0, 0, 1, 1], [], []>} : vector<256x8xf32>, vector<8x8xf32>, vector<256x8xf32> -> vector<256x8xf32>
    %63 = arith.addf %56, %62 : vector<256x8xf32>
    %c0_78 = arith.constant 0 : index
    %c0_79 = arith.constant 0 : index
    %64 = vector.load %arg3[%c0_78, %c0_79] : memref<1x8xf32, #tpu.memory_space<vmem>>, vector<1x8xf32>
    %65 = vector.broadcast %64 : vector<1x8xf32> to vector<256x8xf32>
    %66 = arith.addf %63, %65 : vector<256x8xf32>
    %67 = vector.shape_cast %66 : vector<256x8xf32> to vector<16x16x8xf32>
    %c0_80 = arith.constant 0 : index
    %c0_81 = arith.constant 0 : index
    %c0_82 = arith.constant 0 : index
    %c0_83 = arith.constant 0 : index
    %68 = vector.load %arg4[%c0_80, %c0_81, %c0_82, %c0_83] : memref<1x16x16x8xf32, #tpu.memory_space<vmem>>, vector<1x16x16x8xf32>
    %69 = vector.shape_cast %68 : vector<1x16x16x8xf32> to vector<16x16x8xf32>
    %70 = vector.shape_cast %67 : vector<16x16x8xf32> to vector<1x16x16x8xf32>
    tpu.vector_store %arg4[%c0_80, %c0_81, %c0_82, %c0_83], %70 {strides = array<i32>} : memref<1x16x16x8xf32, #tpu.memory_space<vmem>>, vector<1x16x16x8xf32>,
    return
  }
  func.func @transform_0(%arg0: i32) -> (i32, i32, i32, i32) {
    %c0_i32 = arith.constant 0 : i32
    %c0_i32_0 = arith.constant 0 : i32
    %c0_i32_1 = arith.constant 0 : i32
    %c0_i32_2 = arith.constant 0 : i32
    return %arg0, %c0_i32, %c0_i32_0, %c0_i32_1 : i32, i32, i32, i32
  }
  func.func @transform_1(%arg0: i32) -> (i32, i32, i32, i32) {
    %c0_i32 = arith.constant 0 : i32
    %c0_i32_0 = arith.constant 0 : i32
    %c0_i32_1 = arith.constant 0 : i32
    %c0_i32_2 = arith.constant 0 : i32
    %c0_i32_3 = arith.constant 0 : i32
    return %c0_i32, %c0_i32_0, %c0_i32_1, %c0_i32_2 : i32, i32, i32, i32
  }
  func.func @transform_2(%arg0: i32) -> (i32, i32) {
    %c0_i32 = arith.constant 0 : i32
    %c0_i32_0 = arith.constant 0 : i32
    %c0_i32_1 = arith.constant 0 : i32
    return %c0_i32, %c0_i32_0 : i32, i32
  }
  func.func @transform_3(%arg0: i32) -> (i32, i32, i32, i32) {
    %c0_i32 = arith.constant 0 : i32
    %c0_i32_0 = arith.constant 0 : i32
    %c0_i32_1 = arith.constant 0 : i32
    %c0_i32_2 = arith.constant 0 : i32
    return %arg0, %c0_i32, %c0_i32_0, %c0_i32_1 : i32, i32, i32, i32
  }
}

</mosaic_0001>

<llo_original>
// kernel: tpu_custom_call.1
$region0: #{tpu_custom_call.1}
  #allocation0 [shape = 'u32[]', space=smem, size = 0x4, offset = 0x4, fixed_abs, tag = 'smem constant byte address 0x4 - core index']
  #allocation1 [shape = 'u32[144,128]{1,0:T(1,128)}', space=vmem, size = 0x12000, scoped, tag = 'internal scratch']
  %s0 = inlined_call_operand.vmem [shape: f32[8,18,18,8], index: 0, kind: input, shape index: {}]
  %s1 = inlined_call_operand.vmem [shape: f32[3,3,8,8], index: 1, kind: input, shape index: {}]
  %s2 = inlined_call_operand.vmem [shape: f32[1,8], index: 2, kind: input, shape index: {}]
  %s3 = inlined_call_operand.vmem [shape: f32[8,16,16,8], index: 3, kind: output, shape index: {}]
  %s4 = sld [smem:[#allocation0]]
  $region45: #{tpu_custom_call.1} parent=0
    _
  %s6 = ssub.s32 1, %s4
  %s7 = scalar_select 0, %s6, %s4
  loop: start=0, step=1, limit=10
  $region2: #{tpu_custom_call.1} parent=0 // loop_pre_header
    _
  $region3: #{tpu_custom_call.1} parent=0 // loop_header
    %s9 = sphi 0, %s13
    %p10 = scmp.ge.s32.totalorder %s9, 10
    %s19 = sphi 0, %s21
    %s22 = sphi 0, %s19
    %s23 = sphi 0, %s22
    %s39 = sphi 0, %s23
    %s43 = sphi 0, %s43
    %s45 = sphi 0, %s43
    %s46 = sphi 0, %s45
    %s60 = sphi 0, %s46
    %s64 = sphi 0, %s64
    %s66 = sphi 0, %s64
    %s67 = sphi 0, %s66
    %s81 = sphi 0, %s67
    %s87 = sphi 0, %s89
    %s90 = sphi 0, %s87
    %s91 = sphi 0, %s90
    %s107 = sphi 0, %s91
  $region4: #{tpu_custom_call.1} parent=0 // loop_header_branch
    %12 = sbr.rel (%p10) target = $region8
  $region5: #{tpu_custom_call.1} parent=0 // loop_body
    %s14 = ssub.s32 %s9, 1
    %s15 = ssub.s32 %s9, 2
    %s16 = sadd.s32 %s9, 1
    %s17 = ssub.s32 %s9, %s16
    %p18 = scmp.eq.s32.totalorder %s17, 0
    %s20 = sadd.s32 %s19, 1
    %s21 = scalar_select %p18, %s19, %s20
    %p24 = pneg %p18
    %p25 = scmp.eq.s32.totalorder %s9, 7
    %p26 = por %p24, %p25
    %p27 = scmp.ne.s32.totalorder %s19, %s22
    %p28 = scmp.eq.s32.totalorder %s9, 0
    %p29 = por %p27, %p28
    %p30 = scmp.ne.s32.totalorder %s19, %s22
    %p31 = scmp.eq.s32.totalorder %s14, 7
    %p32 = por %p30, %p31
    %p33 = scmp.ne.s32.totalorder %s22, %s23
    %p34 = scmp.eq.s32.totalorder %s14, 0
    %p35 = por %p33, %p34
    %p36 = scmp.ne.s32.totalorder %s22, %s23
    %p37 = scmp.eq.s32.totalorder %s15, 7
    %p38 = por %p36, %p37
    %p40 = scmp.ne.s32.totalorder %s23, %s39
    %p41 = scmp.eq.s32.totalorder %s15, 0
    %p42 = por %p40, %p41
    %s44 = sadd.s32 %s43, 1
    %p47 = scmp.eq.s32.totalorder %s9, 7
    %p48 = scmp.ne.s32.totalorder %s43, %s45
    %p49 = scmp.eq.s32.totalorder %s9, 0
    %p50 = por %p48, %p49
    %p51 = scmp.ne.s32.totalorder %s43, %s45
    %p52 = scmp.eq.s32.totalorder %s14, 7
    %p53 = por %p51, %p52
    %p54 = scmp.ne.s32.totalorder %s45, %s46
    %p55 = scmp.eq.s32.totalorder %s14, 0
    %p56 = por %p54, %p55
    %p57 = scmp.ne.s32.totalorder %s45, %s46
    %p58 = scmp.eq.s32.totalorder %s15, 7
    %p59 = por %p57, %p58
    %p61 = scmp.ne.s32.totalorder %s46, %s60
    %p62 = scmp.eq.s32.totalorder %s15, 0
    %p63 = por %p61, %p62
    %s65 = sadd.s32 %s64, 1
    %p68 = scmp.eq.s32.totalorder %s9, 7
    %p69 = scmp.ne.s32.totalorder %s64, %s66
    %p70 = scmp.eq.s32.totalorder %s9, 0
    %p71 = por %p69, %p70
    %p72 = scmp.ne.s32.totalorder %s64, %s66
    %p73 = scmp.eq.s32.totalorder %s14, 7
    %p74 = por %p72, %p73
    %p75 = scmp.ne.s32.totalorder %s66, %s67
    %p76 = scmp.eq.s32.totalorder %s14, 0
    %p77 = por %p75, %p76
    %p78 = scmp.ne.s32.totalorder %s66, %s67
    %p79 = scmp.eq.s32.totalorder %s15, 7
    %p80 = por %p78, %p79
    %p82 = scmp.ne.s32.totalorder %s67, %s81
    %p83 = scmp.eq.s32.totalorder %s15, 0
    %p84 = por %p82, %p83
    %s85 = ssub.s32 %s9, %s16
    %p86 = scmp.eq.s32.totalorder %s85, 0
    %s88 = sadd.s32 %s87, 1
    %s89 = scalar_select %p86, %s87, %s88
    %p92 = pneg %p86
    %p93 = scmp.eq.s32.totalorder %s9, 7
    %p94 = por %p92, %p93
    %p95 = scmp.ne.s32.totalorder %s87, %s90
    %p96 = scmp.eq.s32.totalorder %s9, 0
    %p97 = por %p95, %p96
    %p98 = scmp.ne.s32.totalorder %s87, %s90
    %p99 = scmp.eq.s32.totalorder %s14, 7
    %p100 = por %p98, %p99
    %p101 = scmp.ne.s32.totalorder %s90, %s91
    %p102 = scmp.eq.s32.totalorder %s14, 0
    %p103 = por %p101, %p102
    %p104 = scmp.ne.s32.totalorder %s90, %s91
    %p105 = scmp.eq.s32.totalorder %s15, 7
    %p106 = por %p104, %p105
    %p108 = scmp.ne.s32.totalorder %s91, %s107
    %p109 = scmp.eq.s32.totalorder %s15, 0
    %p110 = por %p108, %p109
    %p111 = scmp.le.s32.totalorder 1, %s9
    %p112 = scmp.lt.s32.totalorder %s9, 9
    %p113 = pnand %p111, %p112
    %p114 = pneg %p113
    // Predicated region
    $region9: #{tpu_custom_call.1} parent=5 // pred_check
      _
    $region10: #{tpu_custom_call.1} parent=5 // pred_check_branch
      %116 = sbr.rel (%p113) target = $region12
    $region11: #{tpu_custom_call.1} parent=5 // pred_region
      %s117 = ssub.s32 %s9, 1
      // Predicated region
      $region13: #{tpu_custom_call.1} parent=11 // pred_check
        %p118 = pneg %p56
      $region14: #{tpu_custom_call.1} parent=11 // pred_check_branch
        %120 = sbr.rel (%p118) target = $region16
      $region15: #{tpu_custom_call.1} parent=11 // pred_region
        _
      $region16: #{tpu_custom_call.1} parent=11 // pred_fallthru
        _
      // Predicated region
      $region17: #{tpu_custom_call.1} parent=11 // pred_check
        %p121 = pneg %p77
      $region18: #{tpu_custom_call.1} parent=11 // pred_check_branch
        %123 = sbr.rel (%p121) target = $region20
      $region19: #{tpu_custom_call.1} parent=11 // pred_region
        _
      $region20: #{tpu_custom_call.1} parent=11 // pred_fallthru
        _
    $region12: #{tpu_custom_call.1} parent=5 // pred_fallthru
      _
    %p124 = scmp.lt.s32.totalorder %s9, 8
    // Predicated region
    $region21: #{tpu_custom_call.1} parent=5 // pred_check
      %p125 = pneg %p124
    $region22: #{tpu_custom_call.1} parent=5 // pred_check_branch
      %127 = sbr.rel (%p125) target = $region24
    $region23: #{tpu_custom_call.1} parent=5 // pred_region
      // Predicated region
      $region25: #{tpu_custom_call.1} parent=23 // pred_check
        %p128 = pneg %p29
      $region26: #{tpu_custom_call.1} parent=23 // pred_check_branch
        %130 = sbr.rel (%p128) target = $region28
      $region27: #{tpu_custom_call.1} parent=23 // pred_region
        %p131 = scmp.lt.s32.totalorder %s9, 7
        %s132 = scalar_select %p131, %s9, 7
        %s133 = smul.addr %s132, 54
        %s134 = smul.addr %s133, 8
        %s135 = scalar_lea.vmem %s0, %s134
      $region28: #{tpu_custom_call.1} parent=23 // pred_fallthru
        _
    $region24: #{tpu_custom_call.1} parent=5 // pred_fallthru
      _
    %p136 = scmp.le.s32.totalorder 1, %s9
    %p137 = scmp.lt.s32.totalorder %s9, 9
    %p138 = pnand %p136, %p137
    %p139 = pneg %p138
    // Predicated region
    $region29: #{tpu_custom_call.1} parent=5 // pred_check
      _
    $region30: #{tpu_custom_call.1} parent=5 // pred_check_branch
      %141 = sbr.rel (%p138) target = $region32
    $region31: #{tpu_custom_call.1} parent=5 // pred_region
      %s142 = ssub.s32 %s9, 1
      %p143 = scmp.lt.s32.totalorder %s14, 7
      %s144 = scalar_select %p143, %s14, 7
      %s145 = smul.addr %s144, 54
      %s146 = smul.addr %s145, 8
      %s147 = scalar_lea.vmem %s0, %s146
      %p148 = pneg %p35
      %p149 = pneg %p32
      %p150 = pneg %p56
      %p151 = pneg %p53
      %p152 = pneg %p77
      %p153 = pneg %p74
      %p154 = pneg %p103
      %p155 = pneg %p100
      %p156 = scmp.lt.s32.totalorder %s14, 7
      %s157 = scalar_select %p156, %s14, 7
      %s158 = smul.addr %s157, 32
      %s159 = smul.addr %s158, 8
      %s160 = scalar_lea.vmem %s3, %s159
      %p161 = scmp.lt.s32.totalorder %s14, 7
      %s162 = scalar_select %p161, %s14, 7
      %s163 = smul.addr %s162, 54
      %s164 = smul.addr %s163, 8
      %s165 = scalar_lea.vmem %s0, %s164
      %p166 = scmp.lt.s32.totalorder %s14, 7
      %s167 = scalar_select %p166, %s14, 7
      %s168 = smul.addr %s167, 32
      %s169 = smul.addr %s168, 8
      %s170 = scalar_lea.vmem %s3, %s169
      %v171 = vld [vmem:[%s165] sm:$0xff]
      %v172 = vld [vmem:[%s165 + $0x8] sm:$0xff]
      %v173 = vld [vmem:[%s165 + $0x18] sm:$0xff]
      %v174 = vld [vmem:[%s165 + $0x20] sm:$0xff]
      %v175 = vld [vmem:[%s165 + $0x30] sm:$0xff]
      %v176 = vld [vmem:[%s165 + $0x38] sm:$0xff]
      %v177 = vld [vmem:[%s165 + $0x48] sm:$0xff]
      %v178 = vld [vmem:[%s165 + $0x50] sm:$0xff]
      %v179 = vld [vmem:[%s165 + $0x60] sm:$0xff]
      %v180 = vld [vmem:[%s165 + $0x68] sm:$0xff]
      %v181 = vld [vmem:[%s165 + $0x78] sm:$0xff]
      %v182 = vld [vmem:[%s165 + $0x80] sm:$0xff]
      %v183 = vld [vmem:[%s165 + $0x90] sm:$0xff]
      %v184 = vld [vmem:[%s165 + $0x98] sm:$0xff]
      %v185 = vld [vmem:[%s165 + $0xa8] sm:$0xff]
      %v186 = vld [vmem:[%s165 + $0xb0] sm:$0xff]
      %v187 = vld [vmem:[%s165 + $0xc0] sm:$0xff]
      %v188 = vld [vmem:[%s165 + $0xc8] sm:$0xff]
      %v189 = vld [vmem:[%s165 + $0xd8] sm:$0xff]
      %v190 = vld [vmem:[%s165 + $0xe0] sm:$0xff]
      %v191 = vld [vmem:[%s165 + $0xf0] sm:$0xff]
      %v192 = vld [vmem:[%s165 + $0xf8] sm:$0xff]
      %v193 = vld [vmem:[%s165 + $0x108] sm:$0xff]
      %v194 = vld [vmem:[%s165 + $0x110] sm:$0xff]
      %v195 = vld [vmem:[%s165 + $0x120] sm:$0xff]
      %v196 = vld [vmem:[%s165 + $0x128] sm:$0xff]
      %v197 = vld [vmem:[%s165 + $0x138] sm:$0xff]
      %v198 = vld [vmem:[%s165 + $0x140] sm:$0xff]
      %v199 = vld [vmem:[%s165 + $0x150] sm:$0xff]
      %v200 = vld [vmem:[%s165 + $0x158] sm:$0xff]
      %v201 = vld [vmem:[%s165 + $0x168] sm:$0xff]
      %v202 = vld [vmem:[%s165 + $0x170] sm:$0xff]
      %v203 = vld [vmem:[%s1] sm:$0xff]
      %v204 = vld [vmem:[%s165 + $0x1] sm:$0xff]
      %v205 = vld [vmem:[%s165 + $0x9] sm:$0xff]
      %v206 = vld [vmem:[%s165 + $0x19] sm:$0xff]
      %v207 = vld [vmem:[%s165 + $0x21] sm:$0xff]
      %v208 = vld [vmem:[%s165 + $0x31] sm:$0xff]
      %v209 = vld [vmem:[%s165 + $0x39] sm:$0xff]
      %v210 = vld [vmem:[%s165 + $0x49] sm:$0xff]
      %v211 = vld [vmem:[%s165 + $0x51] sm:$0xff]
      %v212 = vld [vmem:[%s165 + $0x61] sm:$0xff]
      %v213 = vld [vmem:[%s165 + $0x69] sm:$0xff]
      %v214 = vld [vmem:[%s165 + $0x79] sm:$0xff]
      %v215 = vld [vmem:[%s165 + $0x81] sm:$0xff]
      %v216 = vld [vmem:[%s165 + $0x91] sm:$0xff]
      %v217 = vld [vmem:[%s165 + $0x99] sm:$0xff]
      %v218 = vld [vmem:[%s165 + $0xa9] sm:$0xff]
      %v219 = vld [vmem:[%s165 + $0xb1] sm:$0xff]
      %v220 = vld [vmem:[%s165 + $0xc1] sm:$0xff]
      %v221 = vld [vmem:[%s165 + $0xc9] sm:$0xff]
      %v222 = vld [vmem:[%s165 + $0xd9] sm:$0xff]
      %v223 = vld [vmem:[%s165 + $0xe1] sm:$0xff]
      %v224 = vld [vmem:[%s165 + $0xf1] sm:$0xff]
      %v225 = vld [vmem:[%s165 + $0xf9] sm:$0xff]
      %v226 = vld [vmem:[%s165 + $0x109] sm:$0xff]
      %v227 = vld [vmem:[%s165 + $0x111] sm:$0xff]
      %v228 = vld [vmem:[%s165 + $0x121] sm:$0xff]
      %v229 = vld [vmem:[%s165 + $0x129] sm:$0xff]
      %v230 = vld [vmem:[%s165 + $0x139] sm:$0xff]
      %v231 = vld [vmem:[%s165 + $0x141] sm:$0xff]
      %v232 = vld [vmem:[%s165 + $0x151] sm:$0xff]
      %v233 = vld [vmem:[%s165 + $0x159] sm:$0xff]
      %v234 = vld [vmem:[%s165 + $0x169] sm:$0xff]
      %v235 = vld [vmem:[%s165 + $0x171] sm:$0xff]
      %s236 = scalar_lea.vmem %s1, 8
      %v237 = vld [vmem:[%s236] sm:$0xff]
      %vm238 = vcmask 64512
      %v240 = vsel %vm238, %v204, 0
      %v243 = vsel %vm238, %v205, 0
      %v246 = vsel %vm238, %v206, 0
      %v249 = vsel %vm238, %v207, 0
      %v252 = vsel %vm238, %v208, 0
      %v255 = vsel %vm238, %v209, 0
      %v258 = vsel %vm238, %v210, 0
      %v261 = vsel %vm238, %v211, 0
      %v264 = vsel %vm238, %v212, 0
      %v267 = vsel %vm238, %v213, 0
      %v270 = vsel %vm238, %v214, 0
      %v273 = vsel %vm238, %v215, 0
      %v276 = vsel %vm238, %v216, 0
      %v279 = vsel %vm238, %v217, 0
      %v282 = vsel %vm238, %v218, 0
      %v285 = vsel %vm238, %v219, 0
      %v288 = vsel %vm238, %v220, 0
      %v291 = vsel %vm238, %v221, 0
      %v294 = vsel %vm238, %v222, 0
      %v297 = vsel %vm238, %v223, 0
      %v300 = vsel %vm238, %v224, 0
      %v303 = vsel %vm238, %v225, 0
      %v306 = vsel %vm238, %v226, 0
      %v309 = vsel %vm238, %v227, 0
      %v312 = vsel %vm238, %v228, 0
      %v315 = vsel %vm238, %v229, 0
      %v318 = vsel %vm238, %v230, 0
      %v321 = vsel %vm238, %v231, 0
      %v324 = vsel %vm238, %v232, 0
      %v327 = vsel %vm238, %v233, 0
      %v330 = vsel %vm238, %v234, 0
      %v333 = vsel %vm238, %v235, 0
      %335 = vmatprep.subr.mxu0 0.0
      %336 = vmatpush1.msra.mxu0 %v237
      %337 = vmatprep.subr.mxu0 0.0
      %338 = vmatpush1.msra.mxu0 0.0
      %339 = vmatprep.subr.mxu0 0.0
      %340 = vmatpush1.msra.mxu0 0.0
      %341 = vmatprep.subr.mxu0 0.0
      %342 = vmatpush1.msra.mxu0 0.0
      %343 = vmatprep.subr.mxu0 0.0
      %344 = vmatpush1.msra.mxu0 0.0
      %345 = vmatprep.subr.mxu0 0.0
      %346 = vmatpush1.msra.mxu0 0.0
      %347 = vmatprep.subr.mxu0 0.0
      %348 = vmatpush1.msra.mxu0 0.0
      %349 = vmatprep.subr.mxu0 0.0
      %350 = vmatpush1.msra.mxu0 0.0
      %351 = vmatprep.subr.mxu0 0.0
      %352 = vmatpush1.msra.mxu0 0.0
      %353 = vmatprep.subr.mxu0 0.0
      %354 = vmatpush1.msra.mxu0 0.0
      %355 = vmatprep.subr.mxu0 0.0
      %356 = vmatpush1.msra.mxu0 0.0
      %357 = vmatprep.subr.mxu0 0.0
      %358 = vmatpush1.msra.mxu0 0.0
      %359 = vmatprep.subr.mxu0 0.0
      %360 = vmatpush1.msra.mxu0 0.0
      %361 = vmatprep.subr.mxu0 0.0
      %362 = vmatpush1.msra.mxu0 0.0
      %363 = vmatprep.subr.mxu0 0.0
      %364 = vmatpush1.msra.mxu0 0.0
      %365 = vmatprep.subr.mxu0 0.0
      %366 = vmatpush1.msra.mxu0 0.0
      %367 = vmatprep.subr.mxu0 0.0
      %368 = vmatpush1.msra.mxu0 0.0
      %369 = vmatprep.subr.mxu0 0.0
      %370 = vmatpush1.msra.mxu0 0.0
      %371 = vmatprep.subr.mxu0 0.0
      %372 = vmatpush1.msra.mxu0 0.0
      %373 = vmatprep.subr.mxu0 0.0
      %374 = vmatpush1.msra.mxu0 0.0
      %375 = vmatprep.subr.mxu0 0.0
      %376 = vmatpush1.msra.mxu0 0.0
      %377 = vmatprep.subr.mxu0 0.0
      %378 = vmatpush1.msra.mxu0 0.0
      %379 = vmatprep.subr.mxu0 0.0
      %380 = vmatpush1.msra.mxu0 0.0
      %381 = vmatprep.subr.mxu0 0.0
      %382 = vmatpush1.msra.mxu0 0.0
      %383 = vmatprep.subr.mxu0 0.0
      %384 = vmatpush1.msra.mxu0 0.0
      %385 = vmatprep.subr.mxu0 0.0
      %386 = vmatpush1.msra.mxu0 0.0
      %387 = vmatprep.subr.mxu0 0.0
      %388 = vmatpush1.msra.mxu0 0.0
      %389 = vmatprep.subr.mxu0 0.0
      %390 = vmatpush1.msra.mxu0 0.0
      %391 = vmatprep.subr.mxu0 0.0
      %392 = vmatpush1.msra.mxu0 0.0
      %393 = vmatprep.subr.mxu0 0.0
      %394 = vmatpush1.msra.mxu0 0.0
      %395 = vmatprep.subr.mxu0 0.0
      %396 = vmatpush1.msra.mxu0 0.0
      %397 = vmatprep.subr.mxu0 0.0
      %398 = vmatpush1.msra.mxu0 0.0
      %399 = vmatprep.mubr.f32.mxu0 0.0
      %400 = vmatmul.mubr.f32.gmra.mrb[0].mxu0 %v240
      %v401 = vpop.f32.mrb[0].mxu0
      %v402 = vadd.f32 0.0, %v401
      %v403 = vpop.f32.mrb[0].mxu0
      %404 = vmatprep.mubr.f32.mxu0 0.0
      %405 = vmatmul.mubr.f32.gmra.mrb[0].mxu0 %v243
      %v406 = vpop.f32.mrb[0].mxu0
      %v407 = vadd.f32 0.0, %v406
      %v408 = vpop.f32.mrb[0].mxu0
      %409 = vmatprep.mubr.f32.mxu0 0.0
      %410 = vmatmul.mubr.f32.gmra.mrb[0].mxu0 %v246
      %v411 = vpop.f32.mrb[0].mxu0
      %v412 = vadd.f32 0.0, %v411
      %v413 = vpop.f32.mrb[0].mxu0
      %414 = vmatprep.mubr.f32.mxu0 0.0
      %415 = vmatmul.mubr.f32.gmra.mrb[0].mxu0 %v249
      %v416 = vpop.f32.mrb[0].mxu0
      %v417 = vadd.f32 0.0, %v416
      %v418 = vpop.f32.mrb[0].mxu0
      %419 = vmatprep.mubr.f32.mxu0 0.0
      %420 = vmatmul.mubr.f32.gmra.mrb[0].mxu0 %v252
      %v421 = vpop.f32.mrb[0].mxu0
      %v422 = vadd.f32 0.0, %v421
      %v423 = vpop.f32.mrb[0].mxu0
      %424 = vmatprep.mubr.f32.mxu0 0.0
      %425 = vmatmul.mubr.f32.gmra.mrb[0].mxu0 %v255
      %v426 = vpop.f32.mrb[0].mxu0
      %v427 = vadd.f32 0.0, %v426
      %v428 = vpop.f32.mrb[0].mxu0
      %429 = vmatprep.mubr.f32.mxu0 0.0
      %430 = vmatmul.mubr.f32.gmra.mrb[0].mxu0 %v258
      %v431 = vpop.f32.mrb[0].mxu0
      %v432 = vadd.f32 0.0, %v431
      %v433 = vpop.f32.mrb[0].mxu0
      %434 = vmatprep.mubr.f32.mxu0 0.0
      %435 = vmatmul.mubr.f32.gmra.mrb[0].mxu0 %v261
      %v436 = vpop.f32.mrb[0].mxu0
      %v437 = vadd.f32 0.0, %v436
      %v438 = vpop.f32.mrb[0].mxu0
      %439 = vmatprep.mubr.f32.mxu0 0.0
      %440 = vmatmul.mubr.f32.gmra.mrb[0].mxu0 %v264
      %v441 = vpop.f32.mrb[0].mxu0
      %v442 = vadd.f32 0.0, %v441
      %v443 = vpop.f32.mrb[0].mxu0
      %444 = vmatprep.mubr.f32.mxu0 0.0
      %445 = vmatmul.mubr.f32.gmra.mrb[0].mxu0 %v267
      %v446 = vpop.f32.mrb[0].mxu0
      %v447 = vadd.f32 0.0, %v446
      %v448 = vpop.f32.mrb[0].mxu0
      %449 = vmatprep.mubr.f32.mxu0 0.0
      %450 = vmatmul.mubr.f32.gmra.mrb[0].mxu0 %v270
      %v451 = vpop.f32.mrb[0].mxu0
      %v452 = vadd.f32 0.0, %v451
      %v453 = vpop.f32.mrb[0].mxu0
      %454 = vmatprep.mubr.f32.mxu0 0.0
      %455 = vmatmul.mubr.f32.gmra.mrb[0].mxu0 %v273
      %v456 = vpop.f32.mrb[0].mxu0
      %v457 = vadd.f32 0.0, %v456
      %v458 = vpop.f32.mrb[0].mxu0
      %459 = vmatprep.mubr.f32.mxu0 0.0
      %460 = vmatmul.mubr.f32.gmra.mrb[0].mxu0 %v276
      %v461 = vpop.f32.mrb[0].mxu0
      %v462 = vadd.f32 0.0, %v461
      %v463 = vpop.f32.mrb[0].mxu0
      %464 = vmatprep.mubr.f32.mxu0 0.0
      %465 = vmatmul.mubr.f32.gmra.mrb[0].mxu0 %v279
      %v466 = vpop.f32.mrb[0].mxu0
      %v467 = vadd.f32 0.0, %v466
      %v468 = vpop.f32.mrb[0].mxu0
      %469 = vmatprep.mubr.f32.mxu0 0.0
      %470 = vmatmul.mubr.f32.gmra.mrb[0].mxu0 %v282
      %v471 = vpop.f32.mrb[0].mxu0
      %v472 = vadd.f32 0.0, %v471
      %v473 = vpop.f32.mrb[0].mxu0
      %474 = vmatprep.mubr.f32.mxu0 0.0
      %475 = vmatmul.mubr.f32.gmra.mrb[0].mxu0 %v285
      %v476 = vpop.f32.mrb[0].mxu0
      %v477 = vadd.f32 0.0, %v476
      %v478 = vpop.f32.mrb[0].mxu0
      %479 = vmatprep.mubr.f32.mxu0 0.0
      %480 = vmatmul.mubr.f32.gmra.mrb[0].mxu0 %v288
      %v481 = vpop.f32.mrb[0].mxu0
      %v482 = vadd.f32 0.0, %v481
      %v483 = vpop.f32.mrb[0].mxu0
      %484 = vmatprep.mubr.f32.mxu0 0.0
      %485 = vmatmul.mubr.f32.gmra.mrb[0].mxu0 %v291
      %v486 = vpop.f32.mrb[0].mxu0
      %v487 = vadd.f32 0.0, %v486
      %v488 = vpop.f32.mrb[0].mxu0
      %489 = vmatprep.mubr.f32.mxu0 0.0
      %490 = vmatmul.mubr.f32.gmra.mrb[0].mxu0 %v294
      %v491 = vpop.f32.mrb[0].mxu0
      %v492 = vadd.f32 0.0, %v491
      %v493 = vpop.f32.mrb[0].mxu0
      %494 = vmatprep.mubr.f32.mxu0 0.0
      %495 = vmatmul.mubr.f32.gmra.mrb[0].mxu0 %v297
      %v496 = vpop.f32.mrb[0].mxu0
      %v497 = vadd.f32 0.0, %v496
      %v498 = vpop.f32.mrb[0].mxu0
      %499 = vmatprep.mubr.f32.mxu0 0.0
      %500 = vmatmul.mubr.f32.gmra.mrb[0].mxu0 %v300
      %v501 = vpop.f32.mrb[0].mxu0
      %v502 = vadd.f32 0.0, %v501
      %v503 = vpop.f32.mrb[0].mxu0
      %504 = vmatprep.mubr.f32.mxu0 0.0
      %505 = vmatmul.mubr.f32.gmra.mrb[0].mxu0 %v303
      %v506 = vpop.f32.mrb[0].mxu0
      %v507 = vadd.f32 0.0, %v506
      %v508 = vpop.f32.mrb[0].mxu0
      %509 = vmatprep.mubr.f32.mxu0 0.0
      %510 = vmatmul.mubr.f32.gmra.mrb[0].mxu0 %v306
      %v511 = vpop.f32.mrb[0].mxu0
      %v512 = vadd.f32 0.0, %v511
      %v513 = vpop.f32.mrb[0].mxu0
      %514 = vmatprep.mubr.f32.mxu0 0.0
      %515 = vmatmul.mubr.f32.gmra.mrb[0].mxu0 %v309
      %v516 = vpop.f32.mrb[0].mxu0
      %v517 = vadd.f32 0.0, %v516
      %v518 = vpop.f32.mrb[0].mxu0
      %519 = vmatprep.mubr.f32.mxu0 0.0
      %520 = vmatmul.mubr.f32.gmra.mrb[0].mxu0 %v312
      %v521 = vpop.f32.mrb[0].mxu0
      %v522 = vadd.f32 0.0, %v521
      %v523 = vpop.f32.mrb[0].mxu0
      %524 = vmatprep.mubr.f32.mxu0 0.0
      %525 = vmatmul.mubr.f32.gmra.mrb[0].mxu0 %v315
      %v526 = vpop.f32.mrb[0].mxu0
      %v527 = vadd.f32 0.0, %v526
      %v528 = vpop.f32.mrb[0].mxu0
      %529 = vmatprep.mubr.f32.mxu0 0.0
      %530 = vmatmul.mubr.f32.gmra.mrb[0].mxu0 %v318
      %v531 = vpop.f32.mrb[0].mxu0
      %v532 = vadd.f32 0.0, %v531
      %v533 = vpop.f32.mrb[0].mxu0
      %534 = vmatprep.mubr.f32.mxu0 0.0
      %535 = vmatmul.mubr.f32.gmra.mrb[0].mxu0 %v321
      %v536 = vpop.f32.mrb[0].mxu0
      %v537 = vadd.f32 0.0, %v536
      %v538 = vpop.f32.mrb[0].mxu0
      %539 = vmatprep.mubr.f32.mxu0 0.0
      %540 = vmatmul.mubr.f32.gmra.mrb[0].mxu0 %v324
      %v541 = vpop.f32.mrb[0].mxu0
      %v542 = vadd.f32 0.0, %v541
      %v543 = vpop.f32.mrb[0].mxu0
      %544 = vmatprep.mubr.f32.mxu0 0.0
      %545 = vmatmul.mubr.f32.gmra.mrb[0].mxu0 %v327
      %v546 = vpop.f32.mrb[0].mxu0
      %v547 = vadd.f32 0.0, %v546
      %v548 = vpop.f32.mrb[0].mxu0
      %549 = vmatprep.mubr.f32.mxu0 0.0
      %550 = vmatmul.mubr.f32.gmra.mrb[0].mxu0 %v330
      %v551 = vpop.f32.mrb[0].mxu0
      %v552 = vadd.f32 0.0, %v551
      %v553 = vpop.f32.mrb[0].mxu0
      %554 = vmatprep.mubr.f32.mxu0 0.0
      %555 = vmatmul.mubr.f32.gmra.mrb[0].mxu0 %v333
      %v556 = vpop.f32.mrb[0].mxu0
      %v557 = vadd.f32 0.0, %v556
      %v558 = vpop.f32.mrb[0].mxu0
      %559 = vdwg.mxu0
      %v561 = vsel %vm238, %v171, 0
      %v564 = vsel %vm238, %v172, 0
      %v567 = vsel %vm238, %v173, 0
      %v570 = vsel %vm238, %v174, 0
      %v573 = vsel %vm238, %v175, 0
      %v576 = vsel %vm238, %v176, 0
      %v579 = vsel %vm238, %v177, 0
      %v582 = vsel %vm238, %v178, 0
      %v585 = vsel %vm238, %v179, 0
      %v588 = vsel %vm238, %v180, 0
      %v591 = vsel %vm238, %v181, 0
      %v594 = vsel %vm238, %v182, 0
      %v597 = vsel %vm238, %v183, 0
      %v600 = vsel %vm238, %v184, 0
      %v603 = vsel %vm238, %v185, 0
      %v606 = vsel %vm238, %v186, 0
      %v609 = vsel %vm238, %v187, 0
      %v612 = vsel %vm238, %v188, 0
      %v615 = vsel %vm238, %v189, 0
      %v618 = vsel %vm238, %v190, 0
      %v621 = vsel %vm238, %v191, 0
      %v624 = vsel %vm238, %v192, 0
      %v627 = vsel %vm238, %v193, 0
      %v630 = vsel %vm238, %v194, 0
      %v633 = vsel %vm238, %v195, 0
      %v636 = vsel %vm238, %v196, 0
      %v639 = vsel %vm238, %v197, 0
      %v642 = vsel %vm238, %v198, 0
      %v645 = vsel %vm238, %v199, 0
      %v648 = vsel %vm238, %v200, 0
      %v651 = vsel %vm238, %v201, 0
      %v654 = vsel %vm238, %v202, 0
      %656 = vmatprep.subr.mxu0 0.0
      %657 = vmatpush1.msra.mxu0 %v203
      %658 = vmatprep.subr.mxu0 0.0
      %659 = vmatpush1.msra.mxu0 0.0
      %660 = vmatprep.subr.mxu0 0.0
      %661 = vmatpush1.msra.mxu0 0.0
      %662 = vmatprep.subr.mxu0 0.0
      %663 = vmatpush1.msra.mxu0 0.0
      %664 = vmatprep.subr.mxu0 0.0
      %665 = vmatpush1.msra.mxu0 0.0
      %666 = vmatprep.subr.mxu0 0.0
      %667 = vmatpush1.msra.mxu0 0.0
      %668 = vmatprep.subr.mxu0 0.0
      %669 = vmatpush1.msra.mxu0 0.0
      %670 = vmatprep.subr.mxu0 0.0
      %671 = vmatpush1.msra.mxu0 0.0
      %672 = vmatprep.subr.mxu0 0.0
      %673 = vmatpush1.msra.mxu0 0.0
      %674 = vmatprep.subr.mxu0 0.0
      %675 = vmatpush1.msra.mxu0 0.0
      %676 = vmatprep.subr.mxu0 0.0
      %677 = vmatpush1.msra.mxu0 0.0
      %678 = vmatprep.subr.mxu0 0.0
      %679 = vmatpush1.msra.mxu0 0.0
      %680 = vmatprep.subr.mxu0 0.0
      %681 = vmatpush1.msra.mxu0 0.0
      %682 = vmatprep.subr.mxu0 0.0
      %683 = vmatpush1.msra.mxu0 0.0
      %684 = vmatprep.subr.mxu0 0.0
      %685 = vmatpush1.msra.mxu0 0.0
      %686 = vmatprep.subr.mxu0 0.0
      %687 = vmatpush1.msra.mxu0 0.0
      %688 = vmatprep.subr.mxu0 0.0
      %689 = vmatpush1.msra.mxu0 0.0
      %690 = vmatprep.subr.mxu0 0.0
      %691 = vmatpush1.msra.mxu0 0.0
      %692 = vmatprep.subr.mxu0 0.0
      %693 = vmatpush1.msra.mxu0 0.0
      %694 = vmatprep.subr.mxu0 0.0
      %695 = vmatpush1.msra.mxu0 0.0
      %696 = vmatprep.subr.mxu0 0.0
      %697 = vmatpush1.msra.mxu0 0.0
      %698 = vmatprep.subr.mxu0 0.0
      %699 = vmatpush1.msra.mxu0 0.0
      %700 = vmatprep.subr.mxu0 0.0
      %701 = vmatpush1.msra.mxu0 0.0
      %702 = vmatprep.subr.mxu0 0.0
      %703 = vmatpush1.msra.mxu0 0.0
      %704 = vmatprep.subr.mxu0 0.0
      %705 = vmatpush1.msra.mxu0 0.0
      %706 = vmatprep.subr.mxu0 0.0
      %707 = vmatpush1.msra.mxu0 0.0
      %708 = vmatprep.subr.mxu0 0.0
      %709 = vmatpush1.msra.mxu0 0.0
      %710 = vmatprep.subr.mxu0 0.0
      %711 = vmatpush1.msra.mxu0 0.0
      %712 = vmatprep.subr.mxu0 0.0
      %713 = vmatpush1.msra.mxu0 0.0
      %714 = vmatprep.subr.mxu0 0.0
      %715 = vmatpush1.msra.mxu0 0.0
      %716 = vmatprep.subr.mxu0 0.0
      %717 = vmatpush1.msra.mxu0 0.0
      %718 = vmatprep.subr.mxu0 0.0
      %719 = vmatpush1.msra.mxu0 0.0
      %720 = vmatprep.mubr.f32.mxu0 0.0
      %721 = vmatmul.mubr.f32.gmra.mrb[0].mxu0 %v561
      %v722 = vpop.f32.mrb[0].mxu0
      %v723 = vadd.f32 %v402, %v722
      %v724 = vpop.f32.mrb[0].mxu0
      %725 = vmatprep.mubr.f32.mxu0 0.0
      %726 = vmatmul.mubr.f32.gmra.mrb[0].mxu0 %v564
      %v727 = vpop.f32.mrb[0].mxu0
      %v728 = vadd.f32 %v407, %v727
      %v729 = vpop.f32.mrb[0].mxu0
      %730 = vmatprep.mubr.f32.mxu0 0.0
      %731 = vmatmul.mubr.f32.gmra.mrb[0].mxu0 %v567
      %v732 = vpop.f32.mrb[0].mxu0
      %v733 = vadd.f32 %v412, %v732
      %v734 = vpop.f32.mrb[0].mxu0
      %735 = vmatprep.mubr.f32.mxu0 0.0
      %736 = vmatmul.mubr.f32.gmra.mrb[0].mxu0 %v570
      %v737 = vpop.f32.mrb[0].mxu0
      %v738 = vadd.f32 %v417, %v737
      %v739 = vpop.f32.mrb[0].mxu0
      %740 = vmatprep.mubr.f32.mxu0 0.0
      %741 = vmatmul.mubr.f32.gmra.mrb[0].mxu0 %v573
      %v742 = vpop.f32.mrb[0].mxu0
      %v743 = vadd.f32 %v422, %v742
      %v744 = vpop.f32.mrb[0].mxu0
      %745 = vmatprep.mubr.f32.mxu0 0.0
      %746 = vmatmul.mubr.f32.gmra.mrb[0].mxu0 %v576
      %v747 = vpop.f32.mrb[0].mxu0
      %v748 = vadd.f32 %v427, %v747
      %v749 = vpop.f32.mrb[0].mxu0
      %750 = vmatprep.mubr.f32.mxu0 0.0
      %751 = vmatmul.mubr.f32.gmra.mrb[0].mxu0 %v579
      %v752 = vpop.f32.mrb[0].mxu0
      %v753 = vadd.f32 %v432, %v752
      %v754 = vpop.f32.mrb[0].mxu0
      %755 = vmatprep.mubr.f32.mxu0 0.0
      %756 = vmatmul.mubr.f32.gmra.mrb[0].mxu0 %v582
      %v757 = vpop.f32.mrb[0].mxu0
      %v758 = vadd.f32 %v437, %v757
      %v759 = vpop.f32.mrb[0].mxu0
      %760 = vmatprep.mubr.f32.mxu0 0.0
      %761 = vmatmul.mubr.f32.gmra.mrb[0].mxu0 %v585
      %v762 = vpop.f32.mrb[0].mxu0
      %v763 = vadd.f32 %v442, %v762
      %v764 = vpop.f32.mrb[0].mxu0
      %765 = vmatprep.mubr.f32.mxu0 0.0
      %766 = vmatmul.mubr.f32.gmra.mrb[0].mxu0 %v588
      %v767 = vpop.f32.mrb[0].mxu0
      %v768 = vadd.f32 %v447, %v767
      %v769 = vpop.f32.mrb[0].mxu0
      %770 = vmatprep.mubr.f32.mxu0 0.0
      %771 = vmatmul.mubr.f32.gmra.mrb[0].mxu0 %v591
      %v772 = vpop.f32.mrb[0].mxu0
      %v773 = vadd.f32 %v452, %v772
      %v774 = vpop.f32.mrb[0].mxu0
      %775 = vmatprep.mubr.f32.mxu0 0.0
      %776 = vmatmul.mubr.f32.gmra.mrb[0].mxu0 %v594
      %v777 = vpop.f32.mrb[0].mxu0
      %v778 = vadd.f32 %v457, %v777
      %v779 = vpop.f32.mrb[0].mxu0
      %780 = vmatprep.mubr.f32.mxu0 0.0
      %781 = vmatmul.mubr.f32.gmra.mrb[0].mxu0 %v597
      %v782 = vpop.f32.mrb[0].mxu0
      %v783 = vadd.f32 %v462, %v782
      %v784 = vpop.f32.mrb[0].mxu0
      %785 = vmatprep.mubr.f32.mxu0 0.0
      %786 = vmatmul.mubr.f32.gmra.mrb[0].mxu0 %v600
      %v787 = vpop.f32.mrb[0].mxu0
      %v788 = vadd.f32 %v467, %v787
      %v789 = vpop.f32.mrb[0].mxu0
      %790 = vmatprep.mubr.f32.mxu0 0.0
      %791 = vmatmul.mubr.f32.gmra.mrb[0].mxu0 %v603
      %v792 = vpop.f32.mrb[0].mxu0
      %v793 = vadd.f32 %v472, %v792
      %v794 = vpop.f32.mrb[0].mxu0
      %795 = vmatprep.mubr.f32.mxu0 0.0
      %796 = vmatmul.mubr.f32.gmra.mrb[0].mxu0 %v606
      %v797 = vpop.f32.mrb[0].mxu0
      %v798 = vadd.f32 %v477, %v797
      %v799 = vpop.f32.mrb[0].mxu0
      %800 = vmatprep.mubr.f32.mxu0 0.0
      %801 = vmatmul.mubr.f32.gmra.mrb[0].mxu0 %v609
      %v802 = vpop.f32.mrb[0].mxu0
      %v803 = vadd.f32 %v482, %v802
      %v804 = vpop.f32.mrb[0].mxu0
      %805 = vmatprep.mubr.f32.mxu0 0.0
      %806 = vmatmul.mubr.f32.gmra.mrb[0].mxu0 %v612
      %v807 = vpop.f32.mrb[0].mxu0
      %v808 = vadd.f32 %v487, %v807
      %v809 = vpop.f32.mrb[0].mxu0
      %810 = vmatprep.mubr.f32.mxu0 0.0
      %811 = vmatmul.mubr.f32.gmra.mrb[0].mxu0 %v615
      %v812 = vpop.f32.mrb[0].mxu0
      %v813 = vadd.f32 %v492, %v812
      %v814 = vpop.f32.mrb[0].mxu0
      %815 = vmatprep.mubr.f32.mxu0 0.0
      %816 = vmatmul.mubr.f32.gmra.mrb[0].mxu0 %v618
      %v817 = vpop.f32.mrb[0].mxu0
      %v818 = vadd.f32 %v497, %v817
      %v819 = vpop.f32.mrb[0].mxu0
      %820 = vmatprep.mubr.f32.mxu0 0.0
      %821 = vmatmul.mubr.f32.gmra.mrb[0].mxu0 %v621
      %v822 = vpop.f32.mrb[0].mxu0
      %v823 = vadd.f32 %v502, %v822
      %v824 = vpop.f32.mrb[0].mxu0
      %825 = vmatprep.mubr.f32.mxu0 0.0
      %826 = vmatmul.mubr.f32.gmra.mrb[0].mxu0 %v624
      %v827 = vpop.f32.mrb[0].mxu0
      %v828 = vadd.f32 %v507, %v827
      %v829 = vpop.f32.mrb[0].mxu0
      %830 = vmatprep.mubr.f32.mxu0 0.0
      %831 = vmatmul.mubr.f32.gmra.mrb[0].mxu0 %v627
      %v832 = vpop.f32.mrb[0].mxu0
      %v833 = vadd.f32 %v512, %v832
      %v834 = vpop.f32.mrb[0].mxu0
      %835 = vmatprep.mubr.f32.mxu0 0.0
      %836 = vmatmul.mubr.f32.gmra.mrb[0].mxu0 %v630
      %v837 = vpop.f32.mrb[0].mxu0
      %v838 = vadd.f32 %v517, %v837
      %v839 = vpop.f32.mrb[0].mxu0
      %840 = vmatprep.mubr.f32.mxu0 0.0
      %841 = vmatmul.mubr.f32.gmra.mrb[0].mxu0 %v633
      %v842 = vpop.f32.mrb[0].mxu0
      %v843 = vadd.f32 %v522, %v842
      %v844 = vpop.f32.mrb[0].mxu0
      %845 = vmatprep.mubr.f32.mxu0 0.0
      %846 = vmatmul.mubr.f32.gmra.mrb[0].mxu0 %v636
      %v847 = vpop.f32.mrb[0].mxu0
      %v848 = vadd.f32 %v527, %v847
      %v849 = vpop.f32.mrb[0].mxu0
      %850 = vmatprep.mubr.f32.mxu0 0.0
      %851 = vmatmul.mubr.f32.gmra.mrb[0].mxu0 %v639
      %v852 = vpop.f32.mrb[0].mxu0
      %v853 = vadd.f32 %v532, %v852
      %v854 = vpop.f32.mrb[0].mxu0
      %855 = vmatprep.mubr.f32.mxu0 0.0
      %856 = vmatmul.mubr.f32.gmra.mrb[0].mxu0 %v642
      %v857 = vpop.f32.mrb[0].mxu0
      %v858 = vadd.f32 %v537, %v857
      %v859 = vpop.f32.mrb[0].mxu0
      %860 = vmatprep.mubr.f32.mxu0 0.0
      %861 = vmatmul.mubr.f32.gmra.mrb[0].mxu0 %v645
      %v862 = vpop.f32.mrb[0].mxu0
      %v863 = vadd.f32 %v542, %v862
      %v864 = vpop.f32.mrb[0].mxu0
      %865 = vmatprep.mubr.f32.mxu0 0.0
      %866 = vmatmul.mubr.f32.gmra.mrb[0].mxu0 %v648
      %v867 = vpop.f32.mrb[0].mxu0
      %v868 = vadd.f32 %v547, %v867
      %v869 = vpop.f32.mrb[0].mxu0
      %870 = vmatprep.mubr.f32.mxu0 0.0
      %871 = vmatmul.mubr.f32.gmra.mrb[0].mxu0 %v651
      %v872 = vpop.f32.mrb[0].mxu0
      %v873 = vadd.f32 %v552, %v872
      %v874 = vpop.f32.mrb[0].mxu0
      %875 = vmatprep.mubr.f32.mxu0 0.0
      %876 = vmatmul.mubr.f32.gmra.mrb[0].mxu0 %v654
      %v877 = vpop.f32.mrb[0].mxu0
      %v878 = vadd.f32 %v557, %v877
      %v879 = vpop.f32.mrb[0].mxu0
      %880 = vdwg.mxu0
      %v881 = vld [vmem:[%s165 + $0x2] sm:$0xff]
      %v882 = vld [vmem:[%s165 + $0xa] sm:$0xff]
      %v883 = vld [vmem:[%s165 + $0x1a] sm:$0xff]
      %v884 = vld [vmem:[%s165 + $0x22] sm:$0xff]
      %v885 = vld [vmem:[%s165 + $0x32] sm:$0xff]
      %v886 = vld [vmem:[%s165 + $0x3a] sm:$0xff]
      %v887 = vld [vmem:[%s165 + $0x4a] sm:$0xff]
      %v888 = vld [vmem:[%s165 + $0x52] sm:$0xff]
      %v889 = vld [vmem:[%s165 + $0x62] sm:$0xff]
      %v890 = vld [vmem:[%s165 + $0x6a] sm:$0xff]
      %v891 = vld [vmem:[%s165 + $0x7a] sm:$0xff]
      %v892 = vld [vmem:[%s165 + $0x82] sm:$0xff]
      %v893 = vld [vmem:[%s165 + $0x92] sm:$0xff]
      %v894 = vld [vmem:[%s165 + $0x9a] sm:$0xff]
      %v895 = vld [vmem:[%s165 + $0xaa] sm:$0xff]
      %v896 = vld [vmem:[%s165 + $0xb2] sm:$0xff]
      %v897 = vld [vmem:[%s165 + $0xc2] sm:$0xff]
      %v898 = vld [vmem:[%s165 + $0xca] sm:$0xff]
      %v899 = vld [vmem:[%s165 + $0xda] sm:$0xff]
      %v900 = vld [vmem:[%s165 + $0xe2] sm:$0xff]
      %v901 = vld [vmem:[%s165 + $0xf2] sm:$0xff]
      %v902 = vld [vmem:[%s165 + $0xfa] sm:$0xff]
      %v903 = vld [vmem:[%s165 + $0x10a] sm:$0xff]
      %v904 = vld [vmem:[%s165 + $0x112] sm:$0xff]
      %v905 = vld [vmem:[%s165 + $0x122] sm:$0xff]
      %v906 = vld [vmem:[%s165 + $0x12a] sm:$0xff]
      %v907 = vld [vmem:[%s165 + $0x13a] sm:$0xff]
      %v908 = vld [vmem:[%s165 + $0x142] sm:$0xff]
      %v909 = vld [vmem:[%s165 + $0x152] sm:$0xff]
      %v910 = vld [vmem:[%s165 + $0x15a] sm:$0xff]
      %v911 = vld [vmem:[%s165 + $0x16a] sm:$0xff]
      %v912 = vld [vmem:[%s165 + $0x172] sm:$0xff]
      %s913 = scalar_lea.vmem %s1, 16
      %v914 = vld [vmem:[%s913] sm:$0xff]
      %v916 = vsel %vm238, %v881, 0
      %v919 = vsel %vm238, %v882, 0
      %v922 = vsel %vm238, %v883, 0
      %v925 = vsel %vm238, %v884, 0
      %v928 = vsel %vm238, %v885, 0
      %v931 = vsel %vm238, %v886, 0
      %v934 = vsel %vm238, %v887, 0
      %v937 = vsel %vm238, %v888, 0
      %v940 = vsel %vm238, %v889, 0
      %v943 = vsel %vm238, %v890, 0
      %v946 = vsel %vm238, %v891, 0
      %v949 = vsel %vm238, %v892, 0
      %v952 = vsel %vm238, %v893, 0
      %v955 = vsel %vm238, %v894, 0
      %v958 = vsel %vm238, %v895, 0
      %v961 = vsel %vm238, %v896, 0
      %v964 = vsel %vm238, %v897, 0
      %v967 = vsel %vm238, %v898, 0
      %v970 = vsel %vm238, %v899, 0
      %v973 = vsel %vm238, %v900, 0
      %v976 = vsel %vm238, %v901, 0
      %v979 = vsel %vm238, %v902, 0
      %v982 = vsel %vm238, %v903, 0
      %v985 = vsel %vm238, %v904, 0
      %v988 = vsel %vm238, %v905, 0
      %v991 = vsel %vm238, %v906, 0
      %v994 = vsel %vm238, %v907, 0
      %v997 = vsel %vm238, %v908, 0
      %v1000 = vsel %vm238, %v909, 0
      %v1003 = vsel %vm238, %v910, 0
      %v1006 = vsel %vm238, %v911, 0
      %v1009 = vsel %vm238, %v912, 0
      %1011 = vmatprep.subr.mxu0 0.0
      %1012 = vmatpush1.msra.mxu0 %v914
      %1013 = vmatprep.subr.mxu0 0.0
      %1014 = vmatpush1.msra.mxu0 0.0
      %1015 = vmatprep.subr.mxu0 0.0
      %1016 = vmatpush1.msra.mxu0 0.0
      %1017 = vmatprep.subr.mxu0 0.0
      %1018 = vmatpush1.msra.mxu0 0.0
      %1019 = vmatprep.subr.mxu0 0.0
      %1020 = vmatpush1.msra.mxu0 0.0
      %1021 = vmatprep.subr.mxu0 0.0
      %1022 = vmatpush1.msra.mxu0 0.0
      %1023 = vmatprep.subr.mxu0 0.0
      %1024 = vmatpush1.msra.mxu0 0.0
      %1025 = vmatprep.subr.mxu0 0.0
      %1026 = vmatpush1.msra.mxu0 0.0
      %1027 = vmatprep.subr.mxu0 0.0
      %1028 = vmatpush1.msra.mxu0 0.0
      %1029 = vmatprep.subr.mxu0 0.0
      %1030 = vmatpush1.msra.mxu0 0.0
      %1031 = vmatprep.subr.mxu0 0.0
      %1032 = vmatpush1.msra.mxu0 0.0
      %1033 = vmatprep.subr.mxu0 0.0
      %1034 = vmatpush1.msra.mxu0 0.0
      %1035 = vmatprep.subr.mxu0 0.0
      %1036 = vmatpush1.msra.mxu0 0.0
      %1037 = vmatprep.subr.mxu0 0.0
      %1038 = vmatpush1.msra.mxu0 0.0
      %1039 = vmatprep.subr.mxu0 0.0
      %1040 = vmatpush1.msra.mxu0 0.0
      %1041 = vmatprep.subr.mxu0 0.0
      %1042 = vmatpush1.msra.mxu0 0.0
      %1043 = vmatprep.subr.mxu0 0.0
      %1044 = vmatpush1.msra.mxu0 0.0
      %1045 = vmatprep.subr.mxu0 0.0
      %1046 = vmatpush1.msra.mxu0 0.0
      %1047 = vmatprep.subr.mxu0 0.0
      %1048 = vmatpush1.msra.mxu0 0.0
      %1049 = vmatprep.subr.mxu0 0.0
      %1050 = vmatpush1.msra.mxu0 0.0
      %1051 = vmatprep.subr.mxu0 0.0
      %1052 = vmatpush1.msra.mxu0 0.0
      %1053 = vmatprep.subr.mxu0 0.0
      %1054 = vmatpush1.msra.mxu0 0.0
      %1055 = vmatprep.subr.mxu0 0.0
      %1056 = vmatpush1.msra.mxu0 0.0
      %1057 = vmatprep.subr.mxu0 0.0
      %1058 = vmatpush1.msra.mxu0 0.0
      %1059 = vmatprep.subr.mxu0 0.0
      %1060 = vmatpush1.msra.mxu0 0.0
      %1061 = vmatprep.subr.mxu0 0.0
      %1062 = vmatpush1.msra.mxu0 0.0
      %1063 = vmatprep.subr.mxu0 0.0
      %1064 = vmatpush1.msra.mxu0 0.0
      %1065 = vmatprep.subr.mxu0 0.0
      %1066 = vmatpush1.msra.mxu0 0.0
      %1067 = vmatprep.subr.mxu0 0.0
      %1068 = vmatpush1.msra.mxu0 0.0
      %1069 = vmatprep.subr.mxu0 0.0
      %1070 = vmatpush1.msra.mxu0 0.0
      %1071 = vmatprep.subr.mxu0 0.0
      %1072 = vmatpush1.msra.mxu0 0.0
      %1073 = vmatprep.subr.mxu0 0.0
      %1074 = vmatpush1.msra.mxu0 0.0
      %1075 = vmatprep.mubr.f32.mxu0 0.0
      %1076 = vmatmul.mubr.f32.gmra.mrb[0].mxu0 %v916
      %v1077 = vpop.f32.mrb[0].mxu0
      %v1078 = vadd.f32 0.0, %v1077
      %v1079 = vpop.f32.mrb[0].mxu0
      %1080 = vmatprep.mubr.f32.mxu0 0.0
      %1081 = vmatmul.mubr.f32.gmra.mrb[0].mxu0 %v919
      %v1082 = vpop.f32.mrb[0].mxu0
      %v1083 = vadd.f32 0.0, %v1082
      %v1084 = vpop.f32.mrb[0].mxu0
      %1085 = vmatprep.mubr.f32.mxu0 0.0
      %1086 = vmatmul.mubr.f32.gmra.mrb[0].mxu0 %v922
      %v1087 = vpop.f32.mrb[0].mxu0
      %v1088 = vadd.f32 0.0, %v1087
      %v1089 = vpop.f32.mrb[0].mxu0
      %1090 = vmatprep.mubr.f32.mxu0 0.0
      %1091 = vmatmul.mubr.f32.gmra.mrb[0].mxu0 %v925
      %v1092 = vpop.f32.mrb[0].mxu0
      %v1093 = vadd.f32 0.0, %v1092
      %v1094 = vpop.f32.mrb[0].mxu0
      %1095 = vmatprep.mubr.f32.mxu0 0.0
      %1096 = vmatmul.mubr.f32.gmra.mrb[0].mxu0 %v928
      %v1097 = vpop.f32.mrb[0].mxu0
      %v1098 = vadd.f32 0.0, %v1097
      %v1099 = vpop.f32.mrb[0].mxu0
      %1100 = vmatprep.mubr.f32.mxu0 0.0
      %1101 = vmatmul.mubr.f32.gmra.mrb[0].mxu0 %v931
      %v1102 = vpop.f32.mrb[0].mxu0
      %v1103 = vadd.f32 0.0, %v1102
      %v1104 = vpop.f32.mrb[0].mxu0
      %1105 = vmatprep.mubr.f32.mxu0 0.0
      %1106 = vmatmul.mubr.f32.gmra.mrb[0].mxu0 %v934
      %v1107 = vpop.f32.mrb[0].mxu0
      %v1108 = vadd.f32 0.0, %v1107
      %v1109 = vpop.f32.mrb[0].mxu0
      %1110 = vmatprep.mubr.f32.mxu0 0.0
      %1111 = vmatmul.mubr.f32.gmra.mrb[0].mxu0 %v937
      %v1112 = vpop.f32.mrb[0].mxu0
      %v1113 = vadd.f32 0.0, %v1112
      %v1114 = vpop.f32.mrb[0].mxu0
      %1115 = vmatprep.mubr.f32.mxu0 0.0
      %1116 = vmatmul.mubr.f32.gmra.mrb[0].mxu0 %v940
      %v1117 = vpop.f32.mrb[0].mxu0
      %v1118 = vadd.f32 0.0, %v1117
      %v1119 = vpop.f32.mrb[0].mxu0
      %1120 = vmatprep.mubr.f32.mxu0 0.0
      %1121 = vmatmul.mubr.f32.gmra.mrb[0].mxu0 %v943
      %v1122 = vpop.f32.mrb[0].mxu0
      %v1123 = vadd.f32 0.0, %v1122
      %v1124 = vpop.f32.mrb[0].mxu0
      %1125 = vmatprep.mubr.f32.mxu0 0.0
      %1126 = vmatmul.mubr.f32.gmra.mrb[0].mxu0 %v946
      %v1127 = vpop.f32.mrb[0].mxu0
      %v1128 = vadd.f32 0.0, %v1127
      %v1129 = vpop.f32.mrb[0].mxu0
      %1130 = vmatprep.mubr.f32.mxu0 0.0
      %1131 = vmatmul.mubr.f32.gmra.mrb[0].mxu0 %v949
      %v1132 = vpop.f32.mrb[0].mxu0
      %v1133 = vadd.f32 0.0, %v1132
      %v1134 = vpop.f32.mrb[0].mxu0
      %1135 = vmatprep.mubr.f32.mxu0 0.0
      %1136 = vmatmul.mubr.f32.gmra.mrb[0].mxu0 %v952
      %v1137 = vpop.f32.mrb[0].mxu0
      %v1138 = vadd.f32 0.0, %v1137
      %v1139 = vpop.f32.mrb[0].mxu0
      %1140 = vmatprep.mubr.f32.mxu0 0.0
      %1141 = vmatmul.mubr.f32.gmra.mrb[0].mxu0 %v955
      %v1142 = vpop.f32.mrb[0].mxu0
      %v1143 = vadd.f32 0.0, %v1142
      %v1144 = vpop.f32.mrb[0].mxu0
      %1145 = vmatprep.mubr.f32.mxu0 0.0
      %1146 = vmatmul.mubr.f32.gmra.mrb[0].mxu0 %v958
      %v1147 = vpop.f32.mrb[0].mxu0
      %v1148 = vadd.f32 0.0, %v1147
      %v1149 = vpop.f32.mrb[0].mxu0
      %1150 = vmatprep.mubr.f32.mxu0 0.0
      %1151 = vmatmul.mubr.f32.gmra.mrb[0].mxu0 %v961
      %v1152 = vpop.f32.mrb[0].mxu0
      %v1153 = vadd.f32 0.0, %v1152
      %v1154 = vpop.f32.mrb[0].mxu0
      %1155 = vmatprep.mubr.f32.mxu0 0.0
      %1156 = vmatmul.mubr.f32.gmra.mrb[0].mxu0 %v964
      %v1157 = vpop.f32.mrb[0].mxu0
      %v1158 = vadd.f32 0.0, %v1157
      %v1159 = vpop.f32.mrb[0].mxu0
      %1160 = vmatprep.mubr.f32.mxu0 0.0
      %1161 = vmatmul.mubr.f32.gmra.mrb[0].mxu0 %v967
      %v1162 = vpop.f32.mrb[0].mxu0
      %v1163 = vadd.f32 0.0, %v1162
      %v1164 = vpop.f32.mrb[0].mxu0
      %1165 = vmatprep.mubr.f32.mxu0 0.0
      %1166 = vmatmul.mubr.f32.gmra.mrb[0].mxu0 %v970
      %v1167 = vpop.f32.mrb[0].mxu0
      %v1168 = vadd.f32 0.0, %v1167
      %v1169 = vpop.f32.mrb[0].mxu0
      %1170 = vmatprep.mubr.f32.mxu0 0.0
      %1171 = vmatmul.mubr.f32.gmra.mrb[0].mxu0 %v973
      %v1172 = vpop.f32.mrb[0].mxu0
      %v1173 = vadd.f32 0.0, %v1172
      %v1174 = vpop.f32.mrb[0].mxu0
      %1175 = vmatprep.mubr.f32.mxu0 0.0
      %1176 = vmatmul.mubr.f32.gmra.mrb[0].mxu0 %v976
      %v1177 = vpop.f32.mrb[0].mxu0
      %v1178 = vadd.f32 0.0, %v1177
      %v1179 = vpop.f32.mrb[0].mxu0
      %1180 = vmatprep.mubr.f32.mxu0 0.0
      %1181 = vmatmul.mubr.f32.gmra.mrb[0].mxu0 %v979
      %v1182 = vpop.f32.mrb[0].mxu0
      %v1183 = vadd.f32 0.0, %v1182
      %v1184 = vpop.f32.mrb[0].mxu0
      %1185 = vmatprep.mubr.f32.mxu0 0.0
      %1186 = vmatmul.mubr.f32.gmra.mrb[0].mxu0 %v982
      %v1187 = vpop.f32.mrb[0].mxu0
      %v1188 = vadd.f32 0.0, %v1187
      %v1189 = vpop.f32.mrb[0].mxu0
      %1190 = vmatprep.mubr.f32.mxu0 0.0
      %1191 = vmatmul.mubr.f32.gmra.mrb[0].mxu0 %v985
      %v1192 = vpop.f32.mrb[0].mxu0
      %v1193 = vadd.f32 0.0, %v1192
      %v1194 = vpop.f32.mrb[0].mxu0
      %1195 = vmatprep.mubr.f32.mxu0 0.0
      %1196 = vmatmul.mubr.f32.gmra.mrb[0].mxu0 %v988
      %v1197 = vpop.f32.mrb[0].mxu0
      %v1198 = vadd.f32 0.0, %v1197
      %v1199 = vpop.f32.mrb[0].mxu0
      %1200 = vmatprep.mubr.f32.mxu0 0.0
      %1201 = vmatmul.mubr.f32.gmra.mrb[0].mxu0 %v991
      %v1202 = vpop.f32.mrb[0].mxu0
      %v1203 = vadd.f32 0.0, %v1202
      %v1204 = vpop.f32.mrb[0].mxu0
      %1205 = vmatprep.mubr.f32.mxu0 0.0
      %1206 = vmatmul.mubr.f32.gmra.mrb[0].mxu0 %v994
      %v1207 = vpop.f32.mrb[0].mxu0
      %v1208 = vadd.f32 0.0, %v1207
      %v1209 = vpop.f32.mrb[0].mxu0
      %1210 = vmatprep.mubr.f32.mxu0 0.0
      %1211 = vmatmul.mubr.f32.gmra.mrb[0].mxu0 %v997
      %v1212 = vpop.f32.mrb[0].mxu0
      %v1213 = vadd.f32 0.0, %v1212
      %v1214 = vpop.f32.mrb[0].mxu0
      %1215 = vmatprep.mubr.f32.mxu0 0.0
      %1216 = vmatmul.mubr.f32.gmra.mrb[0].mxu0 %v1000
      %v1217 = vpop.f32.mrb[0].mxu0
      %v1218 = vadd.f32 0.0, %v1217
      %v1219 = vpop.f32.mrb[0].mxu0
      %1220 = vmatprep.mubr.f32.mxu0 0.0
      %1221 = vmatmul.mubr.f32.gmra.mrb[0].mxu0 %v1003
      %v1222 = vpop.f32.mrb[0].mxu0
      %v1223 = vadd.f32 0.0, %v1222
      %v1224 = vpop.f32.mrb[0].mxu0
      %1225 = vmatprep.mubr.f32.mxu0 0.0
      %1226 = vmatmul.mubr.f32.gmra.mrb[0].mxu0 %v1006
      %v1227 = vpop.f32.mrb[0].mxu0
      %v1228 = vadd.f32 0.0, %v1227
      %v1229 = vpop.f32.mrb[0].mxu0
      %1230 = vmatprep.mubr.f32.mxu0 0.0
      %1231 = vmatmul.mubr.f32.gmra.mrb[0].mxu0 %v1009
      %v1232 = vpop.f32.mrb[0].mxu0
      %v1233 = vadd.f32 0.0, %v1232
      %v1234 = vpop.f32.mrb[0].mxu0
      %1235 = vdwg.mxu0
      %v1236 = vadd.f32 %v723, %v1078
      %v1237 = vadd.f32 %v728, %v1083
      %v1238 = vadd.f32 %v733, %v1088
      %v1239 = vadd.f32 %v738, %v1093
      %v1240 = vadd.f32 %v743, %v1098
      %v1241 = vadd.f32 %v748, %v1103
      %v1242 = vadd.f32 %v753, %v1108
      %v1243 = vadd.f32 %v758, %v1113
      %v1244 = vadd.f32 %v763, %v1118
      %v1245 = vadd.f32 %v768, %v1123
      %v1246 = vadd.f32 %v773, %v1128
      %v1247 = vadd.f32 %v778, %v1133
      %v1248 = vadd.f32 %v783, %v1138
      %v1249 = vadd.f32 %v788, %v1143
      %v1250 = vadd.f32 %v793, %v1148
      %v1251 = vadd.f32 %v798, %v1153
      %v1252 = vadd.f32 %v803, %v1158
      %v1253 = vadd.f32 %v808, %v1163
      %v1254 = vadd.f32 %v813, %v1168
      %v1255 = vadd.f32 %v818, %v1173
      %v1256 = vadd.f32 %v823, %v1178
      %v1257 = vadd.f32 %v828, %v1183
      %v1258 = vadd.f32 %v833, %v1188
      %v1259 = vadd.f32 %v838, %v1193
      %v1260 = vadd.f32 %v843, %v1198
      %v1261 = vadd.f32 %v848, %v1203
      %v1262 = vadd.f32 %v853, %v1208
      %v1263 = vadd.f32 %v858, %v1213
      %v1264 = vadd.f32 %v863, %v1218
      %v1265 = vadd.f32 %v868, %v1223
      %v1266 = vadd.f32 %v873, %v1228
      %v1267 = vadd.f32 %v878, %v1233
      %s1268 = scalar_lea.vmem %s165, 24
      %v1269 = vld [vmem:[%s1268] sm:$0xff]
      %v1270 = vld [vmem:[%s1268 + $0x8] sm:$0xff]
      %v1271 = vld [vmem:[%s1268 + $0x18] sm:$0xff]
      %v1272 = vld [vmem:[%s1268 + $0x20] sm:$0xff]
      %v1273 = vld [vmem:[%s1268 + $0x30] sm:$0xff]
      %v1274 = vld [vmem:[%s1268 + $0x38] sm:$0xff]
      %v1275 = vld [vmem:[%s1268 + $0x48] sm:$0xff]
      %v1276 = vld [vmem:[%s1268 + $0x50] sm:$0xff]
      %v1277 = vld [vmem:[%s1268 + $0x60] sm:$0xff]
      %v1278 = vld [vmem:[%s1268 + $0x68] sm:$0xff]
      %v1279 = vld [vmem:[%s1268 + $0x78] sm:$0xff]
      %v1280 = vld [vmem:[%s1268 + $0x80] sm:$0xff]
      %v1281 = vld [vmem:[%s1268 + $0x90] sm:$0xff]
      %v1282 = vld [vmem:[%s1268 + $0x98] sm:$0xff]
      %v1283 = vld [vmem:[%s1268 + $0xa8] sm:$0xff]
      %v1284 = vld [vmem:[%s1268 + $0xb0] sm:$0xff]
      %v1285 = vld [vmem:[%s1268 + $0xc0] sm:$0xff]
      %v1286 = vld [vmem:[%s1268 + $0xc8] sm:$0xff]
      %v1287 = vld [vmem:[%s1268 + $0xd8] sm:$0xff]
      %v1288 = vld [vmem:[%s1268 + $0xe0] sm:$0xff]
      %v1289 = vld [vmem:[%s1268 + $0xf0] sm:$0xff]
      %v1290 = vld [vmem:[%s1268 + $0xf8] sm:$0xff]
      %v1291 = vld [vmem:[%s1268 + $0x108] sm:$0xff]
      %v1292 = vld [vmem:[%s1268 + $0x110] sm:$0xff]
      %v1293 = vld [vmem:[%s1268 + $0x120] sm:$0xff]
      %v1294 = vld [vmem:[%s1268 + $0x128] sm:$0xff]
      %v1295 = vld [vmem:[%s1268 + $0x138] sm:$0xff]
      %v1296 = vld [vmem:[%s1268 + $0x140] sm:$0xff]
      %v1297 = vld [vmem:[%s1268 + $0x150] sm:$0xff]
      %v1298 = vld [vmem:[%s1268 + $0x158] sm:$0xff]
      %v1299 = vld [vmem:[%s1268 + $0x168] sm:$0xff]
      %v1300 = vld [vmem:[%s1268 + $0x170] sm:$0xff]
      %s1301 = scalar_lea.vmem %s1, 24
      %v1302 = vld [vmem:[%s1301] sm:$0xff]
      %v1304 = vsel %vm238, %v1269, 0
      %v1307 = vsel %vm238, %v1270, 0
      %v1310 = vsel %vm238, %v1271, 0
      %v1313 = vsel %vm238, %v1272, 0
      %v1316 = vsel %vm238, %v1273, 0
      %v1319 = vsel %vm238, %v1274, 0
      %v1322 = vsel %vm238, %v1275, 0
      %v1325 = vsel %vm238, %v1276, 0
      %v1328 = vsel %vm238, %v1277, 0
      %v1331 = vsel %vm238, %v1278, 0
      %v1334 = vsel %vm238, %v1279, 0
      %v1337 = vsel %vm238, %v1280, 0
      %v1340 = vsel %vm238, %v1281, 0
      %v1343 = vsel %vm238, %v1282, 0
      %v1346 = vsel %vm238, %v1283, 0
      %v1349 = vsel %vm238, %v1284, 0
      %v1352 = vsel %vm238, %v1285, 0
      %v1355 = vsel %vm238, %v1286, 0
      %v1358 = vsel %vm238, %v1287, 0
      %v1361 = vsel %vm238, %v1288, 0
      %v1364 = vsel %vm238, %v1289, 0
      %v1367 = vsel %vm238, %v1290, 0
      %v1370 = vsel %vm238, %v1291, 0
      %v1373 = vsel %vm238, %v1292, 0
      %v1376 = vsel %vm238, %v1293, 0
      %v1379 = vsel %vm238, %v1294, 0
      %v1382 = vsel %vm238, %v1295, 0
      %v1385 = vsel %vm238, %v1296, 0
      %v1388 = vsel %vm238, %v1297, 0
      %v1391 = vsel %vm238, %v1298, 0
      %v1394 = vsel %vm238, %v1299, 0
      %v1397 = vsel %vm238, %v1300, 0
      %1399 = vmatprep.subr.mxu0 0.0
      %1400 = vmatpush1.msra.mxu0 %v1302
      %1401 = vmatprep.subr.mxu0 0.0
      %1402 = vmatpush1.msra.mxu0 0.0
      %1403 = vmatprep.subr.mxu0 0.0
      %1404 = vmatpush1.msra.mxu0 0.0
      %1405 = vmatprep.subr.mxu0 0.0
      %1406 = vmatpush1.msra.mxu0 0.0
      %1407 = vmatprep.subr.mxu0 0.0
      %1408 = vmatpush1.msra.mxu0 0.0
      %1409 = vmatprep.subr.mxu0 0.0
      %1410 = vmatpush1.msra.mxu0 0.0
      %1411 = vmatprep.subr.mxu0 0.0
      %1412 = vmatpush1.msra.mxu0 0.0
      %1413 = vmatprep.subr.mxu0 0.0
      %1414 = vmatpush1.msra.mxu0 0.0
      %1415 = vmatprep.subr.mxu0 0.0
      %1416 = vmatpush1.msra.mxu0 0.0
      %1417 = vmatprep.subr.mxu0 0.0
      %1418 = vmatpush1.msra.mxu0 0.0
      %1419 = vmatprep.subr.mxu0 0.0
      %1420 = vmatpush1.msra.mxu0 0.0
      %1421 = vmatprep.subr.mxu0 0.0
      %1422 = vmatpush1.msra.mxu0 0.0
      %1423 = vmatprep.subr.mxu0 0.0
      %1424 = vmatpush1.msra.mxu0 0.0
      %1425 = vmatprep.subr.mxu0 0.0
      %1426 = vmatpush1.msra.mxu0 0.0
      %1427 = vmatprep.subr.mxu0 0.0
      %1428 = vmatpush1.msra.mxu0 0.0
      %1429 = vmatprep.subr.mxu0 0.0
      %1430 = vmatpush1.msra.mxu0 0.0
      %1431 = vmatprep.subr.mxu0 0.0
      %1432 = vmatpush1.msra.mxu0 0.0
      %1433 = vmatprep.subr.mxu0 0.0
      %1434 = vmatpush1.msra.mxu0 0.0
      %1435 = vmatprep.subr.mxu0 0.0
      %1436 = vmatpush1.msra.mxu0 0.0
      %1437 = vmatprep.subr.mxu0 0.0
      %1438 = vmatpush1.msra.mxu0 0.0
      %1439 = vmatprep.subr.mxu0 0.0
      %1440 = vmatpush1.msra.mxu0 0.0
      %1441 = vmatprep.subr.mxu0 0.0
      %1442 = vmatpush1.msra.mxu0 0.0
      %1443 = vmatprep.subr.mxu0 0.0
      %1444 = vmatpush1.msra.mxu0 0.0
      %1445 = vmatprep.subr.mxu0 0.0
      %1446 = vmatpush1.msra.mxu0 0.0
      %1447 = vmatprep.subr.mxu0 0.0
      %1448 = vmatpush1.msra.mxu0 0.0
      %1449 = vmatprep.subr.mxu0 0.0
      %1450 = vmatpush1.msra.mxu0 0.0
      %1451 = vmatprep.subr.mxu0 0.0
      %1452 = vmatpush1.msra.mxu0 0.0
      %1453 = vmatprep.subr.mxu0 0.0
      %1454 = vmatpush1.msra.mxu0 0.0
      %1455 = vmatprep.subr.mxu0 0.0
      %1456 = vmatpush1.msra.mxu0 0.0
      %1457 = vmatprep.subr.mxu0 0.0
      %1458 = vmatpush1.msra.mxu0 0.0
      %1459 = vmatprep.subr.mxu0 0.0
      %1460 = vmatpush1.msra.mxu0 0.0
      %1461 = vmatprep.subr.mxu0 0.0
      %1462 = vmatpush1.msra.mxu0 0.0
      %1463 = vmatprep.mubr.f32.mxu0 0.0
      %1464 = vmatmul.mubr.f32.gmra.mrb[0].mxu0 %v1304
      %v1465 = vpop.f32.mrb[0].mxu0
      %v1466 = vadd.f32 0.0, %v1465
      %v1467 = vpop.f32.mrb[0].mxu0
      %1468 = vmatprep.mubr.f32.mxu0 0.0
      %1469 = vmatmul.mubr.f32.gmra.mrb[0].mxu0 %v1307
      %v1470 = vpop.f32.mrb[0].mxu0
      %v1471 = vadd.f32 0.0, %v1470
      %v1472 = vpop.f32.mrb[0].mxu0
      %1473 = vmatprep.mubr.f32.mxu0 0.0
      %1474 = vmatmul.mubr.f32.gmra.mrb[0].mxu0 %v1310
      %v1475 = vpop.f32.mrb[0].mxu0
      %v1476 = vadd.f32 0.0, %v1475
      %v1477 = vpop.f32.mrb[0].mxu0
      %1478 = vmatprep.mubr.f32.mxu0 0.0
      %1479 = vmatmul.mubr.f32.gmra.mrb[0].mxu0 %v1313
      %v1480 = vpop.f32.mrb[0].mxu0
      %v1481 = vadd.f32 0.0, %v1480
      %v1482 = vpop.f32.mrb[0].mxu0
      %1483 = vmatprep.mubr.f32.mxu0 0.0
      %1484 = vmatmul.mubr.f32.gmra.mrb[0].mxu0 %v1316
      %v1485 = vpop.f32.mrb[0].mxu0
      %v1486 = vadd.f32 0.0, %v1485
      %v1487 = vpop.f32.mrb[0].mxu0
      %1488 = vmatprep.mubr.f32.mxu0 0.0
      %1489 = vmatmul.mubr.f32.gmra.mrb[0].mxu0 %v1319
      %v1490 = vpop.f32.mrb[0].mxu0
      %v1491 = vadd.f32 0.0, %v1490
      %v1492 = vpop.f32.mrb[0].mxu0
      %1493 = vmatprep.mubr.f32.mxu0 0.0
      %1494 = vmatmul.mubr.f32.gmra.mrb[0].mxu0 %v1322
      %v1495 = vpop.f32.mrb[0].mxu0
      %v1496 = vadd.f32 0.0, %v1495
      %v1497 = vpop.f32.mrb[0].mxu0
      %1498 = vmatprep.mubr.f32.mxu0 0.0
      %1499 = vmatmul.mubr.f32.gmra.mrb[0].mxu0 %v1325
      %v1500 = vpop.f32.mrb[0].mxu0
      %v1501 = vadd.f32 0.0, %v1500
      %v1502 = vpop.f32.mrb[0].mxu0
      %1503 = vmatprep.mubr.f32.mxu0 0.0
      %1504 = vmatmul.mubr.f32.gmra.mrb[0].mxu0 %v1328
      %v1505 = vpop.f32.mrb[0].mxu0
      %v1506 = vadd.f32 0.0, %v1505
      %v1507 = vpop.f32.mrb[0].mxu0
      %1508 = vmatprep.mubr.f32.mxu0 0.0
      %1509 = vmatmul.mubr.f32.gmra.mrb[0].mxu0 %v1331
      %v1510 = vpop.f32.mrb[0].mxu0
      %v1511 = vadd.f32 0.0, %v1510
      %v1512 = vpop.f32.mrb[0].mxu0
      %1513 = vmatprep.mubr.f32.mxu0 0.0
      %1514 = vmatmul.mubr.f32.gmra.mrb[0].mxu0 %v1334
      %v1515 = vpop.f32.mrb[0].mxu0
      %v1516 = vadd.f32 0.0, %v1515
      %v1517 = vpop.f32.mrb[0].mxu0
      %1518 = vmatprep.mubr.f32.mxu0 0.0
      %1519 = vmatmul.mubr.f32.gmra.mrb[0].mxu0 %v1337
      %v1520 = vpop.f32.mrb[0].mxu0
      %v1521 = vadd.f32 0.0, %v1520
      %v1522 = vpop.f32.mrb[0].mxu0
      %1523 = vmatprep.mubr.f32.mxu0 0.0
      %1524 = vmatmul.mubr.f32.gmra.mrb[0].mxu0 %v1340
      %v1525 = vpop.f32.mrb[0].mxu0
      %v1526 = vadd.f32 0.0, %v1525
      %v1527 = vpop.f32.mrb[0].mxu0
      %1528 = vmatprep.mubr.f32.mxu0 0.0
      %1529 = vmatmul.mubr.f32.gmra.mrb[0].mxu0 %v1343
      %v1530 = vpop.f32.mrb[0].mxu0
      %v1531 = vadd.f32 0.0, %v1530
      %v1532 = vpop.f32.mrb[0].mxu0
      %1533 = vmatprep.mubr.f32.mxu0 0.0
      %1534 = vmatmul.mubr.f32.gmra.mrb[0].mxu0 %v1346
      %v1535 = vpop.f32.mrb[0].mxu0
      %v1536 = vadd.f32 0.0, %v1535
      %v1537 = vpop.f32.mrb[0].mxu0
      %1538 = vmatprep.mubr.f32.mxu0 0.0
      %1539 = vmatmul.mubr.f32.gmra.mrb[0].mxu0 %v1349
      %v1540 = vpop.f32.mrb[0].mxu0
      %v1541 = vadd.f32 0.0, %v1540
      %v1542 = vpop.f32.mrb[0].mxu0
      %1543 = vmatprep.mubr.f32.mxu0 0.0
      %1544 = vmatmul.mubr.f32.gmra.mrb[0].mxu0 %v1352
      %v1545 = vpop.f32.mrb[0].mxu0
      %v1546 = vadd.f32 0.0, %v1545
      %v1547 = vpop.f32.mrb[0].mxu0
      %1548 = vmatprep.mubr.f32.mxu0 0.0
      %1549 = vmatmul.mubr.f32.gmra.mrb[0].mxu0 %v1355
      %v1550 = vpop.f32.mrb[0].mxu0
      %v1551 = vadd.f32 0.0, %v1550
      %v1552 = vpop.f32.mrb[0].mxu0
      %1553 = vmatprep.mubr.f32.mxu0 0.0
      %1554 = vmatmul.mubr.f32.gmra.mrb[0].mxu0 %v1358
      %v1555 = vpop.f32.mrb[0].mxu0
      %v1556 = vadd.f32 0.0, %v1555
      %v1557 = vpop.f32.mrb[0].mxu0
      %1558 = vmatprep.mubr.f32.mxu0 0.0
      %1559 = vmatmul.mubr.f32.gmra.mrb[0].mxu0 %v1361
      %v1560 = vpop.f32.mrb[0].mxu0
      %v1561 = vadd.f32 0.0, %v1560
      %v1562 = vpop.f32.mrb[0].mxu0
      %1563 = vmatprep.mubr.f32.mxu0 0.0
      %1564 = vmatmul.mubr.f32.gmra.mrb[0].mxu0 %v1364
      %v1565 = vpop.f32.mrb[0].mxu0
      %v1566 = vadd.f32 0.0, %v1565
      %v1567 = vpop.f32.mrb[0].mxu0
      %1568 = vmatprep.mubr.f32.mxu0 0.0
      %1569 = vmatmul.mubr.f32.gmra.mrb[0].mxu0 %v1367
      %v1570 = vpop.f32.mrb[0].mxu0
      %v1571 = vadd.f32 0.0, %v1570
      %v1572 = vpop.f32.mrb[0].mxu0
      %1573 = vmatprep.mubr.f32.mxu0 0.0
      %1574 = vmatmul.mubr.f32.gmra.mrb[0].mxu0 %v1370
      %v1575 = vpop.f32.mrb[0].mxu0
      %v1576 = vadd.f32 0.0, %v1575
      %v1577 = vpop.f32.mrb[0].mxu0
      %1578 = vmatprep.mubr.f32.mxu0 0.0
      %1579 = vmatmul.mubr.f32.gmra.mrb[0].mxu0 %v1373
      %v1580 = vpop.f32.mrb[0].mxu0
      %v1581 = vadd.f32 0.0, %v1580
      %v1582 = vpop.f32.mrb[0].mxu0
      %1583 = vmatprep.mubr.f32.mxu0 0.0
      %1584 = vmatmul.mubr.f32.gmra.mrb[0].mxu0 %v1376
      %v1585 = vpop.f32.mrb[0].mxu0
      %v1586 = vadd.f32 0.0, %v1585
      %v1587 = vpop.f32.mrb[0].mxu0
      %1588 = vmatprep.mubr.f32.mxu0 0.0
      %1589 = vmatmul.mubr.f32.gmra.mrb[0].mxu0 %v1379
      %v1590 = vpop.f32.mrb[0].mxu0
      %v1591 = vadd.f32 0.0, %v1590
      %v1592 = vpop.f32.mrb[0].mxu0
      %1593 = vmatprep.mubr.f32.mxu0 0.0
      %1594 = vmatmul.mubr.f32.gmra.mrb[0].mxu0 %v1382
      %v1595 = vpop.f32.mrb[0].mxu0
      %v1596 = vadd.f32 0.0, %v1595
      %v1597 = vpop.f32.mrb[0].mxu0
      %1598 = vmatprep.mubr.f32.mxu0 0.0
      %1599 = vmatmul.mubr.f32.gmra.mrb[0].mxu0 %v1385
      %v1600 = vpop.f32.mrb[0].mxu0
      %v1601 = vadd.f32 0.0, %v1600
      %v1602 = vpop.f32.mrb[0].mxu0
      %1603 = vmatprep.mubr.f32.mxu0 0.0
      %1604 = vmatmul.mubr.f32.gmra.mrb[0].mxu0 %v1388
      %v1605 = vpop.f32.mrb[0].mxu0
      %v1606 = vadd.f32 0.0, %v1605
      %v1607 = vpop.f32.mrb[0].mxu0
      %1608 = vmatprep.mubr.f32.mxu0 0.0
      %1609 = vmatmul.mubr.f32.gmra.mrb[0].mxu0 %v1391
      %v1610 = vpop.f32.mrb[0].mxu0
      %v1611 = vadd.f32 0.0, %v1610
      %v1612 = vpop.f32.mrb[0].mxu0
      %1613 = vmatprep.mubr.f32.mxu0 0.0
      %1614 = vmatmul.mubr.f32.gmra.mrb[0].mxu0 %v1394
      %v1615 = vpop.f32.mrb[0].mxu0
      %v1616 = vadd.f32 0.0, %v1615
      %v1617 = vpop.f32.mrb[0].mxu0
      %1618 = vmatprep.mubr.f32.mxu0 0.0
      %1619 = vmatmul.mubr.f32.gmra.mrb[0].mxu0 %v1397
      %v1620 = vpop.f32.mrb[0].mxu0
      %v1621 = vadd.f32 0.0, %v1620
      %v1622 = vpop.f32.mrb[0].mxu0
      %1623 = vdwg.mxu0
      %v1624 = vadd.f32 %v1236, %v1466
      %v1625 = vadd.f32 %v1237, %v1471
      %v1626 = vadd.f32 %v1238, %v1476
      %v1627 = vadd.f32 %v1239, %v1481
      %v1628 = vadd.f32 %v1240, %v1486
      %v1629 = vadd.f32 %v1241, %v1491
      %v1630 = vadd.f32 %v1242, %v1496
      %v1631 = vadd.f32 %v1243, %v1501
      %v1632 = vadd.f32 %v1244, %v1506
      %v1633 = vadd.f32 %v1245, %v1511
      %v1634 = vadd.f32 %v1246, %v1516
      %v1635 = vadd.f32 %v1247, %v1521
      %v1636 = vadd.f32 %v1248, %v1526
      %v1637 = vadd.f32 %v1249, %v1531
      %v1638 = vadd.f32 %v1250, %v1536
      %v1639 = vadd.f32 %v1251, %v1541
      %v1640 = vadd.f32 %v1252, %v1546
      %v1641 = vadd.f32 %v1253, %v1551
      %v1642 = vadd.f32 %v1254, %v1556
      %v1643 = vadd.f32 %v1255, %v1561
      %v1644 = vadd.f32 %v1256, %v1566
      %v1645 = vadd.f32 %v1257, %v1571
      %v1646 = vadd.f32 %v1258, %v1576
      %v1647 = vadd.f32 %v1259, %v1581
      %v1648 = vadd.f32 %v1260, %v1586
      %v1649 = vadd.f32 %v1261, %v1591
      %v1650 = vadd.f32 %v1262, %v1596
      %v1651 = vadd.f32 %v1263, %v1601
      %v1652 = vadd.f32 %v1264, %v1606
      %v1653 = vadd.f32 %v1265, %v1611
      %v1654 = vadd.f32 %v1266, %v1616
      %v1655 = vadd.f32 %v1267, %v1621
      %v1656 = vld [vmem:[%s1268 + $0x1] sm:$0xff]
      %v1657 = vld [vmem:[%s1268 + $0x9] sm:$0xff]
      %v1658 = vld [vmem:[%s1268 + $0x19] sm:$0xff]
      %v1659 = vld [vmem:[%s1268 + $0x21] sm:$0xff]
      %v1660 = vld [vmem:[%s1268 + $0x31] sm:$0xff]
      %v1661 = vld [vmem:[%s1268 + $0x39] sm:$0xff]
      %v1662 = vld [vmem:[%s1268 + $0x49] sm:$0xff]
      %v1663 = vld [vmem:[%s1268 + $0x51] sm:$0xff]
      %v1664 = vld [vmem:[%s1268 + $0x61] sm:$0xff]
      %v1665 = vld [vmem:[%s1268 + $0x69] sm:$0xff]
      %v1666 = vld [vmem:[%s1268 + $0x79] sm:$0xff]
      %v1667 = vld [vmem:[%s1268 + $0x81] sm:$0xff]
      %v1668 = vld [vmem:[%s1268 + $0x91] sm:$0xff]
      %v1669 = vld [vmem:[%s1268 + $0x99] sm:$0xff]
      %v1670 = vld [vmem:[%s1268 + $0xa9] sm:$0xff]
      %v1671 = vld [vmem:[%s1268 + $0xb1] sm:$0xff]
      %v1672 = vld [vmem:[%s1268 + $0xc1] sm:$0xff]
      %v1673 = vld [vmem:[%s1268 + $0xc9] sm:$0xff]
      %v1674 = vld [vmem:[%s1268 + $0xd9] sm:$0xff]
      %v1675 = vld [vmem:[%s1268 + $0xe1] sm:$0xff]
      %v1676 = vld [vmem:[%s1268 + $0xf1] sm:$0xff]
      %v1677 = vld [vmem:[%s1268 + $0xf9] sm:$0xff]
      %v1678 = vld [vmem:[%s1268 + $0x109] sm:$0xff]
      %v1679 = vld [vmem:[%s1268 + $0x111] sm:$0xff]
      %v1680 = vld [vmem:[%s1268 + $0x121] sm:$0xff]
      %v1681 = vld [vmem:[%s1268 + $0x129] sm:$0xff]
      %v1682 = vld [vmem:[%s1268 + $0x139] sm:$0xff]
      %v1683 = vld [vmem:[%s1268 + $0x141] sm:$0xff]
      %v1684 = vld [vmem:[%s1268 + $0x151] sm:$0xff]
      %v1685 = vld [vmem:[%s1268 + $0x159] sm:$0xff]
      %v1686 = vld [vmem:[%s1268 + $0x169] sm:$0xff]
      %v1687 = vld [vmem:[%s1268 + $0x171] sm:$0xff]
      %s1688 = scalar_lea.vmem %s1, 32
      %v1689 = vld [vmem:[%s1688] sm:$0xff]
      %v1691 = vsel %vm238, %v1656, 0
      %v1694 = vsel %vm238, %v1657, 0
      %v1697 = vsel %vm238, %v1658, 0
      %v1700 = vsel %vm238, %v1659, 0
      %v1703 = vsel %vm238, %v1660, 0
      %v1706 = vsel %vm238, %v1661, 0
      %v1709 = vsel %vm238, %v1662, 0
      %v1712 = vsel %vm238, %v1663, 0
      %v1715 = vsel %vm238, %v1664, 0
      %v1718 = vsel %vm238, %v1665, 0
      %v1721 = vsel %vm238, %v1666, 0
      %v1724 = vsel %vm238, %v1667, 0
      %v1727 = vsel %vm238, %v1668, 0
      %v1730 = vsel %vm238, %v1669, 0
      %v1733 = vsel %vm238, %v1670, 0
      %v1736 = vsel %vm238, %v1671, 0
      %v1739 = vsel %vm238, %v1672, 0
      %v1742 = vsel %vm238, %v1673, 0
      %v1745 = vsel %vm238, %v1674, 0
      %v1748 = vsel %vm238, %v1675, 0
      %v1751 = vsel %vm238, %v1676, 0
      %v1754 = vsel %vm238, %v1677, 0
      %v1757 = vsel %vm238, %v1678, 0
      %v1760 = vsel %vm238, %v1679, 0
      %v1763 = vsel %vm238, %v1680, 0
      %v1766 = vsel %vm238, %v1681, 0
      %v1769 = vsel %vm238, %v1682, 0
      %v1772 = vsel %vm238, %v1683, 0
      %v1775 = vsel %vm238, %v1684, 0
      %v1778 = vsel %vm238, %v1685, 0
      %v1781 = vsel %vm238, %v1686, 0
      %v1784 = vsel %vm238, %v1687, 0
      %1786 = vmatprep.subr.mxu0 0.0
      %1787 = vmatpush1.msra.mxu0 %v1689
      %1788 = vmatprep.subr.mxu0 0.0
      %1789 = vmatpush1.msra.mxu0 0.0
      %1790 = vmatprep.subr.mxu0 0.0
      %1791 = vmatpush1.msra.mxu0 0.0
      %1792 = vmatprep.subr.mxu0 0.0
      %1793 = vmatpush1.msra.mxu0 0.0
      %1794 = vmatprep.subr.mxu0 0.0
      %1795 = vmatpush1.msra.mxu0 0.0
      %1796 = vmatprep.subr.mxu0 0.0
      %1797 = vmatpush1.msra.mxu0 0.0
      %1798 = vmatprep.subr.mxu0 0.0
      %1799 = vmatpush1.msra.mxu0 0.0
      %1800 = vmatprep.subr.mxu0 0.0
      %1801 = vmatpush1.msra.mxu0 0.0
      %1802 = vmatprep.subr.mxu0 0.0
      %1803 = vmatpush1.msra.mxu0 0.0
      %1804 = vmatprep.subr.mxu0 0.0
      %1805 = vmatpush1.msra.mxu0 0.0
      %1806 = vmatprep.subr.mxu0 0.0
      %1807 = vmatpush1.msra.mxu0 0.0
      %1808 = vmatprep.subr.mxu0 0.0
      %1809 = vmatpush1.msra.mxu0 0.0
      %1810 = vmatprep.subr.mxu0 0.0
      %1811 = vmatpush1.msra.mxu0 0.0
      %1812 = vmatprep.subr.mxu0 0.0
      %1813 = vmatpush1.msra.mxu0 0.0
      %1814 = vmatprep.subr.mxu0 0.0
      %1815 = vmatpush1.msra.mxu0 0.0
      %1816 = vmatprep.subr.mxu0 0.0
      %1817 = vmatpush1.msra.mxu0 0.0
      %1818 = vmatprep.subr.mxu0 0.0
      %1819 = vmatpush1.msra.mxu0 0.0
      %1820 = vmatprep.subr.mxu0 0.0
      %1821 = vmatpush1.msra.mxu0 0.0
      %1822 = vmatprep.subr.mxu0 0.0
      %1823 = vmatpush1.msra.mxu0 0.0
      %1824 = vmatprep.subr.mxu0 0.0
      %1825 = vmatpush1.msra.mxu0 0.0
      %1826 = vmatprep.subr.mxu0 0.0
      %1827 = vmatpush1.msra.mxu0 0.0
      %1828 = vmatprep.subr.mxu0 0.0
      %1829 = vmatpush1.msra.mxu0 0.0
      %1830 = vmatprep.subr.mxu0 0.0
      %1831 = vmatpush1.msra.mxu0 0.0
      %1832 = vmatprep.subr.mxu0 0.0
      %1833 = vmatpush1.msra.mxu0 0.0
      %1834 = vmatprep.subr.mxu0 0.0
      %1835 = vmatpush1.msra.mxu0 0.0
      %1836 = vmatprep.subr.mxu0 0.0
      %1837 = vmatpush1.msra.mxu0 0.0
      %1838 = vmatprep.subr.mxu0 0.0
      %1839 = vmatpush1.msra.mxu0 0.0
      %1840 = vmatprep.subr.mxu0 0.0
      %1841 = vmatpush1.msra.mxu0 0.0
      %1842 = vmatprep.subr.mxu0 0.0
      %1843 = vmatpush1.msra.mxu0 0.0
      %1844 = vmatprep.subr.mxu0 0.0
      %1845 = vmatpush1.msra.mxu0 0.0
      %1846 = vmatprep.subr.mxu0 0.0
      %1847 = vmatpush1.msra.mxu0 0.0
      %1848 = vmatprep.subr.mxu0 0.0
      %1849 = vmatpush1.msra.mxu0 0.0
      %1850 = vmatprep.mubr.f32.mxu0 0.0
      %1851 = vmatmul.mubr.f32.gmra.mrb[0].mxu0 %v1691
      %v1852 = vpop.f32.mrb[0].mxu0
      %v1853 = vadd.f32 0.0, %v1852
      %v1854 = vpop.f32.mrb[0].mxu0
      %1855 = vmatprep.mubr.f32.mxu0 0.0
      %1856 = vmatmul.mubr.f32.gmra.mrb[0].mxu0 %v1694
      %v1857 = vpop.f32.mrb[0].mxu0
      %v1858 = vadd.f32 0.0, %v1857
      %v1859 = vpop.f32.mrb[0].mxu0
      %1860 = vmatprep.mubr.f32.mxu0 0.0
      %1861 = vmatmul.mubr.f32.gmra.mrb[0].mxu0 %v1697
      %v1862 = vpop.f32.mrb[0].mxu0
      %v1863 = vadd.f32 0.0, %v1862
      %v1864 = vpop.f32.mrb[0].mxu0
      %1865 = vmatprep.mubr.f32.mxu0 0.0
      %1866 = vmatmul.mubr.f32.gmra.mrb[0].mxu0 %v1700
      %v1867 = vpop.f32.mrb[0].mxu0
      %v1868 = vadd.f32 0.0, %v1867
      %v1869 = vpop.f32.mrb[0].mxu0
      %1870 = vmatprep.mubr.f32.mxu0 0.0
      %1871 = vmatmul.mubr.f32.gmra.mrb[0].mxu0 %v1703
      %v1872 = vpop.f32.mrb[0].mxu0
      %v1873 = vadd.f32 0.0, %v1872
      %v1874 = vpop.f32.mrb[0].mxu0
      %1875 = vmatprep.mubr.f32.mxu0 0.0
      %1876 = vmatmul.mubr.f32.gmra.mrb[0].mxu0 %v1706
      %v1877 = vpop.f32.mrb[0].mxu0
      %v1878 = vadd.f32 0.0, %v1877
      %v1879 = vpop.f32.mrb[0].mxu0
      %1880 = vmatprep.mubr.f32.mxu0 0.0
      %1881 = vmatmul.mubr.f32.gmra.mrb[0].mxu0 %v1709
      %v1882 = vpop.f32.mrb[0].mxu0
      %v1883 = vadd.f32 0.0, %v1882
      %v1884 = vpop.f32.mrb[0].mxu0
      %1885 = vmatprep.mubr.f32.mxu0 0.0
      %1886 = vmatmul.mubr.f32.gmra.mrb[0].mxu0 %v1712
      %v1887 = vpop.f32.mrb[0].mxu0
      %v1888 = vadd.f32 0.0, %v1887
      %v1889 = vpop.f32.mrb[0].mxu0
      %1890 = vmatprep.mubr.f32.mxu0 0.0
      %1891 = vmatmul.mubr.f32.gmra.mrb[0].mxu0 %v1715
      %v1892 = vpop.f32.mrb[0].mxu0
      %v1893 = vadd.f32 0.0, %v1892
      %v1894 = vpop.f32.mrb[0].mxu0
      %1895 = vmatprep.mubr.f32.mxu0 0.0
      %1896 = vmatmul.mubr.f32.gmra.mrb[0].mxu0 %v1718
      %v1897 = vpop.f32.mrb[0].mxu0
      %v1898 = vadd.f32 0.0, %v1897
      %v1899 = vpop.f32.mrb[0].mxu0
      %1900 = vmatprep.mubr.f32.mxu0 0.0
      %1901 = vmatmul.mubr.f32.gmra.mrb[0].mxu0 %v1721
      %v1902 = vpop.f32.mrb[0].mxu0
      %v1903 = vadd.f32 0.0, %v1902
      %v1904 = vpop.f32.mrb[0].mxu0
      %1905 = vmatprep.mubr.f32.mxu0 0.0
      %1906 = vmatmul.mubr.f32.gmra.mrb[0].mxu0 %v1724
      %v1907 = vpop.f32.mrb[0].mxu0
      %v1908 = vadd.f32 0.0, %v1907
      %v1909 = vpop.f32.mrb[0].mxu0
      %1910 = vmatprep.mubr.f32.mxu0 0.0
      %1911 = vmatmul.mubr.f32.gmra.mrb[0].mxu0 %v1727
      %v1912 = vpop.f32.mrb[0].mxu0
      %v1913 = vadd.f32 0.0, %v1912
      %v1914 = vpop.f32.mrb[0].mxu0
      %1915 = vmatprep.mubr.f32.mxu0 0.0
      %1916 = vmatmul.mubr.f32.gmra.mrb[0].mxu0 %v1730
      %v1917 = vpop.f32.mrb[0].mxu0
      %v1918 = vadd.f32 0.0, %v1917
      %v1919 = vpop.f32.mrb[0].mxu0
      %1920 = vmatprep.mubr.f32.mxu0 0.0
      %1921 = vmatmul.mubr.f32.gmra.mrb[0].mxu0 %v1733
      %v1922 = vpop.f32.mrb[0].mxu0
      %v1923 = vadd.f32 0.0, %v1922
      %v1924 = vpop.f32.mrb[0].mxu0
      %1925 = vmatprep.mubr.f32.mxu0 0.0
      %1926 = vmatmul.mubr.f32.gmra.mrb[0].mxu0 %v1736
      %v1927 = vpop.f32.mrb[0].mxu0
      %v1928 = vadd.f32 0.0, %v1927
      %v1929 = vpop.f32.mrb[0].mxu0
      %1930 = vmatprep.mubr.f32.mxu0 0.0
      %1931 = vmatmul.mubr.f32.gmra.mrb[0].mxu0 %v1739
      %v1932 = vpop.f32.mrb[0].mxu0
      %v1933 = vadd.f32 0.0, %v1932
      %v1934 = vpop.f32.mrb[0].mxu0
      %1935 = vmatprep.mubr.f32.mxu0 0.0
      %1936 = vmatmul.mubr.f32.gmra.mrb[0].mxu0 %v1742
      %v1937 = vpop.f32.mrb[0].mxu0
      %v1938 = vadd.f32 0.0, %v1937
      %v1939 = vpop.f32.mrb[0].mxu0
      %1940 = vmatprep.mubr.f32.mxu0 0.0
      %1941 = vmatmul.mubr.f32.gmra.mrb[0].mxu0 %v1745
      %v1942 = vpop.f32.mrb[0].mxu0
      %v1943 = vadd.f32 0.0, %v1942
      %v1944 = vpop.f32.mrb[0].mxu0
      %1945 = vmatprep.mubr.f32.mxu0 0.0
      %1946 = vmatmul.mubr.f32.gmra.mrb[0].mxu0 %v1748
      %v1947 = vpop.f32.mrb[0].mxu0
      %v1948 = vadd.f32 0.0, %v1947
      %v1949 = vpop.f32.mrb[0].mxu0
      %1950 = vmatprep.mubr.f32.mxu0 0.0
      %1951 = vmatmul.mubr.f32.gmra.mrb[0].mxu0 %v1751
      %v1952 = vpop.f32.mrb[0].mxu0
      %v1953 = vadd.f32 0.0, %v1952
      %v1954 = vpop.f32.mrb[0].mxu0
      %1955 = vmatprep.mubr.f32.mxu0 0.0
      %1956 = vmatmul.mubr.f32.gmra.mrb[0].mxu0 %v1754
      %v1957 = vpop.f32.mrb[0].mxu0
      %v1958 = vadd.f32 0.0, %v1957
      %v1959 = vpop.f32.mrb[0].mxu0
      %1960 = vmatprep.mubr.f32.mxu0 0.0
      %1961 = vmatmul.mubr.f32.gmra.mrb[0].mxu0 %v1757
      %v1962 = vpop.f32.mrb[0].mxu0
      %v1963 = vadd.f32 0.0, %v1962
      %v1964 = vpop.f32.mrb[0].mxu0
      %1965 = vmatprep.mubr.f32.mxu0 0.0
      %1966 = vmatmul.mubr.f32.gmra.mrb[0].mxu0 %v1760
      %v1967 = vpop.f32.mrb[0].mxu0
      %v1968 = vadd.f32 0.0, %v1967
      %v1969 = vpop.f32.mrb[0].mxu0
      %1970 = vmatprep.mubr.f32.mxu0 0.0
      %1971 = vmatmul.mubr.f32.gmra.mrb[0].mxu0 %v1763
      %v1972 = vpop.f32.mrb[0].mxu0
      %v1973 = vadd.f32 0.0, %v1972
      %v1974 = vpop.f32.mrb[0].mxu0
      %1975 = vmatprep.mubr.f32.mxu0 0.0
      %1976 = vmatmul.mubr.f32.gmra.mrb[0].mxu0 %v1766
      %v1977 = vpop.f32.mrb[0].mxu0
      %v1978 = vadd.f32 0.0, %v1977
      %v1979 = vpop.f32.mrb[0].mxu0
      %1980 = vmatprep.mubr.f32.mxu0 0.0
      %1981 = vmatmul.mubr.f32.gmra.mrb[0].mxu0 %v1769
      %v1982 = vpop.f32.mrb[0].mxu0
      %v1983 = vadd.f32 0.0, %v1982
      %v1984 = vpop.f32.mrb[0].mxu0
      %1985 = vmatprep.mubr.f32.mxu0 0.0
      %1986 = vmatmul.mubr.f32.gmra.mrb[0].mxu0 %v1772
      %v1987 = vpop.f32.mrb[0].mxu0
      %v1988 = vadd.f32 0.0, %v1987
      %v1989 = vpop.f32.mrb[0].mxu0
      %1990 = vmatprep.mubr.f32.mxu0 0.0
      %1991 = vmatmul.mubr.f32.gmra.mrb[0].mxu0 %v1775
      %v1992 = vpop.f32.mrb[0].mxu0
      %v1993 = vadd.f32 0.0, %v1992
      %v1994 = vpop.f32.mrb[0].mxu0
      %1995 = vmatprep.mubr.f32.mxu0 0.0
      %1996 = vmatmul.mubr.f32.gmra.mrb[0].mxu0 %v1778
      %v1997 = vpop.f32.mrb[0].mxu0
      %v1998 = vadd.f32 0.0, %v1997
      %v1999 = vpop.f32.mrb[0].mxu0
      %2000 = vmatprep.mubr.f32.mxu0 0.0
      %2001 = vmatmul.mubr.f32.gmra.mrb[0].mxu0 %v1781
      %v2002 = vpop.f32.mrb[0].mxu0
      %v2003 = vadd.f32 0.0, %v2002
      %v2004 = vpop.f32.mrb[0].mxu0
      %2005 = vmatprep.mubr.f32.mxu0 0.0
      %2006 = vmatmul.mubr.f32.gmra.mrb[0].mxu0 %v1784
      %v2007 = vpop.f32.mrb[0].mxu0
      %v2008 = vadd.f32 0.0, %v2007
      %v2009 = vpop.f32.mrb[0].mxu0
      %2010 = vdwg.mxu0
      %v2011 = vadd.f32 %v1624, %v1853
      %v2012 = vadd.f32 %v1625, %v1858
      %v2013 = vadd.f32 %v1626, %v1863
      %v2014 = vadd.f32 %v1627, %v1868
      %v2015 = vadd.f32 %v1628, %v1873
      %v2016 = vadd.f32 %v1629, %v1878
      %v2017 = vadd.f32 %v1630, %v1883
      %v2018 = vadd.f32 %v1631, %v1888
      %v2019 = vadd.f32 %v1632, %v1893
      %v2020 = vadd.f32 %v1633, %v1898
      %v2021 = vadd.f32 %v1634, %v1903
      %v2022 = vadd.f32 %v1635, %v1908
      %v2023 = vadd.f32 %v1636, %v1913
      %v2024 = vadd.f32 %v1637, %v1918
      %v2025 = vadd.f32 %v1638, %v1923
      %v2026 = vadd.f32 %v1639, %v1928
      %v2027 = vadd.f32 %v1640, %v1933
      %v2028 = vadd.f32 %v1641, %v1938
      %v2029 = vadd.f32 %v1642, %v1943
      %v2030 = vadd.f32 %v1643, %v1948
      %v2031 = vadd.f32 %v1644, %v1953
      %v2032 = vadd.f32 %v1645, %v1958
      %v2033 = vadd.f32 %v1646, %v1963
      %v2034 = vadd.f32 %v1647, %v1968
      %v2035 = vadd.f32 %v1648, %v1973
      %v2036 = vadd.f32 %v1649, %v1978
      %v2037 = vadd.f32 %v1650, %v1983
      %v2038 = vadd.f32 %v1651, %v1988
      %v2039 = vadd.f32 %v1652, %v1993
      %v2040 = vadd.f32 %v1653, %v1998
      %v2041 = vadd.f32 %v1654, %v2003
      %v2042 = vadd.f32 %v1655, %v2008
      %v2043 = vld [vmem:[%s1268 + $0x2] sm:$0xff]
      %v2044 = vld [vmem:[%s1268 + $0xa] sm:$0xff]
      %v2045 = vld [vmem:[%s1268 + $0x1a] sm:$0xff]
      %v2046 = vld [vmem:[%s1268 + $0x22] sm:$0xff]
      %v2047 = vld [vmem:[%s1268 + $0x32] sm:$0xff]
      %v2048 = vld [vmem:[%s1268 + $0x3a] sm:$0xff]
      %v2049 = vld [vmem:[%s1268 + $0x4a] sm:$0xff]
      %v2050 = vld [vmem:[%s1268 + $0x52] sm:$0xff]
      %v2051 = vld [vmem:[%s1268 + $0x62] sm:$0xff]
      %v2052 = vld [vmem:[%s1268 + $0x6a] sm:$0xff]
      %v2053 = vld [vmem:[%s1268 + $0x7a] sm:$0xff]
      %v2054 = vld [vmem:[%s1268 + $0x82] sm:$0xff]
      %v2055 = vld [vmem:[%s1268 + $0x92] sm:$0xff]
      %v2056 = vld [vmem:[%s1268 + $0x9a] sm:$0xff]
      %v2057 = vld [vmem:[%s1268 + $0xaa] sm:$0xff]
      %v2058 = vld [vmem:[%s1268 + $0xb2] sm:$0xff]
      %v2059 = vld [vmem:[%s1268 + $0xc2] sm:$0xff]
      %v2060 = vld [vmem:[%s1268 + $0xca] sm:$0xff]
      %v2061 = vld [vmem:[%s1268 + $0xda] sm:$0xff]
      %v2062 = vld [vmem:[%s1268 + $0xe2] sm:$0xff]
      %v2063 = vld [vmem:[%s1268 + $0xf2] sm:$0xff]
      %v2064 = vld [vmem:[%s1268 + $0xfa] sm:$0xff]
      %v2065 = vld [vmem:[%s1268 + $0x10a] sm:$0xff]
      %v2066 = vld [vmem:[%s1268 + $0x112] sm:$0xff]
      %v2067 = vld [vmem:[%s1268 + $0x122] sm:$0xff]
      %v2068 = vld [vmem:[%s1268 + $0x12a] sm:$0xff]
      %v2069 = vld [vmem:[%s1268 + $0x13a] sm:$0xff]
      %v2070 = vld [vmem:[%s1268 + $0x142] sm:$0xff]
      %v2071 = vld [vmem:[%s1268 + $0x152] sm:$0xff]
      %v2072 = vld [vmem:[%s1268 + $0x15a] sm:$0xff]
      %v2073 = vld [vmem:[%s1268 + $0x16a] sm:$0xff]
      %v2074 = vld [vmem:[%s1268 + $0x172] sm:$0xff]
      %s2075 = scalar_lea.vmem %s1, 40
      %v2076 = vld [vmem:[%s2075] sm:$0xff]
      %v2078 = vsel %vm238, %v2043, 0
      %v2081 = vsel %vm238, %v2044, 0
      %v2084 = vsel %vm238, %v2045, 0
      %v2087 = vsel %vm238, %v2046, 0
      %v2090 = vsel %vm238, %v2047, 0
      %v2093 = vsel %vm238, %v2048, 0
      %v2096 = vsel %vm238, %v2049, 0
      %v2099 = vsel %vm238, %v2050, 0
      %v2102 = vsel %vm238, %v2051, 0
      %v2105 = vsel %vm238, %v2052, 0
      %v2108 = vsel %vm238, %v2053, 0
      %v2111 = vsel %vm238, %v2054, 0
      %v2114 = vsel %vm238, %v2055, 0
      %v2117 = vsel %vm238, %v2056, 0
      %v2120 = vsel %vm238, %v2057, 0
      %v2123 = vsel %vm238, %v2058, 0
      %v2126 = vsel %vm238, %v2059, 0
      %v2129 = vsel %vm238, %v2060, 0
      %v2132 = vsel %vm238, %v2061, 0
      %v2135 = vsel %vm238, %v2062, 0
      %v2138 = vsel %vm238, %v2063, 0
      %v2141 = vsel %vm238, %v2064, 0
      %v2144 = vsel %vm238, %v2065, 0
      %v2147 = vsel %vm238, %v2066, 0
      %v2150 = vsel %vm238, %v2067, 0
      %v2153 = vsel %vm238, %v2068, 0
      %v2156 = vsel %vm238, %v2069, 0
      %v2159 = vsel %vm238, %v2070, 0
      %v2162 = vsel %vm238, %v2071, 0
      %v2165 = vsel %vm238, %v2072, 0
      %v2168 = vsel %vm238, %v2073, 0
      %v2171 = vsel %vm238, %v2074, 0
      %2173 = vmatprep.subr.mxu0 0.0
      %2174 = vmatpush1.msra.mxu0 %v2076
      %2175 = vmatprep.subr.mxu0 0.0
      %2176 = vmatpush1.msra.mxu0 0.0
      %2177 = vmatprep.subr.mxu0 0.0
      %2178 = vmatpush1.msra.mxu0 0.0
      %2179 = vmatprep.subr.mxu0 0.0
      %2180 = vmatpush1.msra.mxu0 0.0
      %2181 = vmatprep.subr.mxu0 0.0
      %2182 = vmatpush1.msra.mxu0 0.0
      %2183 = vmatprep.subr.mxu0 0.0
      %2184 = vmatpush1.msra.mxu0 0.0
      %2185 = vmatprep.subr.mxu0 0.0
      %2186 = vmatpush1.msra.mxu0 0.0
      %2187 = vmatprep.subr.mxu0 0.0
      %2188 = vmatpush1.msra.mxu0 0.0
      %2189 = vmatprep.subr.mxu0 0.0
      %2190 = vmatpush1.msra.mxu0 0.0
      %2191 = vmatprep.subr.mxu0 0.0
      %2192 = vmatpush1.msra.mxu0 0.0
      %2193 = vmatprep.subr.mxu0 0.0
      %2194 = vmatpush1.msra.mxu0 0.0
      %2195 = vmatprep.subr.mxu0 0.0
      %2196 = vmatpush1.msra.mxu0 0.0
      %2197 = vmatprep.subr.mxu0 0.0
      %2198 = vmatpush1.msra.mxu0 0.0
      %2199 = vmatprep.subr.mxu0 0.0
      %2200 = vmatpush1.msra.mxu0 0.0
      %2201 = vmatprep.subr.mxu0 0.0
      %2202 = vmatpush1.msra.mxu0 0.0
      %2203 = vmatprep.subr.mxu0 0.0
      %2204 = vmatpush1.msra.mxu0 0.0
      %2205 = vmatprep.subr.mxu0 0.0
      %2206 = vmatpush1.msra.mxu0 0.0
      %2207 = vmatprep.subr.mxu0 0.0
      %2208 = vmatpush1.msra.mxu0 0.0
      %2209 = vmatprep.subr.mxu0 0.0
      %2210 = vmatpush1.msra.mxu0 0.0
      %2211 = vmatprep.subr.mxu0 0.0
      %2212 = vmatpush1.msra.mxu0 0.0
      %2213 = vmatprep.subr.mxu0 0.0
      %2214 = vmatpush1.msra.mxu0 0.0
      %2215 = vmatprep.subr.mxu0 0.0
      %2216 = vmatpush1.msra.mxu0 0.0
      %2217 = vmatprep.subr.mxu0 0.0
      %2218 = vmatpush1.msra.mxu0 0.0
      %2219 = vmatprep.subr.mxu0 0.0
      %2220 = vmatpush1.msra.mxu0 0.0
      %2221 = vmatprep.subr.mxu0 0.0
      %2222 = vmatpush1.msra.mxu0 0.0
      %2223 = vmatprep.subr.mxu0 0.0
      %2224 = vmatpush1.msra.mxu0 0.0
      %2225 = vmatprep.subr.mxu0 0.0
      %2226 = vmatpush1.msra.mxu0 0.0
      %2227 = vmatprep.subr.mxu0 0.0
      %2228 = vmatpush1.msra.mxu0 0.0
      %2229 = vmatprep.subr.mxu0 0.0
      %2230 = vmatpush1.msra.mxu0 0.0
      %2231 = vmatprep.subr.mxu0 0.0
      %2232 = vmatpush1.msra.mxu0 0.0
      %2233 = vmatprep.subr.mxu0 0.0
      %2234 = vmatpush1.msra.mxu0 0.0
      %2235 = vmatprep.subr.mxu0 0.0
      %2236 = vmatpush1.msra.mxu0 0.0
      %2237 = vmatprep.mubr.f32.mxu0 0.0
      %2238 = vmatmul.mubr.f32.gmra.mrb[0].mxu0 %v2078
      %v2239 = vpop.f32.mrb[0].mxu0
      %v2240 = vadd.f32 0.0, %v2239
      %v2241 = vpop.f32.mrb[0].mxu0
      %2242 = vmatprep.mubr.f32.mxu0 0.0
      %2243 = vmatmul.mubr.f32.gmra.mrb[0].mxu0 %v2081
      %v2244 = vpop.f32.mrb[0].mxu0
      %v2245 = vadd.f32 0.0, %v2244
      %v2246 = vpop.f32.mrb[0].mxu0
      %2247 = vmatprep.mubr.f32.mxu0 0.0
      %2248 = vmatmul.mubr.f32.gmra.mrb[0].mxu0 %v2084
      %v2249 = vpop.f32.mrb[0].mxu0
      %v2250 = vadd.f32 0.0, %v2249
      %v2251 = vpop.f32.mrb[0].mxu0
      %2252 = vmatprep.mubr.f32.mxu0 0.0
      %2253 = vmatmul.mubr.f32.gmra.mrb[0].mxu0 %v2087
      %v2254 = vpop.f32.mrb[0].mxu0
      %v2255 = vadd.f32 0.0, %v2254
      %v2256 = vpop.f32.mrb[0].mxu0
      %2257 = vmatprep.mubr.f32.mxu0 0.0
      %2258 = vmatmul.mubr.f32.gmra.mrb[0].mxu0 %v2090
      %v2259 = vpop.f32.mrb[0].mxu0
      %v2260 = vadd.f32 0.0, %v2259
      %v2261 = vpop.f32.mrb[0].mxu0
      %2262 = vmatprep.mubr.f32.mxu0 0.0
      %2263 = vmatmul.mubr.f32.gmra.mrb[0].mxu0 %v2093
      %v2264 = vpop.f32.mrb[0].mxu0
      %v2265 = vadd.f32 0.0, %v2264
      %v2266 = vpop.f32.mrb[0].mxu0
      %2267 = vmatprep.mubr.f32.mxu0 0.0
      %2268 = vmatmul.mubr.f32.gmra.mrb[0].mxu0 %v2096
      %v2269 = vpop.f32.mrb[0].mxu0
      %v2270 = vadd.f32 0.0, %v2269
      %v2271 = vpop.f32.mrb[0].mxu0
      %2272 = vmatprep.mubr.f32.mxu0 0.0
      %2273 = vmatmul.mubr.f32.gmra.mrb[0].mxu0 %v2099
      %v2274 = vpop.f32.mrb[0].mxu0
      %v2275 = vadd.f32 0.0, %v2274
      %v2276 = vpop.f32.mrb[0].mxu0
      %2277 = vmatprep.mubr.f32.mxu0 0.0
      %2278 = vmatmul.mubr.f32.gmra.mrb[0].mxu0 %v2102
      %v2279 = vpop.f32.mrb[0].mxu0
      %v2280 = vadd.f32 0.0, %v2279
      %v2281 = vpop.f32.mrb[0].mxu0
      %2282 = vmatprep.mubr.f32.mxu0 0.0
      %2283 = vmatmul.mubr.f32.gmra.mrb[0].mxu0 %v2105
      %v2284 = vpop.f32.mrb[0].mxu0
      %v2285 = vadd.f32 0.0, %v2284
      %v2286 = vpop.f32.mrb[0].mxu0
      %2287 = vmatprep.mubr.f32.mxu0 0.0
      %2288 = vmatmul.mubr.f32.gmra.mrb[0].mxu0 %v2108
      %v2289 = vpop.f32.mrb[0].mxu0
      %v2290 = vadd.f32 0.0, %v2289
      %v2291 = vpop.f32.mrb[0].mxu0
      %2292 = vmatprep.mubr.f32.mxu0 0.0
      %2293 = vmatmul.mubr.f32.gmra.mrb[0].mxu0 %v2111
      %v2294 = vpop.f32.mrb[0].mxu0
      %v2295 = vadd.f32 0.0, %v2294
      %v2296 = vpop.f32.mrb[0].mxu0
      %2297 = vmatprep.mubr.f32.mxu0 0.0
      %2298 = vmatmul.mubr.f32.gmra.mrb[0].mxu0 %v2114
      %v2299 = vpop.f32.mrb[0].mxu0
      %v2300 = vadd.f32 0.0, %v2299
      %v2301 = vpop.f32.mrb[0].mxu0
      %2302 = vmatprep.mubr.f32.mxu0 0.0
      %2303 = vmatmul.mubr.f32.gmra.mrb[0].mxu0 %v2117
      %v2304 = vpop.f32.mrb[0].mxu0
      %v2305 = vadd.f32 0.0, %v2304
      %v2306 = vpop.f32.mrb[0].mxu0
      %2307 = vmatprep.mubr.f32.mxu0 0.0
      %2308 = vmatmul.mubr.f32.gmra.mrb[0].mxu0 %v2120
      %v2309 = vpop.f32.mrb[0].mxu0
      %v2310 = vadd.f32 0.0, %v2309
      %v2311 = vpop.f32.mrb[0].mxu0
      %2312 = vmatprep.mubr.f32.mxu0 0.0
      %2313 = vmatmul.mubr.f32.gmra.mrb[0].mxu0 %v2123
      %v2314 = vpop.f32.mrb[0].mxu0
      %v2315 = vadd.f32 0.0, %v2314
      %v2316 = vpop.f32.mrb[0].mxu0
      %2317 = vmatprep.mubr.f32.mxu0 0.0
      %2318 = vmatmul.mubr.f32.gmra.mrb[0].mxu0 %v2126
      %v2319 = vpop.f32.mrb[0].mxu0
      %v2320 = vadd.f32 0.0, %v2319
      %v2321 = vpop.f32.mrb[0].mxu0
      %2322 = vmatprep.mubr.f32.mxu0 0.0
      %2323 = vmatmul.mubr.f32.gmra.mrb[0].mxu0 %v2129
      %v2324 = vpop.f32.mrb[0].mxu0
      %v2325 = vadd.f32 0.0, %v2324
      %v2326 = vpop.f32.mrb[0].mxu0
      %2327 = vmatprep.mubr.f32.mxu0 0.0
      %2328 = vmatmul.mubr.f32.gmra.mrb[0].mxu0 %v2132
      %v2329 = vpop.f32.mrb[0].mxu0
      %v2330 = vadd.f32 0.0, %v2329
      %v2331 = vpop.f32.mrb[0].mxu0
      %2332 = vmatprep.mubr.f32.mxu0 0.0
      %2333 = vmatmul.mubr.f32.gmra.mrb[0].mxu0 %v2135
      %v2334 = vpop.f32.mrb[0].mxu0
      %v2335 = vadd.f32 0.0, %v2334
      %v2336 = vpop.f32.mrb[0].mxu0
      %2337 = vmatprep.mubr.f32.mxu0 0.0
      %2338 = vmatmul.mubr.f32.gmra.mrb[0].mxu0 %v2138
      %v2339 = vpop.f32.mrb[0].mxu0
      %v2340 = vadd.f32 0.0, %v2339
      %v2341 = vpop.f32.mrb[0].mxu0
      %2342 = vmatprep.mubr.f32.mxu0 0.0
      %2343 = vmatmul.mubr.f32.gmra.mrb[0].mxu0 %v2141
      %v2344 = vpop.f32.mrb[0].mxu0
      %v2345 = vadd.f32 0.0, %v2344
      %v2346 = vpop.f32.mrb[0].mxu0
      %2347 = vmatprep.mubr.f32.mxu0 0.0
      %2348 = vmatmul.mubr.f32.gmra.mrb[0].mxu0 %v2144
      %v2349 = vpop.f32.mrb[0].mxu0
      %v2350 = vadd.f32 0.0, %v2349
      %v2351 = vpop.f32.mrb[0].mxu0
      %2352 = vmatprep.mubr.f32.mxu0 0.0
      %2353 = vmatmul.mubr.f32.gmra.mrb[0].mxu0 %v2147
      %v2354 = vpop.f32.mrb[0].mxu0
      %v2355 = vadd.f32 0.0, %v2354
      %v2356 = vpop.f32.mrb[0].mxu0
      %2357 = vmatprep.mubr.f32.mxu0 0.0
      %2358 = vmatmul.mubr.f32.gmra.mrb[0].mxu0 %v2150
      %v2359 = vpop.f32.mrb[0].mxu0
      %v2360 = vadd.f32 0.0, %v2359
      %v2361 = vpop.f32.mrb[0].mxu0
      %2362 = vmatprep.mubr.f32.mxu0 0.0
      %2363 = vmatmul.mubr.f32.gmra.mrb[0].mxu0 %v2153
      %v2364 = vpop.f32.mrb[0].mxu0
      %v2365 = vadd.f32 0.0, %v2364
      %v2366 = vpop.f32.mrb[0].mxu0
      %2367 = vmatprep.mubr.f32.mxu0 0.0
      %2368 = vmatmul.mubr.f32.gmra.mrb[0].mxu0 %v2156
      %v2369 = vpop.f32.mrb[0].mxu0
      %v2370 = vadd.f32 0.0, %v2369
      %v2371 = vpop.f32.mrb[0].mxu0
      %2372 = vmatprep.mubr.f32.mxu0 0.0
      %2373 = vmatmul.mubr.f32.gmra.mrb[0].mxu0 %v2159
      %v2374 = vpop.f32.mrb[0].mxu0
      %v2375 = vadd.f32 0.0, %v2374
      %v2376 = vpop.f32.mrb[0].mxu0
      %2377 = vmatprep.mubr.f32.mxu0 0.0
      %2378 = vmatmul.mubr.f32.gmra.mrb[0].mxu0 %v2162
      %v2379 = vpop.f32.mrb[0].mxu0
      %v2380 = vadd.f32 0.0, %v2379
      %v2381 = vpop.f32.mrb[0].mxu0
      %2382 = vmatprep.mubr.f32.mxu0 0.0
      %2383 = vmatmul.mubr.f32.gmra.mrb[0].mxu0 %v2165
      %v2384 = vpop.f32.mrb[0].mxu0
      %v2385 = vadd.f32 0.0, %v2384
      %v2386 = vpop.f32.mrb[0].mxu0
      %2387 = vmatprep.mubr.f32.mxu0 0.0
      %2388 = vmatmul.mubr.f32.gmra.mrb[0].mxu0 %v2168
      %v2389 = vpop.f32.mrb[0].mxu0
      %v2390 = vadd.f32 0.0, %v2389
      %v2391 = vpop.f32.mrb[0].mxu0
      %2392 = vmatprep.mubr.f32.mxu0 0.0
      %2393 = vmatmul.mubr.f32.gmra.mrb[0].mxu0 %v2171
      %v2394 = vpop.f32.mrb[0].mxu0
      %v2395 = vadd.f32 0.0, %v2394
      %v2396 = vpop.f32.mrb[0].mxu0
      %2397 = vdwg.mxu0
      %v2398 = vadd.f32 %v2011, %v2240
      %v2399 = vadd.f32 %v2012, %v2245
      %v2400 = vadd.f32 %v2013, %v2250
      %v2401 = vadd.f32 %v2014, %v2255
      %v2402 = vadd.f32 %v2015, %v2260
      %v2403 = vadd.f32 %v2016, %v2265
      %v2404 = vadd.f32 %v2017, %v2270
      %v2405 = vadd.f32 %v2018, %v2275
      %v2406 = vadd.f32 %v2019, %v2280
      %v2407 = vadd.f32 %v2020, %v2285
      %v2408 = vadd.f32 %v2021, %v2290
      %v2409 = vadd.f32 %v2022, %v2295
      %v2410 = vadd.f32 %v2023, %v2300
      %v2411 = vadd.f32 %v2024, %v2305
      %v2412 = vadd.f32 %v2025, %v2310
      %v2413 = vadd.f32 %v2026, %v2315
      %v2414 = vadd.f32 %v2027, %v2320
      %v2415 = vadd.f32 %v2028, %v2325
      %v2416 = vadd.f32 %v2029, %v2330
      %v2417 = vadd.f32 %v2030, %v2335
      %v2418 = vadd.f32 %v2031, %v2340
      %v2419 = vadd.f32 %v2032, %v2345
      %v2420 = vadd.f32 %v2033, %v2350
      %v2421 = vadd.f32 %v2034, %v2355
      %v2422 = vadd.f32 %v2035, %v2360
      %v2423 = vadd.f32 %v2036, %v2365
      %v2424 = vadd.f32 %v2037, %v2370
      %v2425 = vadd.f32 %v2038, %v2375
      %v2426 = vadd.f32 %v2039, %v2380
      %v2427 = vadd.f32 %v2040, %v2385
      %v2428 = vadd.f32 %v2041, %v2390
      %v2429 = vadd.f32 %v2042, %v2395
      %s2430 = scalar_lea.vmem %s165, 48
      %v2431 = vld [vmem:[%s2430] sm:$0xff]
      %v2432 = vld [vmem:[%s2430 + $0x8] sm:$0xff]
      %v2433 = vld [vmem:[%s2430 + $0x18] sm:$0xff]
      %v2434 = vld [vmem:[%s2430 + $0x20] sm:$0xff]
      %v2435 = vld [vmem:[%s2430 + $0x30] sm:$0xff]
      %v2436 = vld [vmem:[%s2430 + $0x38] sm:$0xff]
      %v2437 = vld [vmem:[%s2430 + $0x48] sm:$0xff]
      %v2438 = vld [vmem:[%s2430 + $0x50] sm:$0xff]
      %v2439 = vld [vmem:[%s2430 + $0x60] sm:$0xff]
      %v2440 = vld [vmem:[%s2430 + $0x68] sm:$0xff]
      %v2441 = vld [vmem:[%s2430 + $0x78] sm:$0xff]
      %v2442 = vld [vmem:[%s2430 + $0x80] sm:$0xff]
      %v2443 = vld [vmem:[%s2430 + $0x90] sm:$0xff]
      %v2444 = vld [vmem:[%s2430 + $0x98] sm:$0xff]
      %v2445 = vld [vmem:[%s2430 + $0xa8] sm:$0xff]
      %v2446 = vld [vmem:[%s2430 + $0xb0] sm:$0xff]
      %v2447 = vld [vmem:[%s2430 + $0xc0] sm:$0xff]
      %v2448 = vld [vmem:[%s2430 + $0xc8] sm:$0xff]
      %v2449 = vld [vmem:[%s2430 + $0xd8] sm:$0xff]
      %v2450 = vld [vmem:[%s2430 + $0xe0] sm:$0xff]
      %v2451 = vld [vmem:[%s2430 + $0xf0] sm:$0xff]
      %v2452 = vld [vmem:[%s2430 + $0xf8] sm:$0xff]
      %v2453 = vld [vmem:[%s2430 + $0x108] sm:$0xff]
      %v2454 = vld [vmem:[%s2430 + $0x110] sm:$0xff]
      %v2455 = vld [vmem:[%s2430 + $0x120] sm:$0xff]
      %v2456 = vld [vmem:[%s2430 + $0x128] sm:$0xff]
      %v2457 = vld [vmem:[%s2430 + $0x138] sm:$0xff]
      %v2458 = vld [vmem:[%s2430 + $0x140] sm:$0xff]
      %v2459 = vld [vmem:[%s2430 + $0x150] sm:$0xff]
      %v2460 = vld [vmem:[%s2430 + $0x158] sm:$0xff]
      %v2461 = vld [vmem:[%s2430 + $0x168] sm:$0xff]
      %v2462 = vld [vmem:[%s2430 + $0x170] sm:$0xff]
      %s2463 = scalar_lea.vmem %s1, 48
      %v2464 = vld [vmem:[%s2463] sm:$0xff]
      %v2466 = vsel %vm238, %v2431, 0
      %v2469 = vsel %vm238, %v2432, 0
      %v2472 = vsel %vm238, %v2433, 0
      %v2475 = vsel %vm238, %v2434, 0
      %v2478 = vsel %vm238, %v2435, 0
      %v2481 = vsel %vm238, %v2436, 0
      %v2484 = vsel %vm238, %v2437, 0
      %v2487 = vsel %vm238, %v2438, 0
      %v2490 = vsel %vm238, %v2439, 0
      %v2493 = vsel %vm238, %v2440, 0
      %v2496 = vsel %vm238, %v2441, 0
      %v2499 = vsel %vm238, %v2442, 0
      %v2502 = vsel %vm238, %v2443, 0
      %v2505 = vsel %vm238, %v2444, 0
      %v2508 = vsel %vm238, %v2445, 0
      %v2511 = vsel %vm238, %v2446, 0
      %v2514 = vsel %vm238, %v2447, 0
      %v2517 = vsel %vm238, %v2448, 0
      %v2520 = vsel %vm238, %v2449, 0
      %v2523 = vsel %vm238, %v2450, 0
      %v2526 = vsel %vm238, %v2451, 0
      %v2529 = vsel %vm238, %v2452, 0
      %v2532 = vsel %vm238, %v2453, 0
      %v2535 = vsel %vm238, %v2454, 0
      %v2538 = vsel %vm238, %v2455, 0
      %v2541 = vsel %vm238, %v2456, 0
      %v2544 = vsel %vm238, %v2457, 0
      %v2547 = vsel %vm238, %v2458, 0
      %v2550 = vsel %vm238, %v2459, 0
      %v2553 = vsel %vm238, %v2460, 0
      %v2556 = vsel %vm238, %v2461, 0
      %v2559 = vsel %vm238, %v2462, 0
      %2561 = vmatprep.subr.mxu0 0.0
      %2562 = vmatpush1.msra.mxu0 %v2464
      %2563 = vmatprep.subr.mxu0 0.0
      %2564 = vmatpush1.msra.mxu0 0.0
      %2565 = vmatprep.subr.mxu0 0.0
      %2566 = vmatpush1.msra.mxu0 0.0
      %2567 = vmatprep.subr.mxu0 0.0
      %2568 = vmatpush1.msra.mxu0 0.0
      %2569 = vmatprep.subr.mxu0 0.0
      %2570 = vmatpush1.msra.mxu0 0.0
      %2571 = vmatprep.subr.mxu0 0.0
      %2572 = vmatpush1.msra.mxu0 0.0
      %2573 = vmatprep.subr.mxu0 0.0
      %2574 = vmatpush1.msra.mxu0 0.0
      %2575 = vmatprep.subr.mxu0 0.0
      %2576 = vmatpush1.msra.mxu0 0.0
      %2577 = vmatprep.subr.mxu0 0.0
      %2578 = vmatpush1.msra.mxu0 0.0
      %2579 = vmatprep.subr.mxu0 0.0
      %2580 = vmatpush1.msra.mxu0 0.0
      %2581 = vmatprep.subr.mxu0 0.0
      %2582 = vmatpush1.msra.mxu0 0.0
      %2583 = vmatprep.subr.mxu0 0.0
      %2584 = vmatpush1.msra.mxu0 0.0
      %2585 = vmatprep.subr.mxu0 0.0
      %2586 = vmatpush1.msra.mxu0 0.0
      %2587 = vmatprep.subr.mxu0 0.0
      %2588 = vmatpush1.msra.mxu0 0.0
      %2589 = vmatprep.subr.mxu0 0.0
      %2590 = vmatpush1.msra.mxu0 0.0
      %2591 = vmatprep.subr.mxu0 0.0
      %2592 = vmatpush1.msra.mxu0 0.0
      %2593 = vmatprep.subr.mxu0 0.0
      %2594 = vmatpush1.msra.mxu0 0.0
      %2595 = vmatprep.subr.mxu0 0.0
      %2596 = vmatpush1.msra.mxu0 0.0
      %2597 = vmatprep.subr.mxu0 0.0
      %2598 = vmatpush1.msra.mxu0 0.0
      %2599 = vmatprep.subr.mxu0 0.0
      %2600 = vmatpush1.msra.mxu0 0.0
      %2601 = vmatprep.subr.mxu0 0.0
      %2602 = vmatpush1.msra.mxu0 0.0
      %2603 = vmatprep.subr.mxu0 0.0
      %2604 = vmatpush1.msra.mxu0 0.0
      %2605 = vmatprep.subr.mxu0 0.0
      %2606 = vmatpush1.msra.mxu0 0.0
      %2607 = vmatprep.subr.mxu0 0.0
      %2608 = vmatpush1.msra.mxu0 0.0
      %2609 = vmatprep.subr.mxu0 0.0
      %2610 = vmatpush1.msra.mxu0 0.0
      %2611 = vmatprep.subr.mxu0 0.0
      %2612 = vmatpush1.msra.mxu0 0.0
      %2613 = vmatprep.subr.mxu0 0.0
      %2614 = vmatpush1.msra.mxu0 0.0
      %2615 = vmatprep.subr.mxu0 0.0
      %2616 = vmatpush1.msra.mxu0 0.0
      %2617 = vmatprep.subr.mxu0 0.0
      %2618 = vmatpush1.msra.mxu0 0.0
      %2619 = vmatprep.subr.mxu0 0.0
      %2620 = vmatpush1.msra.mxu0 0.0
      %2621 = vmatprep.subr.mxu0 0.0
      %2622 = vmatpush1.msra.mxu0 0.0
      %2623 = vmatprep.subr.mxu0 0.0
      %2624 = vmatpush1.msra.mxu0 0.0
      %2625 = vmatprep.mubr.f32.mxu0 0.0
      %2626 = vmatmul.mubr.f32.gmra.mrb[0].mxu0 %v2466
      %v2627 = vpop.f32.mrb[0].mxu0
      %v2628 = vadd.f32 0.0, %v2627
      %v2629 = vpop.f32.mrb[0].mxu0
      %2630 = vmatprep.mubr.f32.mxu0 0.0
      %2631 = vmatmul.mubr.f32.gmra.mrb[0].mxu0 %v2469
      %v2632 = vpop.f32.mrb[0].mxu0
      %v2633 = vadd.f32 0.0, %v2632
      %v2634 = vpop.f32.mrb[0].mxu0
      %2635 = vmatprep.mubr.f32.mxu0 0.0
      %2636 = vmatmul.mubr.f32.gmra.mrb[0].mxu0 %v2472
      %v2637 = vpop.f32.mrb[0].mxu0
      %v2638 = vadd.f32 0.0, %v2637
      %v2639 = vpop.f32.mrb[0].mxu0
      %2640 = vmatprep.mubr.f32.mxu0 0.0
      %2641 = vmatmul.mubr.f32.gmra.mrb[0].mxu0 %v2475
      %v2642 = vpop.f32.mrb[0].mxu0
      %v2643 = vadd.f32 0.0, %v2642
      %v2644 = vpop.f32.mrb[0].mxu0
      %2645 = vmatprep.mubr.f32.mxu0 0.0
      %2646 = vmatmul.mubr.f32.gmra.mrb[0].mxu0 %v2478
      %v2647 = vpop.f32.mrb[0].mxu0
      %v2648 = vadd.f32 0.0, %v2647
      %v2649 = vpop.f32.mrb[0].mxu0
      %2650 = vmatprep.mubr.f32.mxu0 0.0
      %2651 = vmatmul.mubr.f32.gmra.mrb[0].mxu0 %v2481
      %v2652 = vpop.f32.mrb[0].mxu0
      %v2653 = vadd.f32 0.0, %v2652
      %v2654 = vpop.f32.mrb[0].mxu0
      %2655 = vmatprep.mubr.f32.mxu0 0.0
      %2656 = vmatmul.mubr.f32.gmra.mrb[0].mxu0 %v2484
      %v2657 = vpop.f32.mrb[0].mxu0
      %v2658 = vadd.f32 0.0, %v2657
      %v2659 = vpop.f32.mrb[0].mxu0
      %2660 = vmatprep.mubr.f32.mxu0 0.0
      %2661 = vmatmul.mubr.f32.gmra.mrb[0].mxu0 %v2487
      %v2662 = vpop.f32.mrb[0].mxu0
      %v2663 = vadd.f32 0.0, %v2662
      %v2664 = vpop.f32.mrb[0].mxu0
      %2665 = vmatprep.mubr.f32.mxu0 0.0
      %2666 = vmatmul.mubr.f32.gmra.mrb[0].mxu0 %v2490
      %v2667 = vpop.f32.mrb[0].mxu0
      %v2668 = vadd.f32 0.0, %v2667
      %v2669 = vpop.f32.mrb[0].mxu0
      %2670 = vmatprep.mubr.f32.mxu0 0.0
      %2671 = vmatmul.mubr.f32.gmra.mrb[0].mxu0 %v2493
      %v2672 = vpop.f32.mrb[0].mxu0
      %v2673 = vadd.f32 0.0, %v2672
      %v2674 = vpop.f32.mrb[0].mxu0
      %2675 = vmatprep.mubr.f32.mxu0 0.0
      %2676 = vmatmul.mubr.f32.gmra.mrb[0].mxu0 %v2496
      %v2677 = vpop.f32.mrb[0].mxu0
      %v2678 = vadd.f32 0.0, %v2677
      %v2679 = vpop.f32.mrb[0].mxu0
      %2680 = vmatprep.mubr.f32.mxu0 0.0
      %2681 = vmatmul.mubr.f32.gmra.mrb[0].mxu0 %v2499
      %v2682 = vpop.f32.mrb[0].mxu0
      %v2683 = vadd.f32 0.0, %v2682
      %v2684 = vpop.f32.mrb[0].mxu0
      %2685 = vmatprep.mubr.f32.mxu0 0.0
      %2686 = vmatmul.mubr.f32.gmra.mrb[0].mxu0 %v2502
      %v2687 = vpop.f32.mrb[0].mxu0
      %v2688 = vadd.f32 0.0, %v2687
      %v2689 = vpop.f32.mrb[0].mxu0
      %2690 = vmatprep.mubr.f32.mxu0 0.0
      %2691 = vmatmul.mubr.f32.gmra.mrb[0].mxu0 %v2505
      %v2692 = vpop.f32.mrb[0].mxu0
      %v2693 = vadd.f32 0.0, %v2692
      %v2694 = vpop.f32.mrb[0].mxu0
      %2695 = vmatprep.mubr.f32.mxu0 0.0
      %2696 = vmatmul.mubr.f32.gmra.mrb[0].mxu0 %v2508
      %v2697 = vpop.f32.mrb[0].mxu0
      %v2698 = vadd.f32 0.0, %v2697
      %v2699 = vpop.f32.mrb[0].mxu0
      %2700 = vmatprep.mubr.f32.mxu0 0.0
      %2701 = vmatmul.mubr.f32.gmra.mrb[0].mxu0 %v2511
      %v2702 = vpop.f32.mrb[0].mxu0
      %v2703 = vadd.f32 0.0, %v2702
      %v2704 = vpop.f32.mrb[0].mxu0
      %2705 = vmatprep.mubr.f32.mxu0 0.0
      %2706 = vmatmul.mubr.f32.gmra.mrb[0].mxu0 %v2514
      %v2707 = vpop.f32.mrb[0].mxu0
      %v2708 = vadd.f32 0.0, %v2707
      %v2709 = vpop.f32.mrb[0].mxu0
      %2710 = vmatprep.mubr.f32.mxu0 0.0
      %2711 = vmatmul.mubr.f32.gmra.mrb[0].mxu0 %v2517
      %v2712 = vpop.f32.mrb[0].mxu0
      %v2713 = vadd.f32 0.0, %v2712
      %v2714 = vpop.f32.mrb[0].mxu0
      %2715 = vmatprep.mubr.f32.mxu0 0.0
      %2716 = vmatmul.mubr.f32.gmra.mrb[0].mxu0 %v2520
      %v2717 = vpop.f32.mrb[0].mxu0
      %v2718 = vadd.f32 0.0, %v2717
      %v2719 = vpop.f32.mrb[0].mxu0
      %2720 = vmatprep.mubr.f32.mxu0 0.0
      %2721 = vmatmul.mubr.f32.gmra.mrb[0].mxu0 %v2523
      %v2722 = vpop.f32.mrb[0].mxu0
      %v2723 = vadd.f32 0.0, %v2722
      %v2724 = vpop.f32.mrb[0].mxu0
      %2725 = vmatprep.mubr.f32.mxu0 0.0
      %2726 = vmatmul.mubr.f32.gmra.mrb[0].mxu0 %v2526
      %v2727 = vpop.f32.mrb[0].mxu0
      %v2728 = vadd.f32 0.0, %v2727
      %v2729 = vpop.f32.mrb[0].mxu0
      %2730 = vmatprep.mubr.f32.mxu0 0.0
      %2731 = vmatmul.mubr.f32.gmra.mrb[0].mxu0 %v2529
      %v2732 = vpop.f32.mrb[0].mxu0
      %v2733 = vadd.f32 0.0, %v2732
      %v2734 = vpop.f32.mrb[0].mxu0
      %2735 = vmatprep.mubr.f32.mxu0 0.0
      %2736 = vmatmul.mubr.f32.gmra.mrb[0].mxu0 %v2532
      %v2737 = vpop.f32.mrb[0].mxu0
      %v2738 = vadd.f32 0.0, %v2737
      %v2739 = vpop.f32.mrb[0].mxu0
      %2740 = vmatprep.mubr.f32.mxu0 0.0
      %2741 = vmatmul.mubr.f32.gmra.mrb[0].mxu0 %v2535
      %v2742 = vpop.f32.mrb[0].mxu0
      %v2743 = vadd.f32 0.0, %v2742
      %v2744 = vpop.f32.mrb[0].mxu0
      %2745 = vmatprep.mubr.f32.mxu0 0.0
      %2746 = vmatmul.mubr.f32.gmra.mrb[0].mxu0 %v2538
      %v2747 = vpop.f32.mrb[0].mxu0
      %v2748 = vadd.f32 0.0, %v2747
      %v2749 = vpop.f32.mrb[0].mxu0
      %2750 = vmatprep.mubr.f32.mxu0 0.0
      %2751 = vmatmul.mubr.f32.gmra.mrb[0].mxu0 %v2541
      %v2752 = vpop.f32.mrb[0].mxu0
      %v2753 = vadd.f32 0.0, %v2752
      %v2754 = vpop.f32.mrb[0].mxu0
      %2755 = vmatprep.mubr.f32.mxu0 0.0
      %2756 = vmatmul.mubr.f32.gmra.mrb[0].mxu0 %v2544
      %v2757 = vpop.f32.mrb[0].mxu0
      %v2758 = vadd.f32 0.0, %v2757
      %v2759 = vpop.f32.mrb[0].mxu0
      %2760 = vmatprep.mubr.f32.mxu0 0.0
      %2761 = vmatmul.mubr.f32.gmra.mrb[0].mxu0 %v2547
      %v2762 = vpop.f32.mrb[0].mxu0
      %v2763 = vadd.f32 0.0, %v2762
      %v2764 = vpop.f32.mrb[0].mxu0
      %2765 = vmatprep.mubr.f32.mxu0 0.0
      %2766 = vmatmul.mubr.f32.gmra.mrb[0].mxu0 %v2550
      %v2767 = vpop.f32.mrb[0].mxu0
      %v2768 = vadd.f32 0.0, %v2767
      %v2769 = vpop.f32.mrb[0].mxu0
      %2770 = vmatprep.mubr.f32.mxu0 0.0
      %2771 = vmatmul.mubr.f32.gmra.mrb[0].mxu0 %v2553
      %v2772 = vpop.f32.mrb[0].mxu0
      %v2773 = vadd.f32 0.0, %v2772
      %v2774 = vpop.f32.mrb[0].mxu0
      %2775 = vmatprep.mubr.f32.mxu0 0.0
      %2776 = vmatmul.mubr.f32.gmra.mrb[0].mxu0 %v2556
      %v2777 = vpop.f32.mrb[0].mxu0
      %v2778 = vadd.f32 0.0, %v2777
      %v2779 = vpop.f32.mrb[0].mxu0
      %2780 = vmatprep.mubr.f32.mxu0 0.0
      %2781 = vmatmul.mubr.f32.gmra.mrb[0].mxu0 %v2559
      %v2782 = vpop.f32.mrb[0].mxu0
      %v2783 = vadd.f32 0.0, %v2782
      %v2784 = vpop.f32.mrb[0].mxu0
      %2785 = vdwg.mxu0
      %v2786 = vadd.f32 %v2398, %v2628
      %v2787 = vadd.f32 %v2399, %v2633
      %v2788 = vadd.f32 %v2400, %v2638
      %v2789 = vadd.f32 %v2401, %v2643
      %v2790 = vadd.f32 %v2402, %v2648
      %v2791 = vadd.f32 %v2403, %v2653
      %v2792 = vadd.f32 %v2404, %v2658
      %v2793 = vadd.f32 %v2405, %v2663
      %v2794 = vadd.f32 %v2406, %v2668
      %v2795 = vadd.f32 %v2407, %v2673
      %v2796 = vadd.f32 %v2408, %v2678
      %v2797 = vadd.f32 %v2409, %v2683
      %v2798 = vadd.f32 %v2410, %v2688
      %v2799 = vadd.f32 %v2411, %v2693
      %v2800 = vadd.f32 %v2412, %v2698
      %v2801 = vadd.f32 %v2413, %v2703
      %v2802 = vadd.f32 %v2414, %v2708
      %v2803 = vadd.f32 %v2415, %v2713
      %v2804 = vadd.f32 %v2416, %v2718
      %v2805 = vadd.f32 %v2417, %v2723
      %v2806 = vadd.f32 %v2418, %v2728
      %v2807 = vadd.f32 %v2419, %v2733
      %v2808 = vadd.f32 %v2420, %v2738
      %v2809 = vadd.f32 %v2421, %v2743
      %v2810 = vadd.f32 %v2422, %v2748
      %v2811 = vadd.f32 %v2423, %v2753
      %v2812 = vadd.f32 %v2424, %v2758
      %v2813 = vadd.f32 %v2425, %v2763
      %v2814 = vadd.f32 %v2426, %v2768
      %v2815 = vadd.f32 %v2427, %v2773
      %v2816 = vadd.f32 %v2428, %v2778
      %v2817 = vadd.f32 %v2429, %v2783
      %v2818 = vld [vmem:[%s2430 + $0x1] sm:$0xff]
      %v2819 = vld [vmem:[%s2430 + $0x9] sm:$0xff]
      %v2820 = vld [vmem:[%s2430 + $0x19] sm:$0xff]
      %v2821 = vld [vmem:[%s2430 + $0x21] sm:$0xff]
      %v2822 = vld [vmem:[%s2430 + $0x31] sm:$0xff]
      %v2823 = vld [vmem:[%s2430 + $0x39] sm:$0xff]
      %v2824 = vld [vmem:[%s2430 + $0x49] sm:$0xff]
      %v2825 = vld [vmem:[%s2430 + $0x51] sm:$0xff]
      %v2826 = vld [vmem:[%s2430 + $0x61] sm:$0xff]
      %v2827 = vld [vmem:[%s2430 + $0x69] sm:$0xff]
      %v2828 = vld [vmem:[%s2430 + $0x79] sm:$0xff]
      %v2829 = vld [vmem:[%s2430 + $0x81] sm:$0xff]
      %v2830 = vld [vmem:[%s2430 + $0x91] sm:$0xff]
      %v2831 = vld [vmem:[%s2430 + $0x99] sm:$0xff]
      %v2832 = vld [vmem:[%s2430 + $0xa9] sm:$0xff]
      %v2833 = vld [vmem:[%s2430 + $0xb1] sm:$0xff]
      %v2834 = vld [vmem:[%s2430 + $0xc1] sm:$0xff]
      %v2835 = vld [vmem:[%s2430 + $0xc9] sm:$0xff]
      %v2836 = vld [vmem:[%s2430 + $0xd9] sm:$0xff]
      %v2837 = vld [vmem:[%s2430 + $0xe1] sm:$0xff]
      %v2838 = vld [vmem:[%s2430 + $0xf1] sm:$0xff]
      %v2839 = vld [vmem:[%s2430 + $0xf9] sm:$0xff]
      %v2840 = vld [vmem:[%s2430 + $0x109] sm:$0xff]
      %v2841 = vld [vmem:[%s2430 + $0x111] sm:$0xff]
      %v2842 = vld [vmem:[%s2430 + $0x121] sm:$0xff]
      %v2843 = vld [vmem:[%s2430 + $0x129] sm:$0xff]
      %v2844 = vld [vmem:[%s2430 + $0x139] sm:$0xff]
      %v2845 = vld [vmem:[%s2430 + $0x141] sm:$0xff]
      %v2846 = vld [vmem:[%s2430 + $0x151] sm:$0xff]
      %v2847 = vld [vmem:[%s2430 + $0x159] sm:$0xff]
      %v2848 = vld [vmem:[%s2430 + $0x169] sm:$0xff]
      %v2849 = vld [vmem:[%s2430 + $0x171] sm:$0xff]
      %s2850 = scalar_lea.vmem %s1, 56
      %v2851 = vld [vmem:[%s2850] sm:$0xff]
      %v2853 = vsel %vm238, %v2818, 0
      %v2856 = vsel %vm238, %v2819, 0
      %v2859 = vsel %vm238, %v2820, 0
      %v2862 = vsel %vm238, %v2821, 0
      %v2865 = vsel %vm238, %v2822, 0
      %v2868 = vsel %vm238, %v2823, 0
      %v2871 = vsel %vm238, %v2824, 0
      %v2874 = vsel %vm238, %v2825, 0
      %v2877 = vsel %vm238, %v2826, 0
      %v2880 = vsel %vm238, %v2827, 0
      %v2883 = vsel %vm238, %v2828, 0
      %v2886 = vsel %vm238, %v2829, 0
      %v2889 = vsel %vm238, %v2830, 0
      %v2892 = vsel %vm238, %v2831, 0
      %v2895 = vsel %vm238, %v2832, 0
      %v2898 = vsel %vm238, %v2833, 0
      %v2901 = vsel %vm238, %v2834, 0
      %v2904 = vsel %vm238, %v2835, 0
      %v2907 = vsel %vm238, %v2836, 0
      %v2910 = vsel %vm238, %v2837, 0
      %v2913 = vsel %vm238, %v2838, 0
      %v2916 = vsel %vm238, %v2839, 0
      %v2919 = vsel %vm238, %v2840, 0
      %v2922 = vsel %vm238, %v2841, 0
      %v2925 = vsel %vm238, %v2842, 0
      %v2928 = vsel %vm238, %v2843, 0
      %v2931 = vsel %vm238, %v2844, 0
      %v2934 = vsel %vm238, %v2845, 0
      %v2937 = vsel %vm238, %v2846, 0
      %v2940 = vsel %vm238, %v2847, 0
      %v2943 = vsel %vm238, %v2848, 0
      %v2946 = vsel %vm238, %v2849, 0
      %2948 = vmatprep.subr.mxu0 0.0
      %2949 = vmatpush1.msra.mxu0 %v2851
      %2950 = vmatprep.subr.mxu0 0.0
      %2951 = vmatpush1.msra.mxu0 0.0
      %2952 = vmatprep.subr.mxu0 0.0
      %2953 = vmatpush1.msra.mxu0 0.0
      %2954 = vmatprep.subr.mxu0 0.0
      %2955 = vmatpush1.msra.mxu0 0.0
      %2956 = vmatprep.subr.mxu0 0.0
      %2957 = vmatpush1.msra.mxu0 0.0
      %2958 = vmatprep.subr.mxu0 0.0
      %2959 = vmatpush1.msra.mxu0 0.0
      %2960 = vmatprep.subr.mxu0 0.0
      %2961 = vmatpush1.msra.mxu0 0.0
      %2962 = vmatprep.subr.mxu0 0.0
      %2963 = vmatpush1.msra.mxu0 0.0
      %2964 = vmatprep.subr.mxu0 0.0
      %2965 = vmatpush1.msra.mxu0 0.0
      %2966 = vmatprep.subr.mxu0 0.0
      %2967 = vmatpush1.msra.mxu0 0.0
      %2968 = vmatprep.subr.mxu0 0.0
      %2969 = vmatpush1.msra.mxu0 0.0
      %2970 = vmatprep.subr.mxu0 0.0
      %2971 = vmatpush1.msra.mxu0 0.0
      %2972 = vmatprep.subr.mxu0 0.0
      %2973 = vmatpush1.msra.mxu0 0.0
      %2974 = vmatprep.subr.mxu0 0.0
      %2975 = vmatpush1.msra.mxu0 0.0
      %2976 = vmatprep.subr.mxu0 0.0
      %2977 = vmatpush1.msra.mxu0 0.0
      %2978 = vmatprep.subr.mxu0 0.0
      %2979 = vmatpush1.msra.mxu0 0.0
      %2980 = vmatprep.subr.mxu0 0.0
      %2981 = vmatpush1.msra.mxu0 0.0
      %2982 = vmatprep.subr.mxu0 0.0
      %2983 = vmatpush1.msra.mxu0 0.0
      %2984 = vmatprep.subr.mxu0 0.0
      %2985 = vmatpush1.msra.mxu0 0.0
      %2986 = vmatprep.subr.mxu0 0.0
      %2987 = vmatpush1.msra.mxu0 0.0
      %2988 = vmatprep.subr.mxu0 0.0
      %2989 = vmatpush1.msra.mxu0 0.0
      %2990 = vmatprep.subr.mxu0 0.0
      %2991 = vmatpush1.msra.mxu0 0.0
      %2992 = vmatprep.subr.mxu0 0.0
      %2993 = vmatpush1.msra.mxu0 0.0
      %2994 = vmatprep.subr.mxu0 0.0
      %2995 = vmatpush1.msra.mxu0 0.0
      %2996 = vmatprep.subr.mxu0 0.0
      %2997 = vmatpush1.msra.mxu0 0.0
      %2998 = vmatprep.subr.mxu0 0.0
      %2999 = vmatpush1.msra.mxu0 0.0
      %3000 = vmatprep.subr.mxu0 0.0
      %3001 = vmatpush1.msra.mxu0 0.0
      %3002 = vmatprep.subr.mxu0 0.0
      %3003 = vmatpush1.msra.mxu0 0.0
      %3004 = vmatprep.subr.mxu0 0.0
      %3005 = vmatpush1.msra.mxu0 0.0
      %3006 = vmatprep.subr.mxu0 0.0
      %3007 = vmatpush1.msra.mxu0 0.0
      %3008 = vmatprep.subr.mxu0 0.0
      %3009 = vmatpush1.msra.mxu0 0.0
      %3010 = vmatprep.subr.mxu0 0.0
      %3011 = vmatpush1.msra.mxu0 0.0
      %3012 = vmatprep.mubr.f32.mxu0 0.0
      %3013 = vmatmul.mubr.f32.gmra.mrb[0].mxu0 %v2853
      %v3014 = vpop.f32.mrb[0].mxu0
      %v3015 = vadd.f32 0.0, %v3014
      %v3016 = vpop.f32.mrb[0].mxu0
      %3017 = vmatprep.mubr.f32.mxu0 0.0
      %3018 = vmatmul.mubr.f32.gmra.mrb[0].mxu0 %v2856
      %v3019 = vpop.f32.mrb[0].mxu0
      %v3020 = vadd.f32 0.0, %v3019
      %v3021 = vpop.f32.mrb[0].mxu0
      %3022 = vmatprep.mubr.f32.mxu0 0.0
      %3023 = vmatmul.mubr.f32.gmra.mrb[0].mxu0 %v2859
      %v3024 = vpop.f32.mrb[0].mxu0
      %v3025 = vadd.f32 0.0, %v3024
      %v3026 = vpop.f32.mrb[0].mxu0
      %3027 = vmatprep.mubr.f32.mxu0 0.0
      %3028 = vmatmul.mubr.f32.gmra.mrb[0].mxu0 %v2862
      %v3029 = vpop.f32.mrb[0].mxu0
      %v3030 = vadd.f32 0.0, %v3029
      %v3031 = vpop.f32.mrb[0].mxu0
      %3032 = vmatprep.mubr.f32.mxu0 0.0
      %3033 = vmatmul.mubr.f32.gmra.mrb[0].mxu0 %v2865
      %v3034 = vpop.f32.mrb[0].mxu0
      %v3035 = vadd.f32 0.0, %v3034
      %v3036 = vpop.f32.mrb[0].mxu0
      %3037 = vmatprep.mubr.f32.mxu0 0.0
      %3038 = vmatmul.mubr.f32.gmra.mrb[0].mxu0 %v2868
      %v3039 = vpop.f32.mrb[0].mxu0
      %v3040 = vadd.f32 0.0, %v3039
      %v3041 = vpop.f32.mrb[0].mxu0
      %3042 = vmatprep.mubr.f32.mxu0 0.0
      %3043 = vmatmul.mubr.f32.gmra.mrb[0].mxu0 %v2871
      %v3044 = vpop.f32.mrb[0].mxu0
      %v3045 = vadd.f32 0.0, %v3044
      %v3046 = vpop.f32.mrb[0].mxu0
      %3047 = vmatprep.mubr.f32.mxu0 0.0
      %3048 = vmatmul.mubr.f32.gmra.mrb[0].mxu0 %v2874
      %v3049 = vpop.f32.mrb[0].mxu0
      %v3050 = vadd.f32 0.0, %v3049
      %v3051 = vpop.f32.mrb[0].mxu0
      %3052 = vmatprep.mubr.f32.mxu0 0.0
      %3053 = vmatmul.mubr.f32.gmra.mrb[0].mxu0 %v2877
      %v3054 = vpop.f32.mrb[0].mxu0
      %v3055 = vadd.f32 0.0, %v3054
      %v3056 = vpop.f32.mrb[0].mxu0
      %3057 = vmatprep.mubr.f32.mxu0 0.0
      %3058 = vmatmul.mubr.f32.gmra.mrb[0].mxu0 %v2880
      %v3059 = vpop.f32.mrb[0].mxu0
      %v3060 = vadd.f32 0.0, %v3059
      %v3061 = vpop.f32.mrb[0].mxu0
      %3062 = vmatprep.mubr.f32.mxu0 0.0
      %3063 = vmatmul.mubr.f32.gmra.mrb[0].mxu0 %v2883
      %v3064 = vpop.f32.mrb[0].mxu0
      %v3065 = vadd.f32 0.0, %v3064
      %v3066 = vpop.f32.mrb[0].mxu0
      %3067 = vmatprep.mubr.f32.mxu0 0.0
      %3068 = vmatmul.mubr.f32.gmra.mrb[0].mxu0 %v2886
      %v3069 = vpop.f32.mrb[0].mxu0
      %v3070 = vadd.f32 0.0, %v3069
      %v3071 = vpop.f32.mrb[0].mxu0
      %3072 = vmatprep.mubr.f32.mxu0 0.0
      %3073 = vmatmul.mubr.f32.gmra.mrb[0].mxu0 %v2889
      %v3074 = vpop.f32.mrb[0].mxu0
      %v3075 = vadd.f32 0.0, %v3074
      %v3076 = vpop.f32.mrb[0].mxu0
      %3077 = vmatprep.mubr.f32.mxu0 0.0
      %3078 = vmatmul.mubr.f32.gmra.mrb[0].mxu0 %v2892
      %v3079 = vpop.f32.mrb[0].mxu0
      %v3080 = vadd.f32 0.0, %v3079
      %v3081 = vpop.f32.mrb[0].mxu0
      %3082 = vmatprep.mubr.f32.mxu0 0.0
      %3083 = vmatmul.mubr.f32.gmra.mrb[0].mxu0 %v2895
      %v3084 = vpop.f32.mrb[0].mxu0
      %v3085 = vadd.f32 0.0, %v3084
      %v3086 = vpop.f32.mrb[0].mxu0
      %3087 = vmatprep.mubr.f32.mxu0 0.0
      %3088 = vmatmul.mubr.f32.gmra.mrb[0].mxu0 %v2898
      %v3089 = vpop.f32.mrb[0].mxu0
      %v3090 = vadd.f32 0.0, %v3089
      %v3091 = vpop.f32.mrb[0].mxu0
      %3092 = vmatprep.mubr.f32.mxu0 0.0
      %3093 = vmatmul.mubr.f32.gmra.mrb[0].mxu0 %v2901
      %v3094 = vpop.f32.mrb[0].mxu0
      %v3095 = vadd.f32 0.0, %v3094
      %v3096 = vpop.f32.mrb[0].mxu0
      %3097 = vmatprep.mubr.f32.mxu0 0.0
      %3098 = vmatmul.mubr.f32.gmra.mrb[0].mxu0 %v2904
      %v3099 = vpop.f32.mrb[0].mxu0
      %v3100 = vadd.f32 0.0, %v3099
      %v3101 = vpop.f32.mrb[0].mxu0
      %3102 = vmatprep.mubr.f32.mxu0 0.0
      %3103 = vmatmul.mubr.f32.gmra.mrb[0].mxu0 %v2907
      %v3104 = vpop.f32.mrb[0].mxu0
      %v3105 = vadd.f32 0.0, %v3104
      %v3106 = vpop.f32.mrb[0].mxu0
      %3107 = vmatprep.mubr.f32.mxu0 0.0
      %3108 = vmatmul.mubr.f32.gmra.mrb[0].mxu0 %v2910
      %v3109 = vpop.f32.mrb[0].mxu0
      %v3110 = vadd.f32 0.0, %v3109
      %v3111 = vpop.f32.mrb[0].mxu0
      %3112 = vmatprep.mubr.f32.mxu0 0.0
      %3113 = vmatmul.mubr.f32.gmra.mrb[0].mxu0 %v2913
      %v3114 = vpop.f32.mrb[0].mxu0
      %v3115 = vadd.f32 0.0, %v3114
      %v3116 = vpop.f32.mrb[0].mxu0
      %3117 = vmatprep.mubr.f32.mxu0 0.0
      %3118 = vmatmul.mubr.f32.gmra.mrb[0].mxu0 %v2916
      %v3119 = vpop.f32.mrb[0].mxu0
      %v3120 = vadd.f32 0.0, %v3119
      %v3121 = vpop.f32.mrb[0].mxu0
      %3122 = vmatprep.mubr.f32.mxu0 0.0
      %3123 = vmatmul.mubr.f32.gmra.mrb[0].mxu0 %v2919
      %v3124 = vpop.f32.mrb[0].mxu0
      %v3125 = vadd.f32 0.0, %v3124
      %v3126 = vpop.f32.mrb[0].mxu0
      %3127 = vmatprep.mubr.f32.mxu0 0.0
      %3128 = vmatmul.mubr.f32.gmra.mrb[0].mxu0 %v2922
      %v3129 = vpop.f32.mrb[0].mxu0
      %v3130 = vadd.f32 0.0, %v3129
      %v3131 = vpop.f32.mrb[0].mxu0
      %3132 = vmatprep.mubr.f32.mxu0 0.0
      %3133 = vmatmul.mubr.f32.gmra.mrb[0].mxu0 %v2925
      %v3134 = vpop.f32.mrb[0].mxu0
      %v3135 = vadd.f32 0.0, %v3134
      %v3136 = vpop.f32.mrb[0].mxu0
      %3137 = vmatprep.mubr.f32.mxu0 0.0
      %3138 = vmatmul.mubr.f32.gmra.mrb[0].mxu0 %v2928
      %v3139 = vpop.f32.mrb[0].mxu0
      %v3140 = vadd.f32 0.0, %v3139
      %v3141 = vpop.f32.mrb[0].mxu0
      %3142 = vmatprep.mubr.f32.mxu0 0.0
      %3143 = vmatmul.mubr.f32.gmra.mrb[0].mxu0 %v2931
      %v3144 = vpop.f32.mrb[0].mxu0
      %v3145 = vadd.f32 0.0, %v3144
      %v3146 = vpop.f32.mrb[0].mxu0
      %3147 = vmatprep.mubr.f32.mxu0 0.0
      %3148 = vmatmul.mubr.f32.gmra.mrb[0].mxu0 %v2934
      %v3149 = vpop.f32.mrb[0].mxu0
      %v3150 = vadd.f32 0.0, %v3149
      %v3151 = vpop.f32.mrb[0].mxu0
      %3152 = vmatprep.mubr.f32.mxu0 0.0
      %3153 = vmatmul.mubr.f32.gmra.mrb[0].mxu0 %v2937
      %v3154 = vpop.f32.mrb[0].mxu0
      %v3155 = vadd.f32 0.0, %v3154
      %v3156 = vpop.f32.mrb[0].mxu0
      %3157 = vmatprep.mubr.f32.mxu0 0.0
      %3158 = vmatmul.mubr.f32.gmra.mrb[0].mxu0 %v2940
      %v3159 = vpop.f32.mrb[0].mxu0
      %v3160 = vadd.f32 0.0, %v3159
      %v3161 = vpop.f32.mrb[0].mxu0
      %3162 = vmatprep.mubr.f32.mxu0 0.0
      %3163 = vmatmul.mubr.f32.gmra.mrb[0].mxu0 %v2943
      %v3164 = vpop.f32.mrb[0].mxu0
      %v3165 = vadd.f32 0.0, %v3164
      %v3166 = vpop.f32.mrb[0].mxu0
      %3167 = vmatprep.mubr.f32.mxu0 0.0
      %3168 = vmatmul.mubr.f32.gmra.mrb[0].mxu0 %v2946
      %v3169 = vpop.f32.mrb[0].mxu0
      %v3170 = vadd.f32 0.0, %v3169
      %v3171 = vpop.f32.mrb[0].mxu0
      %3172 = vdwg.mxu0
      %v3173 = vadd.f32 %v2786, %v3015
      %v3174 = vadd.f32 %v2787, %v3020
      %v3175 = vadd.f32 %v2788, %v3025
      %v3176 = vadd.f32 %v2789, %v3030
      %v3177 = vadd.f32 %v2790, %v3035
      %v3178 = vadd.f32 %v2791, %v3040
      %v3179 = vadd.f32 %v2792, %v3045
      %v3180 = vadd.f32 %v2793, %v3050
      %v3181 = vadd.f32 %v2794, %v3055
      %v3182 = vadd.f32 %v2795, %v3060
      %v3183 = vadd.f32 %v2796, %v3065
      %v3184 = vadd.f32 %v2797, %v3070
      %v3185 = vadd.f32 %v2798, %v3075
      %v3186 = vadd.f32 %v2799, %v3080
      %v3187 = vadd.f32 %v2800, %v3085
      %v3188 = vadd.f32 %v2801, %v3090
      %v3189 = vadd.f32 %v2802, %v3095
      %v3190 = vadd.f32 %v2803, %v3100
      %v3191 = vadd.f32 %v2804, %v3105
      %v3192 = vadd.f32 %v2805, %v3110
      %v3193 = vadd.f32 %v2806, %v3115
      %v3194 = vadd.f32 %v2807, %v3120
      %v3195 = vadd.f32 %v2808, %v3125
      %v3196 = vadd.f32 %v2809, %v3130
      %v3197 = vadd.f32 %v2810, %v3135
      %v3198 = vadd.f32 %v2811, %v3140
      %v3199 = vadd.f32 %v2812, %v3145
      %v3200 = vadd.f32 %v2813, %v3150
      %v3201 = vadd.f32 %v2814, %v3155
      %v3202 = vadd.f32 %v2815, %v3160
      %v3203 = vadd.f32 %v2816, %v3165
      %v3204 = vadd.f32 %v2817, %v3170
      %v3205 = vld [vmem:[%s2430 + $0x2] sm:$0xff]
      %v3206 = vld [vmem:[%s2430 + $0xa] sm:$0xff]
      %v3207 = vld [vmem:[%s2430 + $0x1a] sm:$0xff]
      %v3208 = vld [vmem:[%s2430 + $0x22] sm:$0xff]
      %v3209 = vld [vmem:[%s2430 + $0x32] sm:$0xff]
      %v3210 = vld [vmem:[%s2430 + $0x3a] sm:$0xff]
      %v3211 = vld [vmem:[%s2430 + $0x4a] sm:$0xff]
      %v3212 = vld [vmem:[%s2430 + $0x52] sm:$0xff]
      %v3213 = vld [vmem:[%s2430 + $0x62] sm:$0xff]
      %v3214 = vld [vmem:[%s2430 + $0x6a] sm:$0xff]
      %v3215 = vld [vmem:[%s2430 + $0x7a] sm:$0xff]
      %v3216 = vld [vmem:[%s2430 + $0x82] sm:$0xff]
      %v3217 = vld [vmem:[%s2430 + $0x92] sm:$0xff]
      %v3218 = vld [vmem:[%s2430 + $0x9a] sm:$0xff]
      %v3219 = vld [vmem:[%s2430 + $0xaa] sm:$0xff]
      %v3220 = vld [vmem:[%s2430 + $0xb2] sm:$0xff]
      %v3221 = vld [vmem:[%s2430 + $0xc2] sm:$0xff]
      %v3222 = vld [vmem:[%s2430 + $0xca] sm:$0xff]
      %v3223 = vld [vmem:[%s2430 + $0xda] sm:$0xff]
      %v3224 = vld [vmem:[%s2430 + $0xe2] sm:$0xff]
      %v3225 = vld [vmem:[%s2430 + $0xf2] sm:$0xff]
      %v3226 = vld [vmem:[%s2430 + $0xfa] sm:$0xff]
      %v3227 = vld [vmem:[%s2430 + $0x10a] sm:$0xff]
      %v3228 = vld [vmem:[%s2430 + $0x112] sm:$0xff]
      %v3229 = vld [vmem:[%s2430 + $0x122] sm:$0xff]
      %v3230 = vld [vmem:[%s2430 + $0x12a] sm:$0xff]
      %v3231 = vld [vmem:[%s2430 + $0x13a] sm:$0xff]
      %v3232 = vld [vmem:[%s2430 + $0x142] sm:$0xff]
      %v3233 = vld [vmem:[%s2430 + $0x152] sm:$0xff]
      %v3234 = vld [vmem:[%s2430 + $0x15a] sm:$0xff]
      %v3235 = vld [vmem:[%s2430 + $0x16a] sm:$0xff]
      %v3236 = vld [vmem:[%s2430 + $0x172] sm:$0xff]
      %s3237 = scalar_lea.vmem %s1, 64
      %v3238 = vld [vmem:[%s3237] sm:$0xff]
      %v3240 = vsel %vm238, %v3205, 0
      %v3243 = vsel %vm238, %v3206, 0
      %v3246 = vsel %vm238, %v3207, 0
      %v3249 = vsel %vm238, %v3208, 0
      %v3252 = vsel %vm238, %v3209, 0
      %v3255 = vsel %vm238, %v3210, 0
      %v3258 = vsel %vm238, %v3211, 0
      %v3261 = vsel %vm238, %v3212, 0
      %v3264 = vsel %vm238, %v3213, 0
      %v3267 = vsel %vm238, %v3214, 0
      %v3270 = vsel %vm238, %v3215, 0
      %v3273 = vsel %vm238, %v3216, 0
      %v3276 = vsel %vm238, %v3217, 0
      %v3279 = vsel %vm238, %v3218, 0
      %v3282 = vsel %vm238, %v3219, 0
      %v3285 = vsel %vm238, %v3220, 0
      %v3288 = vsel %vm238, %v3221, 0
      %v3291 = vsel %vm238, %v3222, 0
      %v3294 = vsel %vm238, %v3223, 0
      %v3297 = vsel %vm238, %v3224, 0
      %v3300 = vsel %vm238, %v3225, 0
      %v3303 = vsel %vm238, %v3226, 0
      %v3306 = vsel %vm238, %v3227, 0
      %v3309 = vsel %vm238, %v3228, 0
      %v3312 = vsel %vm238, %v3229, 0
      %v3315 = vsel %vm238, %v3230, 0
      %v3318 = vsel %vm238, %v3231, 0
      %v3321 = vsel %vm238, %v3232, 0
      %v3324 = vsel %vm238, %v3233, 0
      %v3327 = vsel %vm238, %v3234, 0
      %v3330 = vsel %vm238, %v3235, 0
      %v3333 = vsel %vm238, %v3236, 0
      %3335 = vmatprep.subr.mxu0 0.0
      %3336 = vmatpush1.msra.mxu0 %v3238
      %3337 = vmatprep.subr.mxu0 0.0
      %3338 = vmatpush1.msra.mxu0 0.0
      %3339 = vmatprep.subr.mxu0 0.0
      %3340 = vmatpush1.msra.mxu0 0.0
      %3341 = vmatprep.subr.mxu0 0.0
      %3342 = vmatpush1.msra.mxu0 0.0
      %3343 = vmatprep.subr.mxu0 0.0
      %3344 = vmatpush1.msra.mxu0 0.0
      %3345 = vmatprep.subr.mxu0 0.0
      %3346 = vmatpush1.msra.mxu0 0.0
      %3347 = vmatprep.subr.mxu0 0.0
      %3348 = vmatpush1.msra.mxu0 0.0
      %3349 = vmatprep.subr.mxu0 0.0
      %3350 = vmatpush1.msra.mxu0 0.0
      %3351 = vmatprep.subr.mxu0 0.0
      %3352 = vmatpush1.msra.mxu0 0.0
      %3353 = vmatprep.subr.mxu0 0.0
      %3354 = vmatpush1.msra.mxu0 0.0
      %3355 = vmatprep.subr.mxu0 0.0
      %3356 = vmatpush1.msra.mxu0 0.0
      %3357 = vmatprep.subr.mxu0 0.0
      %3358 = vmatpush1.msra.mxu0 0.0
      %3359 = vmatprep.subr.mxu0 0.0
      %3360 = vmatpush1.msra.mxu0 0.0
      %3361 = vmatprep.subr.mxu0 0.0
      %3362 = vmatpush1.msra.mxu0 0.0
      %3363 = vmatprep.subr.mxu0 0.0
      %3364 = vmatpush1.msra.mxu0 0.0
      %3365 = vmatprep.subr.mxu0 0.0
      %3366 = vmatpush1.msra.mxu0 0.0
      %3367 = vmatprep.subr.mxu0 0.0
      %3368 = vmatpush1.msra.mxu0 0.0
      %3369 = vmatprep.subr.mxu0 0.0
      %3370 = vmatpush1.msra.mxu0 0.0
      %3371 = vmatprep.subr.mxu0 0.0
      %3372 = vmatpush1.msra.mxu0 0.0
      %3373 = vmatprep.subr.mxu0 0.0
      %3374 = vmatpush1.msra.mxu0 0.0
      %3375 = vmatprep.subr.mxu0 0.0
      %3376 = vmatpush1.msra.mxu0 0.0
      %3377 = vmatprep.subr.mxu0 0.0
      %3378 = vmatpush1.msra.mxu0 0.0
      %3379 = vmatprep.subr.mxu0 0.0
      %3380 = vmatpush1.msra.mxu0 0.0
      %3381 = vmatprep.subr.mxu0 0.0
      %3382 = vmatpush1.msra.mxu0 0.0
      %3383 = vmatprep.subr.mxu0 0.0
      %3384 = vmatpush1.msra.mxu0 0.0
      %3385 = vmatprep.subr.mxu0 0.0
      %3386 = vmatpush1.msra.mxu0 0.0
      %3387 = vmatprep.subr.mxu0 0.0
      %3388 = vmatpush1.msra.mxu0 0.0
      %3389 = vmatprep.subr.mxu0 0.0
      %3390 = vmatpush1.msra.mxu0 0.0
      %3391 = vmatprep.subr.mxu0 0.0
      %3392 = vmatpush1.msra.mxu0 0.0
      %3393 = vmatprep.subr.mxu0 0.0
      %3394 = vmatpush1.msra.mxu0 0.0
      %3395 = vmatprep.subr.mxu0 0.0
      %3396 = vmatpush1.msra.mxu0 0.0
      %3397 = vmatprep.subr.mxu0 0.0
      %3398 = vmatpush1.msra.mxu0 0.0
      %3399 = vmatprep.mubr.f32.mxu0 0.0
      %3400 = vmatmul.mubr.f32.gmra.mrb[0].mxu0 %v3240
      %v3401 = vpop.f32.mrb[0].mxu0
      %v3402 = vadd.f32 0.0, %v3401
      %v3403 = vpop.f32.mrb[0].mxu0
      %3404 = vmatprep.mubr.f32.mxu0 0.0
      %3405 = vmatmul.mubr.f32.gmra.mrb[0].mxu0 %v3243
      %v3406 = vpop.f32.mrb[0].mxu0
      %v3407 = vadd.f32 0.0, %v3406
      %v3408 = vpop.f32.mrb[0].mxu0
      %3409 = vmatprep.mubr.f32.mxu0 0.0
      %3410 = vmatmul.mubr.f32.gmra.mrb[0].mxu0 %v3246
      %v3411 = vpop.f32.mrb[0].mxu0
      %v3412 = vadd.f32 0.0, %v3411
      %v3413 = vpop.f32.mrb[0].mxu0
      %3414 = vmatprep.mubr.f32.mxu0 0.0
      %3415 = vmatmul.mubr.f32.gmra.mrb[0].mxu0 %v3249
      %v3416 = vpop.f32.mrb[0].mxu0
      %v3417 = vadd.f32 0.0, %v3416
      %v3418 = vpop.f32.mrb[0].mxu0
      %3419 = vmatprep.mubr.f32.mxu0 0.0
      %3420 = vmatmul.mubr.f32.gmra.mrb[0].mxu0 %v3252
      %v3421 = vpop.f32.mrb[0].mxu0
      %v3422 = vadd.f32 0.0, %v3421
      %v3423 = vpop.f32.mrb[0].mxu0
      %3424 = vmatprep.mubr.f32.mxu0 0.0
      %3425 = vmatmul.mubr.f32.gmra.mrb[0].mxu0 %v3255
      %v3426 = vpop.f32.mrb[0].mxu0
      %v3427 = vadd.f32 0.0, %v3426
      %v3428 = vpop.f32.mrb[0].mxu0
      %3429 = vmatprep.mubr.f32.mxu0 0.0
      %3430 = vmatmul.mubr.f32.gmra.mrb[0].mxu0 %v3258
      %v3431 = vpop.f32.mrb[0].mxu0
      %v3432 = vadd.f32 0.0, %v3431
      %v3433 = vpop.f32.mrb[0].mxu0
      %3434 = vmatprep.mubr.f32.mxu0 0.0
      %3435 = vmatmul.mubr.f32.gmra.mrb[0].mxu0 %v3261
      %v3436 = vpop.f32.mrb[0].mxu0
      %v3437 = vadd.f32 0.0, %v3436
      %v3438 = vpop.f32.mrb[0].mxu0
      %3439 = vmatprep.mubr.f32.mxu0 0.0
      %3440 = vmatmul.mubr.f32.gmra.mrb[0].mxu0 %v3264
      %v3441 = vpop.f32.mrb[0].mxu0
      %v3442 = vadd.f32 0.0, %v3441
      %v3443 = vpop.f32.mrb[0].mxu0
      %3444 = vmatprep.mubr.f32.mxu0 0.0
      %3445 = vmatmul.mubr.f32.gmra.mrb[0].mxu0 %v3267
      %v3446 = vpop.f32.mrb[0].mxu0
      %v3447 = vadd.f32 0.0, %v3446
      %v3448 = vpop.f32.mrb[0].mxu0
      %3449 = vmatprep.mubr.f32.mxu0 0.0
      %3450 = vmatmul.mubr.f32.gmra.mrb[0].mxu0 %v3270
      %v3451 = vpop.f32.mrb[0].mxu0
      %v3452 = vadd.f32 0.0, %v3451
      %v3453 = vpop.f32.mrb[0].mxu0
      %3454 = vmatprep.mubr.f32.mxu0 0.0
      %3455 = vmatmul.mubr.f32.gmra.mrb[0].mxu0 %v3273
      %v3456 = vpop.f32.mrb[0].mxu0
      %v3457 = vadd.f32 0.0, %v3456
      %v3458 = vpop.f32.mrb[0].mxu0
      %3459 = vmatprep.mubr.f32.mxu0 0.0
      %3460 = vmatmul.mubr.f32.gmra.mrb[0].mxu0 %v3276
      %v3461 = vpop.f32.mrb[0].mxu0
      %v3462 = vadd.f32 0.0, %v3461
      %v3463 = vpop.f32.mrb[0].mxu0
      %3464 = vmatprep.mubr.f32.mxu0 0.0
      %3465 = vmatmul.mubr.f32.gmra.mrb[0].mxu0 %v3279
      %v3466 = vpop.f32.mrb[0].mxu0
      %v3467 = vadd.f32 0.0, %v3466
      %v3468 = vpop.f32.mrb[0].mxu0
      %3469 = vmatprep.mubr.f32.mxu0 0.0
      %3470 = vmatmul.mubr.f32.gmra.mrb[0].mxu0 %v3282
      %v3471 = vpop.f32.mrb[0].mxu0
      %v3472 = vadd.f32 0.0, %v3471
      %v3473 = vpop.f32.mrb[0].mxu0
      %3474 = vmatprep.mubr.f32.mxu0 0.0
      %3475 = vmatmul.mubr.f32.gmra.mrb[0].mxu0 %v3285
      %v3476 = vpop.f32.mrb[0].mxu0
      %v3477 = vadd.f32 0.0, %v3476
      %v3478 = vpop.f32.mrb[0].mxu0
      %3479 = vmatprep.mubr.f32.mxu0 0.0
      %3480 = vmatmul.mubr.f32.gmra.mrb[0].mxu0 %v3288
      %v3481 = vpop.f32.mrb[0].mxu0
      %v3482 = vadd.f32 0.0, %v3481
      %v3483 = vpop.f32.mrb[0].mxu0
      %3484 = vmatprep.mubr.f32.mxu0 0.0
      %3485 = vmatmul.mubr.f32.gmra.mrb[0].mxu0 %v3291
      %v3486 = vpop.f32.mrb[0].mxu0
      %v3487 = vadd.f32 0.0, %v3486
      %v3488 = vpop.f32.mrb[0].mxu0
      %3489 = vmatprep.mubr.f32.mxu0 0.0
      %3490 = vmatmul.mubr.f32.gmra.mrb[0].mxu0 %v3294
      %v3491 = vpop.f32.mrb[0].mxu0
      %v3492 = vadd.f32 0.0, %v3491
      %v3493 = vpop.f32.mrb[0].mxu0
      %3494 = vmatprep.mubr.f32.mxu0 0.0
      %3495 = vmatmul.mubr.f32.gmra.mrb[0].mxu0 %v3297
      %v3496 = vpop.f32.mrb[0].mxu0
      %v3497 = vadd.f32 0.0, %v3496
      %v3498 = vpop.f32.mrb[0].mxu0
      %3499 = vmatprep.mubr.f32.mxu0 0.0
      %3500 = vmatmul.mubr.f32.gmra.mrb[0].mxu0 %v3300
      %v3501 = vpop.f32.mrb[0].mxu0
      %v3502 = vadd.f32 0.0, %v3501
      %v3503 = vpop.f32.mrb[0].mxu0
      %3504 = vmatprep.mubr.f32.mxu0 0.0
      %3505 = vmatmul.mubr.f32.gmra.mrb[0].mxu0 %v3303
      %v3506 = vpop.f32.mrb[0].mxu0
      %v3507 = vadd.f32 0.0, %v3506
      %v3508 = vpop.f32.mrb[0].mxu0
      %3509 = vmatprep.mubr.f32.mxu0 0.0
      %3510 = vmatmul.mubr.f32.gmra.mrb[0].mxu0 %v3306
      %v3511 = vpop.f32.mrb[0].mxu0
      %v3512 = vadd.f32 0.0, %v3511
      %v3513 = vpop.f32.mrb[0].mxu0
      %3514 = vmatprep.mubr.f32.mxu0 0.0
      %3515 = vmatmul.mubr.f32.gmra.mrb[0].mxu0 %v3309
      %v3516 = vpop.f32.mrb[0].mxu0
      %v3517 = vadd.f32 0.0, %v3516
      %v3518 = vpop.f32.mrb[0].mxu0
      %3519 = vmatprep.mubr.f32.mxu0 0.0
      %3520 = vmatmul.mubr.f32.gmra.mrb[0].mxu0 %v3312
      %v3521 = vpop.f32.mrb[0].mxu0
      %v3522 = vadd.f32 0.0, %v3521
      %v3523 = vpop.f32.mrb[0].mxu0
      %3524 = vmatprep.mubr.f32.mxu0 0.0
      %3525 = vmatmul.mubr.f32.gmra.mrb[0].mxu0 %v3315
      %v3526 = vpop.f32.mrb[0].mxu0
      %v3527 = vadd.f32 0.0, %v3526
      %v3528 = vpop.f32.mrb[0].mxu0
      %3529 = vmatprep.mubr.f32.mxu0 0.0
      %3530 = vmatmul.mubr.f32.gmra.mrb[0].mxu0 %v3318
      %v3531 = vpop.f32.mrb[0].mxu0
      %v3532 = vadd.f32 0.0, %v3531
      %v3533 = vpop.f32.mrb[0].mxu0
      %3534 = vmatprep.mubr.f32.mxu0 0.0
      %3535 = vmatmul.mubr.f32.gmra.mrb[0].mxu0 %v3321
      %v3536 = vpop.f32.mrb[0].mxu0
      %v3537 = vadd.f32 0.0, %v3536
      %v3538 = vpop.f32.mrb[0].mxu0
      %3539 = vmatprep.mubr.f32.mxu0 0.0
      %3540 = vmatmul.mubr.f32.gmra.mrb[0].mxu0 %v3324
      %v3541 = vpop.f32.mrb[0].mxu0
      %v3542 = vadd.f32 0.0, %v3541
      %v3543 = vpop.f32.mrb[0].mxu0
      %3544 = vmatprep.mubr.f32.mxu0 0.0
      %3545 = vmatmul.mubr.f32.gmra.mrb[0].mxu0 %v3327
      %v3546 = vpop.f32.mrb[0].mxu0
      %v3547 = vadd.f32 0.0, %v3546
      %v3548 = vpop.f32.mrb[0].mxu0
      %3549 = vmatprep.mubr.f32.mxu0 0.0
      %3550 = vmatmul.mubr.f32.gmra.mrb[0].mxu0 %v3330
      %v3551 = vpop.f32.mrb[0].mxu0
      %v3552 = vadd.f32 0.0, %v3551
      %v3553 = vpop.f32.mrb[0].mxu0
      %3554 = vmatprep.mubr.f32.mxu0 0.0
      %3555 = vmatmul.mubr.f32.gmra.mrb[0].mxu0 %v3333
      %v3556 = vpop.f32.mrb[0].mxu0
      %v3557 = vadd.f32 0.0, %v3556
      %v3558 = vpop.f32.mrb[0].mxu0
      %3559 = vdwg.mxu0
      %v3560 = vadd.f32 %v3173, %v3402
      %v3561 = vadd.f32 %v3174, %v3407
      %v3562 = vadd.f32 %v3175, %v3412
      %v3563 = vadd.f32 %v3176, %v3417
      %v3564 = vadd.f32 %v3177, %v3422
      %v3565 = vadd.f32 %v3178, %v3427
      %v3566 = vadd.f32 %v3179, %v3432
      %v3567 = vadd.f32 %v3180, %v3437
      %v3568 = vadd.f32 %v3181, %v3442
      %v3569 = vadd.f32 %v3182, %v3447
      %v3570 = vadd.f32 %v3183, %v3452
      %v3571 = vadd.f32 %v3184, %v3457
      %v3572 = vadd.f32 %v3185, %v3462
      %v3573 = vadd.f32 %v3186, %v3467
      %v3574 = vadd.f32 %v3187, %v3472
      %v3575 = vadd.f32 %v3188, %v3477
      %v3576 = vadd.f32 %v3189, %v3482
      %v3577 = vadd.f32 %v3190, %v3487
      %v3578 = vadd.f32 %v3191, %v3492
      %v3579 = vadd.f32 %v3192, %v3497
      %v3580 = vadd.f32 %v3193, %v3502
      %v3581 = vadd.f32 %v3194, %v3507
      %v3582 = vadd.f32 %v3195, %v3512
      %v3583 = vadd.f32 %v3196, %v3517
      %v3584 = vadd.f32 %v3197, %v3522
      %v3585 = vadd.f32 %v3198, %v3527
      %v3586 = vadd.f32 %v3199, %v3532
      %v3587 = vadd.f32 %v3200, %v3537
      %v3588 = vadd.f32 %v3201, %v3542
      %v3589 = vadd.f32 %v3202, %v3547
      %v3590 = vadd.f32 %v3203, %v3552
      %v3591 = vadd.f32 %v3204, %v3557
      %v3592 = vld [vmem:[%s2] sm:$0x1]
      %v3594 = vlaneseq
      %v3595 = vshrl.u32 %v3594, 7
      %v3596 = vsub.s32 0, %v3595
      %v3597 = vrot.slane %v3592, %v3596
      %v3599 = vadd.f32 %v3560, %v3597
      %v3600 = vadd.f32 %v3561, %v3597
      %v3601 = vadd.f32 %v3562, %v3597
      %v3602 = vadd.f32 %v3563, %v3597
      %v3603 = vadd.f32 %v3564, %v3597
      %v3604 = vadd.f32 %v3565, %v3597
      %v3605 = vadd.f32 %v3566, %v3597
      %v3606 = vadd.f32 %v3567, %v3597
      %v3607 = vadd.f32 %v3568, %v3597
      %v3608 = vadd.f32 %v3569, %v3597
      %v3609 = vadd.f32 %v3570, %v3597
      %v3610 = vadd.f32 %v3571, %v3597
      %v3611 = vadd.f32 %v3572, %v3597
      %v3612 = vadd.f32 %v3573, %v3597
      %v3613 = vadd.f32 %v3574, %v3597
      %v3614 = vadd.f32 %v3575, %v3597
      %v3615 = vadd.f32 %v3576, %v3597
      %v3616 = vadd.f32 %v3577, %v3597
      %v3617 = vadd.f32 %v3578, %v3597
      %v3618 = vadd.f32 %v3579, %v3597
      %v3619 = vadd.f32 %v3580, %v3597
      %v3620 = vadd.f32 %v3581, %v3597
      %v3621 = vadd.f32 %v3582, %v3597
      %v3622 = vadd.f32 %v3583, %v3597
      %v3623 = vadd.f32 %v3584, %v3597
      %v3624 = vadd.f32 %v3585, %v3597
      %v3625 = vadd.f32 %v3586, %v3597
      %v3626 = vadd.f32 %v3587, %v3597
      %v3627 = vadd.f32 %v3588, %v3597
      %v3628 = vadd.f32 %v3589, %v3597
      %v3629 = vadd.f32 %v3590, %v3597
      %v3630 = vadd.f32 %v3591, %v3597
      %3631 = vst.msk [vmem:[%s170] sm:$0xff] %vm238, %v3599
      %3632 = vst.msk [vmem:[%s170 + $0x8] sm:$0xff] %vm238, %v3600
      %3633 = vst.msk [vmem:[%s170 + $0x10] sm:$0xff] %vm238, %v3601
      %3634 = vst.msk [vmem:[%s170 + $0x18] sm:$0xff] %vm238, %v3602
      %3635 = vst.msk [vmem:[%s170 + $0x20] sm:$0xff] %vm238, %v3603
      %3636 = vst.msk [vmem:[%s170 + $0x28] sm:$0xff] %vm238, %v3604
      %3637 = vst.msk [vmem:[%s170 + $0x30] sm:$0xff] %vm238, %v3605
      %3638 = vst.msk [vmem:[%s170 + $0x38] sm:$0xff] %vm238, %v3606
      %3639 = vst.msk [vmem:[%s170 + $0x40] sm:$0xff] %vm238, %v3607
      %3640 = vst.msk [vmem:[%s170 + $0x48] sm:$0xff] %vm238, %v3608
      %3641 = vst.msk [vmem:[%s170 + $0x50] sm:$0xff] %vm238, %v3609
      %3642 = vst.msk [vmem:[%s170 + $0x58] sm:$0xff] %vm238, %v3610
      %3643 = vst.msk [vmem:[%s170 + $0x60] sm:$0xff] %vm238, %v3611
      %3644 = vst.msk [vmem:[%s170 + $0x68] sm:$0xff] %vm238, %v3612
      %3645 = vst.msk [vmem:[%s170 + $0x70] sm:$0xff] %vm238, %v3613
      %3646 = vst.msk [vmem:[%s170 + $0x78] sm:$0xff] %vm238, %v3614
      %3647 = vst.msk [vmem:[%s170 + $0x80] sm:$0xff] %vm238, %v3615
      %3648 = vst.msk [vmem:[%s170 + $0x88] sm:$0xff] %vm238, %v3616
      %3649 = vst.msk [vmem:[%s170 + $0x90] sm:$0xff] %vm238, %v3617
      %3650 = vst.msk [vmem:[%s170 + $0x98] sm:$0xff] %vm238, %v3618
      %3651 = vst.msk [vmem:[%s170 + $0xa0] sm:$0xff] %vm238, %v3619
      %3652 = vst.msk [vmem:[%s170 + $0xa8] sm:$0xff] %vm238, %v3620
      %3653 = vst.msk [vmem:[%s170 + $0xb0] sm:$0xff] %vm238, %v3621
      %3654 = vst.msk [vmem:[%s170 + $0xb8] sm:$0xff] %vm238, %v3622
      %3655 = vst.msk [vmem:[%s170 + $0xc0] sm:$0xff] %vm238, %v3623
      %3656 = vst.msk [vmem:[%s170 + $0xc8] sm:$0xff] %vm238, %v3624
      %3657 = vst.msk [vmem:[%s170 + $0xd0] sm:$0xff] %vm238, %v3625
      %3658 = vst.msk [vmem:[%s170 + $0xd8] sm:$0xff] %vm238, %v3626
      %3659 = vst.msk [vmem:[%s170 + $0xe0] sm:$0xff] %vm238, %v3627
      %3660 = vst.msk [vmem:[%s170 + $0xe8] sm:$0xff] %vm238, %v3628
      %3661 = vst.msk [vmem:[%s170 + $0xf0] sm:$0xff] %vm238, %v3629
      %3662 = vst.msk [vmem:[%s170 + $0xf8] sm:$0xff] %vm238, %v3630
      %p3663 = scmp.lt.s32.totalorder %s14, 7
      %s3664 = scalar_select %p3663, %s14, 7
      %s3665 = smul.addr %s3664, 32
      %s3666 = smul.addr %s3665, 8
      %s3667 = scalar_lea.vmem %s3, %s3666
      // Predicated region
      $region33: #{tpu_custom_call.1} parent=31 // pred_check
        %p3668 = pneg %p100
      $region34: #{tpu_custom_call.1} parent=31 // pred_check_branch
        %3670 = sbr.rel (%p3668) target = $region36
      $region35: #{tpu_custom_call.1} parent=31 // pred_region
        _
      $region36: #{tpu_custom_call.1} parent=31 // pred_fallthru
        _
    $region32: #{tpu_custom_call.1} parent=5 // pred_fallthru
      _
    %p3671 = scmp.le.s32.totalorder 2, %s9
    // Predicated region
    $region37: #{tpu_custom_call.1} parent=5 // pred_check
      %p3672 = pneg %p3671
    $region38: #{tpu_custom_call.1} parent=5 // pred_check_branch
      %3674 = sbr.rel (%p3672) target = $region40
    $region39: #{tpu_custom_call.1} parent=5 // pred_region
      %s3675 = ssub.s32 %s9, 2
      // Predicated region
      $region41: #{tpu_custom_call.1} parent=39 // pred_check
        %p3676 = pneg %p106
      $region42: #{tpu_custom_call.1} parent=39 // pred_check_branch
        %3678 = sbr.rel (%p3676) target = $region44
      $region43: #{tpu_custom_call.1} parent=39 // pred_region
        %p3679 = scmp.lt.s32.totalorder %s15, 7
        %s3680 = scalar_select %p3679, %s15, 7
        %s3681 = smul.addr %s3680, 32
        %s3682 = smul.addr %s3681, 8
        %s3683 = scalar_lea.vmem %s3, %s3682
      $region44: #{tpu_custom_call.1} parent=39 // pred_fallthru
        _
    $region40: #{tpu_custom_call.1} parent=5 // pred_fallthru
      _
  $region6: #{tpu_custom_call.1} parent=0 // loop_footer
    %s13 = sadd.s32 1, %s9
  $region7: #{tpu_custom_call.1} parent=0 // loop_footer_branch
    %8 = sbr.rel target = $region3
  $region8: #{tpu_custom_call.1} parent=0 // loop_exit
    _

</llo_original>
